<compile_context>
chip_gen: v7x
topology: tpu7x:2x2x1
jax: 0.10.0
libtpu: 0.0.40
codegen_flags: <defaults>
</compile_context>

<pallas_src>
import functools

import jax
import jax.numpy as jnp
import numpy as np
from jax import lax
from jax.experimental import pallas as pl

LANE = 128   # TPU lane width   (last-dim alignment)
SUB = 8      # TPU sublane width (second-to-last-dim alignment)


# ------------------------------ Pallas kernel --------------------------------

def _swish(v):
    # PyTorch Swish: x * sigmoid(x)
    return v * jax.nn.sigmoid(v)


def _dqn_fused_kernel(z_ref, s1_ref, w1_ref, b1_ref,
                      s2_ref, w2_ref, b2_ref,
                      s3_ref, w3_ref, b3_ref,
                      wl_ref, bl_ref, wo_ref, bo_ref, out_ref):
    """Whole DQN forward on VMEM-resident data.

    Activations are kept as lane-dense (rows, 128) matrices.  Each conv layer:
        act_out = swish( sum_t (S_t @ act_in) @ W_t + b )
    where S_t is an exact 0/1 row-selection matrix (one per kernel tap) and W_t
    that tap's (Cin_pad=128, Cout_pad=128) weight slice.  All ops are plain 2-D
    f32 MXU dots + VPU/EUP elementwise; the gathers of all taps are fused into
    a single (T*M_out, M_in) selection matmul.
    """

    def conv_swish(x_mat, s_ref, w_ref, b_ref):
        taps = w_ref.shape[0]
        m_out = s_ref.shape[0] // taps
        n_out = w_ref.shape[2]
        # One MXU matmul gathers the input rows for every tap (exact: 0/1 LHS).
        g = jnp.dot(s_ref[...], x_mat, preferred_element_type=jnp.float32)
        acc = jnp.zeros((m_out, n_out), jnp.float32)
        for t in range(taps):                       # static unroll (4/16/9)
            acc = acc + jnp.dot(g[t * m_out:(t + 1) * m_out, :], w_ref[t],
                                preferred_element_type=jnp.float32)
        return _swish(acc + b_ref[...])

    act1 = conv_swish(z_ref[...], s1_ref, w1_ref, b1_ref)   # (128, 128) conv1
    act2 = conv_swish(act1, s2_ref, w2_ref, b2_ref)         # (24, 128)  conv2
    act3 = conv_swish(act2, s3_ref, w3_ref, b3_ref)         # (8, 128)   conv3
    # conv3 output is 1x1 spatial, so act3 already is the flattened (N, C) map.
    h = _swish(jnp.dot(act3, wl_ref[...], preferred_element_type=jnp.float32)
               + bl_ref[...])                                # (8, 512)
    out = (jnp.dot(h, wo_ref[...], preferred_element_type=jnp.float32)
           + bo_ref[...])                                    # (8, 128)
    out_ref[...] = out.astype(out_ref.dtype)                 # unmasked full-tile store


# --------------------------- init-time packing --------------------------------

def _round_up(v, m):
    return (v + m - 1) // m * m


def _build_selection(n, h, w, k, s, m_in_pad, m_out_pad):
    """0/1 gather matrices for a valid conv (kernel k, stride s) on a feature
    map stored as rows ordered (n, h, w).  Returns (k*k*m_out_pad, m_in_pad)."""
    oh = (h - k) // s + 1
    ow = (w - k) // s + 1
    sel = np.zeros((k * k, m_out_pad, m_in_pad), np.float32)
    for i in range(k):
        for j in range(k):
            t = i * k + j
            for b in range(n):
                for p in range(oh):
                    for q in range(ow):
                        r_out = (b * oh + p) * ow + q
                        r_in = (b * h + (s * p + i)) * w + (s * q + j)
                        sel[t, r_out, r_in] = 1.0
    return sel.reshape(k * k * m_out_pad, m_in_pad)


def _pack_conv_taps(w_oihw):
    """PyTorch (O, C, kh, kw) conv weight -> (kh*kw, 128, 128) per-tap (C, O)
    slices, zero-padded to full lanes (pre-transposed: no .T in the fwd path)."""
    o, c, kh, kw = w_oihw.shape
    assert c <= LANE and o <= LANE
    taps = np.zeros((kh * kw, LANE, LANE), np.float32)
    for i in range(kh):
        for j in range(kw):
            taps[i * kw + j, :c, :o] = w_oihw[:, :, i, j].T
    return taps


def _block_stride_weight(w_oihw, s):
    """Rewrite a (O,C,k,k) stride-s conv (k % s == 0) as an equivalent stride-1
    conv with kernel k//s on the s x s space-to-depth'd input (features ordered
    (di, dj, c))."""
    o, c, kh, kw = w_oihw.shape
    assert kh % s == 0 and kw % s == 0
    kb_h, kb_w = kh // s, kw // s
    wb = np.zeros((o, s * s * c, kb_h, kb_w), np.float32)
    for dp in range(kb_h):
        for dq in range(kb_w):
            for di in range(s):
                for dj in range(s):
                    f = (di * s + dj) * c
                    wb[:, f:f + c, dp, dq] = w_oihw[:, :, s * dp + di, s * dq + dj]
    return wb


def _pad_bias(b):
    n = _round_up(b.shape[0], LANE)
    out = np.zeros((1, n), np.float32)
    out[0, :b.shape[0]] = b
    return out


def pack_params(params, image_shape, batch):
    """One-time numpy packing: padded/pre-transposed weights + 0/1 selection
    matrices.  Nothing in the per-call forward materializes patches in HBM."""
    in_c, in_h, in_w = image_shape
    blk = 4                      # conv1 stride; conv1 (k=8,s=4) -> (k=2,s=1)
    assert in_h % blk == 0 and in_w % blk == 0

    def osz(sz, k, s):
        return (sz - k) // s + 1

    # ---- conv1 (on the 4x4-blocked input) ----
    w1b = _block_stride_weight(np.asarray(params["w1"]), blk)    # (32, 64, 2, 2)
    bh, bw = in_h // blk, in_w // blk                            # 9, 9
    kb = w1b.shape[2]                                            # 2
    m_in1 = _round_up(batch * bh * bw, SUB)                      # 168
    oh1, ow1 = osz(bh, kb, 1), osz(bw, kb, 1)                    # 8, 8
    m1 = _round_up(batch * oh1 * ow1, SUB)                       # 128
    sel1 = _build_selection(batch, bh, bw, kb, 1, m_in1, m1)     # (512, 168)
    w1t = _pack_conv_taps(w1b)                                   # (4, 128, 128)

    # ---- conv2 ----
    oh2, ow2 = osz(oh1, 4, 2), osz(ow1, 4, 2)                    # 3, 3
    m2 = _round_up(batch * oh2 * ow2, SUB)                       # 24
    sel2 = _build_selection(batch, oh1, ow1, 4, 2, m1, m2)       # (384, 128)
    w2t = _pack_conv_taps(np.asarray(params["w2"]))              # (16, 128, 128)

    # ---- conv3 ----
    oh3, ow3 = osz(oh2, 3, 1), osz(ow2, 3, 1)                    # 1, 1
    m3 = _round_up(batch * oh3 * ow3, SUB)                       # 8
    sel3 = _build_selection(batch, oh2, ow2, 3, 1, m2, m3)       # (72, 24)
    w3t = _pack_conv_taps(np.asarray(params["w3"]))              # (9, 128, 128)

    # TODO(synk): only the 1x1 final-spatial case is wired up; for >1x1 the
    # PyTorch NCHW flatten order would need an extra permutation here.
    assert oh3 == 1 and ow3 == 1

    # ---- linears (pre-transposed + zero-padded; no .T per forward) ----
    wl = np.asarray(params["wl"])                                # (512, 64)
    flat = wl.shape[1]
    assert flat == params["w3"].shape[0] * oh3 * ow3
    n_hidden = wl.shape[0]
    assert n_hidden % LANE == 0
    wl_p = np.zeros((_round_up(flat, LANE), n_hidden), np.float32)
    wl_p[:flat, :] = wl.T                                        # (128, 512)

    wo = np.asarray(params["wo"])                                # (6, 512)
    n_out = wo.shape[0]
    wo_p = np.zeros((n_hidden, _round_up(n_out, LANE)), np.float32)
    wo_p[:, :n_out] = wo.T                                       # (512, 128)

    b1_p = _pad_bias(np.asarray(params["b1"]))
    b2_p = _pad_bias(np.asarray(params["b2"]))
    b3_p = _pad_bias(np.asarray(params["b3"]))
    bl_p = _pad_bias(np.asarray(params["bl"]))
    bo_p = _pad_bias(np.asarray(params["bo"]))

    consts = [sel1, w1t, b1_p, sel2, w2t, b2_p, sel3, w3t, b3_p,
              wl_p, bl_p, wo_p, bo_p]
    names = ["sel1", "w1", "b1", "sel2", "w2", "b2", "sel3", "w3", "b3",
             "wl", "bl", "wo", "bo"]

    def mm(m, k, n):
        return 2 * m * k * n

    flops = (mm(*sel1.shape, LANE) + w1t.shape[0] * mm(m1, LANE, LANE)
             + mm(*sel2.shape, LANE) + w2t.shape[0] * mm(m2, LANE, LANE)
             + mm(*sel3.shape, LANE) + w3t.shape[0] * mm(m3, LANE, LANE)
             + mm(m3, wl_p.shape[0], wl_p.shape[1])
             + mm(m3, wo_p.shape[0], wo_p.shape[1]))
    transcendentals = (m1 + m2 + m3) * LANE + m3 * n_hidden
    bytes_accessed = 4 * (sum(int(t.size) for t in consts)
                          + m_in1 * LANE + m3 * LANE)

    packed = {n_: jnp.asarray(a) for n_, a in zip(names, consts)}
    packed.update(block=blk, m_in1=m_in1, m3=m3, n_out=n_out,
                  cost=pl.CostEstimate(flops=flops,
                                       transcendentals=transcendentals,
                                       bytes_accessed=bytes_accessed))
    return packed


# ------------------------------ Parameters -----------------------------------

def _uniform(key, shape, bound):
    return jax.random.uniform(key, shape, jnp.float32, -bound, bound)


def init_dqn_params(key, image_shape, output_size):
    in_c, in_h, in_w = image_shape
    keys = jax.random.split(key, 10)
    p = {}

    def conv_init(kw_, kb_, out_c, in_ch, kh, kw):
        fan_in = in_ch * kh * kw
        bound = 1.0 / np.sqrt(fan_in)
        return (_uniform(kw_, (out_c, in_ch, kh, kw), bound),
                _uniform(kb_, (out_c,), bound))

    p["w1"], p["b1"] = conv_init(keys[0], keys[1], 32, in_c, 8, 8)
    p["w2"], p["b2"] = conv_init(keys[2], keys[3], 64, 32, 4, 4)
    p["w3"], p["b3"] = conv_init(keys[4], keys[5], 64, 64, 3, 3)

    def osize(s, k, st):
        return (s - k) // st + 1

    h = osize(osize(osize(in_h, 8, 4), 4, 2), 3, 1)
    w = osize(osize(osize(in_w, 8, 4), 4, 2), 3, 1)
    flat = 64 * h * w

    bound = 1.0 / np.sqrt(flat)
    p["wl"] = _uniform(keys[6], (512, flat), bound)      # PyTorch Linear: (out, in)
    p["bl"] = _uniform(keys[7], (512,), bound)
    bound = 1.0 / np.sqrt(512)
    p["wo"] = _uniform(keys[8], (output_size, 512), bound)
    p["bo"] = _uniform(keys[9], (output_size,), bound)
    return p


# ------------------------------ Forward pass ----------------------------------

def dqn_forward(packed, x_nchw):
    """Fused DQN forward.  Per-call JAX work is only a bijective relabel of the
    input (NCHW -> NHWC -> 4x4 space-to-depth -> zero-padded (168,128) matrix);
    all compute runs inside a single Pallas kernel."""
    n = x_nchw.shape[0]
    blk = packed["block"]
    x = jnp.transpose(x_nchw, (0, 2, 3, 1)).astype(jnp.float32)      # NHWC
    nb, hh, ww, cc = x.shape
    z = x.reshape(nb, hh // blk, blk, ww // blk, blk, cc)
    z = jnp.transpose(z, (0, 1, 3, 2, 4, 5))
    z = z.reshape(nb * (hh // blk) * (ww // blk), blk * blk * cc)    # (162, 64)
    z_pad = jnp.zeros((packed["m_in1"], LANE), jnp.float32)
    z_pad = z_pad.at[:z.shape[0], :z.shape[1]].set(z)

    out_pad = pl.pallas_call(
        _dqn_fused_kernel,
        out_shape=jax.ShapeDtypeStruct((packed["m3"], LANE), jnp.float32),
        cost_estimate=packed["cost"],
    )(z_pad, packed["sel1"], packed["w1"], packed["b1"],
      packed["sel2"], packed["w2"], packed["b2"],
      packed["sel3"], packed["w3"], packed["b3"],
      packed["wl"], packed["bl"], packed["wo"], packed["bo"])
    return out_pad[:n, :packed["n_out"]]


# ------------------------ Pure-JAX reference (check) ---------------------------

def dqn_forward_ref(params, x_nchw):
    def conv(x, w, b, st):
        y = lax.conv_general_dilated(x, w, window_strides=st, padding="VALID",
                                     dimension_numbers=("NCHW", "OIHW", "NCHW"))
        y = y + b[None, :, None, None]
        return y * jax.nn.sigmoid(y)
    x = x_nchw.astype(jnp.float32)
    net = conv(x, params["w1"], params["b1"], (4, 4))
    net = conv(net, params["w2"], params["b2"], (2, 2))
    net = conv(net, params["w3"], params["b3"], (1, 1))
    flat = net.reshape(net.shape[0], -1)
    h = flat @ params["wl"].T + params["bl"]
    h = h * jax.nn.sigmoid(h)
    return h @ params["wo"].T + params["bo"]


# ----------------------------------- Main --------------------------------------

if __name__ == "__main__":
    image_shape = (4, 36, 36)   # (C, H, W): 36 -> 8 -> 3 -> 1 spatial
    output_size = 6
    batch = 2

    key = jax.random.PRNGKey(0)
    k_params, k_x = jax.random.split(key)
    params = init_dqn_params(k_params, image_shape, output_size)
    x = jax.random.uniform(k_x, (batch, *image_shape), jnp.float32)

    packed = pack_params(params, image_shape, batch)
    fwd = jax.jit(functools.partial(dqn_forward, packed))

    out = jax.block_until_ready(fwd(x))
    ref = jax.block_until_ready(dqn_forward_ref(params, x))

    assert out.shape == (batch, output_size)
    np.testing.assert_allclose(np.asarray(out), np.asarray(ref),
                               rtol=1e-4, atol=1e-4)
    print("KERNEL_OK")
</pallas_src>

<mosaic_0001>
module attributes {stable_mosaic.version = 11 : i64} {
  func.func @_dqn_fused_kernel(%arg0: memref<168x128xf32, #tpu.memory_space<vmem>>, %arg1: memref<512x168xf32, #tpu.memory_space<vmem>>, %arg2: memref<4x128x128xf32, #tpu.memory_space<vmem>>, %arg3: memref<1x128xf32, #tpu.memory_space<vmem>>, %arg4: memref<384x128xf32, #tpu.memory_space<vmem>>, %arg5: memref<16x128x128xf32, #tpu.memory_space<vmem>>, %arg6: memref<1x128xf32, #tpu.memory_space<vmem>>, %arg7: memref<72x24xf32, #tpu.memory_space<vmem>>, %arg8: memref<9x128x128xf32, #tpu.memory_space<vmem>>, %arg9: memref<1x128xf32, #tpu.memory_space<vmem>>, %arg10: memref<128x512xf32, #tpu.memory_space<vmem>>, %arg11: memref<1x512xf32, #tpu.memory_space<vmem>>, %arg12: memref<512x128xf32, #tpu.memory_space<vmem>>, %arg13: memref<1x128xf32, #tpu.memory_space<vmem>>, %arg14: memref<8x128xf32, #tpu.memory_space<vmem>>) attributes {dimension_semantics = [], scalar_prefetch = 0 : i64, scratch_operands = 0 : i64, tpu.core_type = #tpu.core_type<tc>} {
    %c0 = arith.constant 0 : index
    %c0_0 = arith.constant 0 : index
    %0 = vector.load %arg0[%c0, %c0_0] : memref<168x128xf32, #tpu.memory_space<vmem>>, vector<168x128xf32>
    %c0_1 = arith.constant 0 : index
    %c0_2 = arith.constant 0 : index
    %1 = vector.load %arg1[%c0_1, %c0_2] : memref<512x168xf32, #tpu.memory_space<vmem>>, vector<512x168xf32>
    %cst = arith.constant dense<0.000000e+00> : vector<512x128xf32>
    %2 = tpu.matmul %1, %0, %cst {dimension_numbers = #tpu.dot_dimension_numbers<[1], [0], [0], [1], [0, 0, 1, 1], [], []>} : vector<512x168xf32>, vector<168x128xf32>, vector<512x128xf32> -> vector<512x128xf32>
    %cst_3 = arith.constant 0.000000e+00 : f32
    %3 = vector.broadcast %cst_3 : f32 to vector<128x128xf32>
    %4 = vector.extract_strided_slice %2 {offsets = [0, 0], sizes = [128, 128], strides = [1, 1]} : vector<512x128xf32> to vector<128x128xf32>
    %c0_4 = arith.constant 0 : index
    %c0_5 = arith.constant 0 : index
    %c0_6 = arith.constant 0 : index
    %5 = vector.load %arg2[%c0_4, %c0_5, %c0_6] : memref<4x128x128xf32, #tpu.memory_space<vmem>>, vector<1x128x128xf32>
    %6 = vector.shape_cast %5 : vector<1x128x128xf32> to vector<128x128xf32>
    %cst_7 = arith.constant dense<0.000000e+00> : vector<128x128xf32>
    %7 = tpu.matmul %4, %6, %cst_7 {dimension_numbers = #tpu.dot_dimension_numbers<[1], [0], [0], [1], [0, 0, 1, 1], [], []>} : vector<128x128xf32>, vector<128x128xf32>, vector<128x128xf32> -> vector<128x128xf32>
    %8 = arith.addf %3, %7 : vector<128x128xf32>
    %9 = vector.extract_strided_slice %2 {offsets = [128, 0], sizes = [128, 128], strides = [1, 1]} : vector<512x128xf32> to vector<128x128xf32>
    %c1 = arith.constant 1 : index
    %c0_8 = arith.constant 0 : index
    %c0_9 = arith.constant 0 : index
    %10 = vector.load %arg2[%c1, %c0_8, %c0_9] : memref<4x128x128xf32, #tpu.memory_space<vmem>>, vector<1x128x128xf32>
    %11 = vector.shape_cast %10 : vector<1x128x128xf32> to vector<128x128xf32>
    %cst_10 = arith.constant dense<0.000000e+00> : vector<128x128xf32>
    %12 = tpu.matmul %9, %11, %cst_10 {dimension_numbers = #tpu.dot_dimension_numbers<[1], [0], [0], [1], [0, 0, 1, 1], [], []>} : vector<128x128xf32>, vector<128x128xf32>, vector<128x128xf32> -> vector<128x128xf32>
    %13 = arith.addf %8, %12 : vector<128x128xf32>
    %14 = vector.extract_strided_slice %2 {offsets = [256, 0], sizes = [128, 128], strides = [1, 1]} : vector<512x128xf32> to vector<128x128xf32>
    %c2 = arith.constant 2 : index
    %c0_11 = arith.constant 0 : index
    %c0_12 = arith.constant 0 : index
    %15 = vector.load %arg2[%c2, %c0_11, %c0_12] : memref<4x128x128xf32, #tpu.memory_space<vmem>>, vector<1x128x128xf32>
    %16 = vector.shape_cast %15 : vector<1x128x128xf32> to vector<128x128xf32>
    %cst_13 = arith.constant dense<0.000000e+00> : vector<128x128xf32>
    %17 = tpu.matmul %14, %16, %cst_13 {dimension_numbers = #tpu.dot_dimension_numbers<[1], [0], [0], [1], [0, 0, 1, 1], [], []>} : vector<128x128xf32>, vector<128x128xf32>, vector<128x128xf32> -> vector<128x128xf32>
    %18 = arith.addf %13, %17 : vector<128x128xf32>
    %19 = vector.extract_strided_slice %2 {offsets = [384, 0], sizes = [128, 128], strides = [1, 1]} : vector<512x128xf32> to vector<128x128xf32>
    %c3 = arith.constant 3 : index
    %c0_14 = arith.constant 0 : index
    %c0_15 = arith.constant 0 : index
    %20 = vector.load %arg2[%c3, %c0_14, %c0_15] : memref<4x128x128xf32, #tpu.memory_space<vmem>>, vector<1x128x128xf32>
    %21 = vector.shape_cast %20 : vector<1x128x128xf32> to vector<128x128xf32>
    %cst_16 = arith.constant dense<0.000000e+00> : vector<128x128xf32>
    %22 = tpu.matmul %19, %21, %cst_16 {dimension_numbers = #tpu.dot_dimension_numbers<[1], [0], [0], [1], [0, 0, 1, 1], [], []>} : vector<128x128xf32>, vector<128x128xf32>, vector<128x128xf32> -> vector<128x128xf32>
    %23 = arith.addf %18, %22 : vector<128x128xf32>
    %c0_17 = arith.constant 0 : index
    %c0_18 = arith.constant 0 : index
    %24 = vector.load %arg3[%c0_17, %c0_18] : memref<1x128xf32, #tpu.memory_space<vmem>>, vector<1x128xf32>
    %25 = vector.broadcast %24 : vector<1x128xf32> to vector<128x128xf32>
    %26 = arith.addf %23, %25 : vector<128x128xf32>
    %27 = arith.negf %26 : vector<128x128xf32>
    %28 = math.exp %27 : vector<128x128xf32>
    %cst_19 = arith.constant 1.000000e+00 : f32
    %29 = vector.broadcast %cst_19 : f32 to vector<128x128xf32>
    %30 = arith.addf %29, %28 : vector<128x128xf32>
    %31 = arith.divf %29, %30 : vector<128x128xf32>
    %32 = arith.mulf %26, %31 : vector<128x128xf32>
    %c0_20 = arith.constant 0 : index
    %c0_21 = arith.constant 0 : index
    %33 = vector.load %arg4[%c0_20, %c0_21] : memref<384x128xf32, #tpu.memory_space<vmem>>, vector<384x128xf32>
    %cst_22 = arith.constant dense<0.000000e+00> : vector<384x128xf32>
    %34 = tpu.matmul %33, %32, %cst_22 {dimension_numbers = #tpu.dot_dimension_numbers<[1], [0], [0], [1], [0, 0, 1, 1], [], []>} : vector<384x128xf32>, vector<128x128xf32>, vector<384x128xf32> -> vector<384x128xf32>
    %cst_23 = arith.constant 0.000000e+00 : f32
    %35 = vector.broadcast %cst_23 : f32 to vector<24x128xf32>
    %36 = vector.extract_strided_slice %34 {offsets = [0, 0], sizes = [24, 128], strides = [1, 1]} : vector<384x128xf32> to vector<24x128xf32>
    %c0_24 = arith.constant 0 : index
    %c0_25 = arith.constant 0 : index
    %c0_26 = arith.constant 0 : index
    %37 = vector.load %arg5[%c0_24, %c0_25, %c0_26] : memref<16x128x128xf32, #tpu.memory_space<vmem>>, vector<1x128x128xf32>
    %38 = vector.shape_cast %37 : vector<1x128x128xf32> to vector<128x128xf32>
    %cst_27 = arith.constant dense<0.000000e+00> : vector<24x128xf32>
    %39 = tpu.matmul %36, %38, %cst_27 {dimension_numbers = #tpu.dot_dimension_numbers<[1], [0], [0], [1], [0, 0, 1, 1], [], []>} : vector<24x128xf32>, vector<128x128xf32>, vector<24x128xf32> -> vector<24x128xf32>
    %40 = arith.addf %35, %39 : vector<24x128xf32>
    %41 = vector.extract_strided_slice %34 {offsets = [24, 0], sizes = [24, 128], strides = [1, 1]} : vector<384x128xf32> to vector<24x128xf32>
    %c1_28 = arith.constant 1 : index
    %c0_29 = arith.constant 0 : index
    %c0_30 = arith.constant 0 : index
    %42 = vector.load %arg5[%c1_28, %c0_29, %c0_30] : memref<16x128x128xf32, #tpu.memory_space<vmem>>, vector<1x128x128xf32>
    %43 = vector.shape_cast %42 : vector<1x128x128xf32> to vector<128x128xf32>
    %cst_31 = arith.constant dense<0.000000e+00> : vector<24x128xf32>
    %44 = tpu.matmul %41, %43, %cst_31 {dimension_numbers = #tpu.dot_dimension_numbers<[1], [0], [0], [1], [0, 0, 1, 1], [], []>} : vector<24x128xf32>, vector<128x128xf32>, vector<24x128xf32> -> vector<24x128xf32>
    %45 = arith.addf %40, %44 : vector<24x128xf32>
    %46 = vector.extract_strided_slice %34 {offsets = [48, 0], sizes = [24, 128], strides = [1, 1]} : vector<384x128xf32> to vector<24x128xf32>
    %c2_32 = arith.constant 2 : index
    %c0_33 = arith.constant 0 : index
    %c0_34 = arith.constant 0 : index
    %47 = vector.load %arg5[%c2_32, %c0_33, %c0_34] : memref<16x128x128xf32, #tpu.memory_space<vmem>>, vector<1x128x128xf32>
    %48 = vector.shape_cast %47 : vector<1x128x128xf32> to vector<128x128xf32>
    %cst_35 = arith.constant dense<0.000000e+00> : vector<24x128xf32>
    %49 = tpu.matmul %46, %48, %cst_35 {dimension_numbers = #tpu.dot_dimension_numbers<[1], [0], [0], [1], [0, 0, 1, 1], [], []>} : vector<24x128xf32>, vector<128x128xf32>, vector<24x128xf32> -> vector<24x128xf32>
    %50 = arith.addf %45, %49 : vector<24x128xf32>
    %51 = vector.extract_strided_slice %34 {offsets = [72, 0], sizes = [24, 128], strides = [1, 1]} : vector<384x128xf32> to vector<24x128xf32>
    %c3_36 = arith.constant 3 : index
    %c0_37 = arith.constant 0 : index
    %c0_38 = arith.constant 0 : index
    %52 = vector.load %arg5[%c3_36, %c0_37, %c0_38] : memref<16x128x128xf32, #tpu.memory_space<vmem>>, vector<1x128x128xf32>
    %53 = vector.shape_cast %52 : vector<1x128x128xf32> to vector<128x128xf32>
    %cst_39 = arith.constant dense<0.000000e+00> : vector<24x128xf32>
    %54 = tpu.matmul %51, %53, %cst_39 {dimension_numbers = #tpu.dot_dimension_numbers<[1], [0], [0], [1], [0, 0, 1, 1], [], []>} : vector<24x128xf32>, vector<128x128xf32>, vector<24x128xf32> -> vector<24x128xf32>
    %55 = arith.addf %50, %54 : vector<24x128xf32>
    %56 = vector.extract_strided_slice %34 {offsets = [96, 0], sizes = [24, 128], strides = [1, 1]} : vector<384x128xf32> to vector<24x128xf32>
    %c4 = arith.constant 4 : index
    %c0_40 = arith.constant 0 : index
    %c0_41 = arith.constant 0 : index
    %57 = vector.load %arg5[%c4, %c0_40, %c0_41] : memref<16x128x128xf32, #tpu.memory_space<vmem>>, vector<1x128x128xf32>
    %58 = vector.shape_cast %57 : vector<1x128x128xf32> to vector<128x128xf32>
    %cst_42 = arith.constant dense<0.000000e+00> : vector<24x128xf32>
    %59 = tpu.matmul %56, %58, %cst_42 {dimension_numbers = #tpu.dot_dimension_numbers<[1], [0], [0], [1], [0, 0, 1, 1], [], []>} : vector<24x128xf32>, vector<128x128xf32>, vector<24x128xf32> -> vector<24x128xf32>
    %60 = arith.addf %55, %59 : vector<24x128xf32>
    %61 = vector.extract_strided_slice %34 {offsets = [120, 0], sizes = [24, 128], strides = [1, 1]} : vector<384x128xf32> to vector<24x128xf32>
    %c5 = arith.constant 5 : index
    %c0_43 = arith.constant 0 : index
    %c0_44 = arith.constant 0 : index
    %62 = vector.load %arg5[%c5, %c0_43, %c0_44] : memref<16x128x128xf32, #tpu.memory_space<vmem>>, vector<1x128x128xf32>
    %63 = vector.shape_cast %62 : vector<1x128x128xf32> to vector<128x128xf32>
    %cst_45 = arith.constant dense<0.000000e+00> : vector<24x128xf32>
    %64 = tpu.matmul %61, %63, %cst_45 {dimension_numbers = #tpu.dot_dimension_numbers<[1], [0], [0], [1], [0, 0, 1, 1], [], []>} : vector<24x128xf32>, vector<128x128xf32>, vector<24x128xf32> -> vector<24x128xf32>
    %65 = arith.addf %60, %64 : vector<24x128xf32>
    %66 = vector.extract_strided_slice %34 {offsets = [144, 0], sizes = [24, 128], strides = [1, 1]} : vector<384x128xf32> to vector<24x128xf32>
    %c6 = arith.constant 6 : index
    %c0_46 = arith.constant 0 : index
    %c0_47 = arith.constant 0 : index
    %67 = vector.load %arg5[%c6, %c0_46, %c0_47] : memref<16x128x128xf32, #tpu.memory_space<vmem>>, vector<1x128x128xf32>
    %68 = vector.shape_cast %67 : vector<1x128x128xf32> to vector<128x128xf32>
    %cst_48 = arith.constant dense<0.000000e+00> : vector<24x128xf32>
    %69 = tpu.matmul %66, %68, %cst_48 {dimension_numbers = #tpu.dot_dimension_numbers<[1], [0], [0], [1], [0, 0, 1, 1], [], []>} : vector<24x128xf32>, vector<128x128xf32>, vector<24x128xf32> -> vector<24x128xf32>
    %70 = arith.addf %65, %69 : vector<24x128xf32>
    %71 = vector.extract_strided_slice %34 {offsets = [168, 0], sizes = [24, 128], strides = [1, 1]} : vector<384x128xf32> to vector<24x128xf32>
    %c7 = arith.constant 7 : index
    %c0_49 = arith.constant 0 : index
    %c0_50 = arith.constant 0 : index
    %72 = vector.load %arg5[%c7, %c0_49, %c0_50] : memref<16x128x128xf32, #tpu.memory_space<vmem>>, vector<1x128x128xf32>
    %73 = vector.shape_cast %72 : vector<1x128x128xf32> to vector<128x128xf32>
    %cst_51 = arith.constant dense<0.000000e+00> : vector<24x128xf32>
    %74 = tpu.matmul %71, %73, %cst_51 {dimension_numbers = #tpu.dot_dimension_numbers<[1], [0], [0], [1], [0, 0, 1, 1], [], []>} : vector<24x128xf32>, vector<128x128xf32>, vector<24x128xf32> -> vector<24x128xf32>
    %75 = arith.addf %70, %74 : vector<24x128xf32>
    %76 = vector.extract_strided_slice %34 {offsets = [192, 0], sizes = [24, 128], strides = [1, 1]} : vector<384x128xf32> to vector<24x128xf32>
    %c8 = arith.constant 8 : index
    %c0_52 = arith.constant 0 : index
    %c0_53 = arith.constant 0 : index
    %77 = vector.load %arg5[%c8, %c0_52, %c0_53] : memref<16x128x128xf32, #tpu.memory_space<vmem>>, vector<1x128x128xf32>
    %78 = vector.shape_cast %77 : vector<1x128x128xf32> to vector<128x128xf32>
    %cst_54 = arith.constant dense<0.000000e+00> : vector<24x128xf32>
    %79 = tpu.matmul %76, %78, %cst_54 {dimension_numbers = #tpu.dot_dimension_numbers<[1], [0], [0], [1], [0, 0, 1, 1], [], []>} : vector<24x128xf32>, vector<128x128xf32>, vector<24x128xf32> -> vector<24x128xf32>
    %80 = arith.addf %75, %79 : vector<24x128xf32>
    %81 = vector.extract_strided_slice %34 {offsets = [216, 0], sizes = [24, 128], strides = [1, 1]} : vector<384x128xf32> to vector<24x128xf32>
    %c9 = arith.constant 9 : index
    %c0_55 = arith.constant 0 : index
    %c0_56 = arith.constant 0 : index
    %82 = vector.load %arg5[%c9, %c0_55, %c0_56] : memref<16x128x128xf32, #tpu.memory_space<vmem>>, vector<1x128x128xf32>
    %83 = vector.shape_cast %82 : vector<1x128x128xf32> to vector<128x128xf32>
    %cst_57 = arith.constant dense<0.000000e+00> : vector<24x128xf32>
    %84 = tpu.matmul %81, %83, %cst_57 {dimension_numbers = #tpu.dot_dimension_numbers<[1], [0], [0], [1], [0, 0, 1, 1], [], []>} : vector<24x128xf32>, vector<128x128xf32>, vector<24x128xf32> -> vector<24x128xf32>
    %85 = arith.addf %80, %84 : vector<24x128xf32>
    %86 = vector.extract_strided_slice %34 {offsets = [240, 0], sizes = [24, 128], strides = [1, 1]} : vector<384x128xf32> to vector<24x128xf32>
    %c10 = arith.constant 10 : index
    %c0_58 = arith.constant 0 : index
    %c0_59 = arith.constant 0 : index
    %87 = vector.load %arg5[%c10, %c0_58, %c0_59] : memref<16x128x128xf32, #tpu.memory_space<vmem>>, vector<1x128x128xf32>
    %88 = vector.shape_cast %87 : vector<1x128x128xf32> to vector<128x128xf32>
    %cst_60 = arith.constant dense<0.000000e+00> : vector<24x128xf32>
    %89 = tpu.matmul %86, %88, %cst_60 {dimension_numbers = #tpu.dot_dimension_numbers<[1], [0], [0], [1], [0, 0, 1, 1], [], []>} : vector<24x128xf32>, vector<128x128xf32>, vector<24x128xf32> -> vector<24x128xf32>
    %90 = arith.addf %85, %89 : vector<24x128xf32>
    %91 = vector.extract_strided_slice %34 {offsets = [264, 0], sizes = [24, 128], strides = [1, 1]} : vector<384x128xf32> to vector<24x128xf32>
    %c11 = arith.constant 11 : index
    %c0_61 = arith.constant 0 : index
    %c0_62 = arith.constant 0 : index
    %92 = vector.load %arg5[%c11, %c0_61, %c0_62] : memref<16x128x128xf32, #tpu.memory_space<vmem>>, vector<1x128x128xf32>
    %93 = vector.shape_cast %92 : vector<1x128x128xf32> to vector<128x128xf32>
    %cst_63 = arith.constant dense<0.000000e+00> : vector<24x128xf32>
    %94 = tpu.matmul %91, %93, %cst_63 {dimension_numbers = #tpu.dot_dimension_numbers<[1], [0], [0], [1], [0, 0, 1, 1], [], []>} : vector<24x128xf32>, vector<128x128xf32>, vector<24x128xf32> -> vector<24x128xf32>
    %95 = arith.addf %90, %94 : vector<24x128xf32>
    %96 = vector.extract_strided_slice %34 {offsets = [288, 0], sizes = [24, 128], strides = [1, 1]} : vector<384x128xf32> to vector<24x128xf32>
    %c12 = arith.constant 12 : index
    %c0_64 = arith.constant 0 : index
    %c0_65 = arith.constant 0 : index
    %97 = vector.load %arg5[%c12, %c0_64, %c0_65] : memref<16x128x128xf32, #tpu.memory_space<vmem>>, vector<1x128x128xf32>
    %98 = vector.shape_cast %97 : vector<1x128x128xf32> to vector<128x128xf32>
    %cst_66 = arith.constant dense<0.000000e+00> : vector<24x128xf32>
    %99 = tpu.matmul %96, %98, %cst_66 {dimension_numbers = #tpu.dot_dimension_numbers<[1], [0], [0], [1], [0, 0, 1, 1], [], []>} : vector<24x128xf32>, vector<128x128xf32>, vector<24x128xf32> -> vector<24x128xf32>
    %100 = arith.addf %95, %99 : vector<24x128xf32>
    %101 = vector.extract_strided_slice %34 {offsets = [312, 0], sizes = [24, 128], strides = [1, 1]} : vector<384x128xf32> to vector<24x128xf32>
    %c13 = arith.constant 13 : index
    %c0_67 = arith.constant 0 : index
    %c0_68 = arith.constant 0 : index
    %102 = vector.load %arg5[%c13, %c0_67, %c0_68] : memref<16x128x128xf32, #tpu.memory_space<vmem>>, vector<1x128x128xf32>
    %103 = vector.shape_cast %102 : vector<1x128x128xf32> to vector<128x128xf32>
    %cst_69 = arith.constant dense<0.000000e+00> : vector<24x128xf32>
    %104 = tpu.matmul %101, %103, %cst_69 {dimension_numbers = #tpu.dot_dimension_numbers<[1], [0], [0], [1], [0, 0, 1, 1], [], []>} : vector<24x128xf32>, vector<128x128xf32>, vector<24x128xf32> -> vector<24x128xf32>
    %105 = arith.addf %100, %104 : vector<24x128xf32>
    %106 = vector.extract_strided_slice %34 {offsets = [336, 0], sizes = [24, 128], strides = [1, 1]} : vector<384x128xf32> to vector<24x128xf32>
    %c14 = arith.constant 14 : index
    %c0_70 = arith.constant 0 : index
    %c0_71 = arith.constant 0 : index
    %107 = vector.load %arg5[%c14, %c0_70, %c0_71] : memref<16x128x128xf32, #tpu.memory_space<vmem>>, vector<1x128x128xf32>
    %108 = vector.shape_cast %107 : vector<1x128x128xf32> to vector<128x128xf32>
    %cst_72 = arith.constant dense<0.000000e+00> : vector<24x128xf32>
    %109 = tpu.matmul %106, %108, %cst_72 {dimension_numbers = #tpu.dot_dimension_numbers<[1], [0], [0], [1], [0, 0, 1, 1], [], []>} : vector<24x128xf32>, vector<128x128xf32>, vector<24x128xf32> -> vector<24x128xf32>
    %110 = arith.addf %105, %109 : vector<24x128xf32>
    %111 = vector.extract_strided_slice %34 {offsets = [360, 0], sizes = [24, 128], strides = [1, 1]} : vector<384x128xf32> to vector<24x128xf32>
    %c15 = arith.constant 15 : index
    %c0_73 = arith.constant 0 : index
    %c0_74 = arith.constant 0 : index
    %112 = vector.load %arg5[%c15, %c0_73, %c0_74] : memref<16x128x128xf32, #tpu.memory_space<vmem>>, vector<1x128x128xf32>
    %113 = vector.shape_cast %112 : vector<1x128x128xf32> to vector<128x128xf32>
    %cst_75 = arith.constant dense<0.000000e+00> : vector<24x128xf32>
    %114 = tpu.matmul %111, %113, %cst_75 {dimension_numbers = #tpu.dot_dimension_numbers<[1], [0], [0], [1], [0, 0, 1, 1], [], []>} : vector<24x128xf32>, vector<128x128xf32>, vector<24x128xf32> -> vector<24x128xf32>
    %115 = arith.addf %110, %114 : vector<24x128xf32>
    %c0_76 = arith.constant 0 : index
    %c0_77 = arith.constant 0 : index
    %116 = vector.load %arg6[%c0_76, %c0_77] : memref<1x128xf32, #tpu.memory_space<vmem>>, vector<1x128xf32>
    %117 = vector.broadcast %116 : vector<1x128xf32> to vector<24x128xf32>
    %118 = arith.addf %115, %117 : vector<24x128xf32>
    %119 = arith.negf %118 : vector<24x128xf32>
    %120 = math.exp %119 : vector<24x128xf32>
    %cst_78 = arith.constant 1.000000e+00 : f32
    %121 = vector.broadcast %cst_78 : f32 to vector<24x128xf32>
    %122 = arith.addf %121, %120 : vector<24x128xf32>
    %123 = arith.divf %121, %122 : vector<24x128xf32>
    %124 = arith.mulf %118, %123 : vector<24x128xf32>
    %c0_79 = arith.constant 0 : index
    %c0_80 = arith.constant 0 : index
    %125 = vector.load %arg7[%c0_79, %c0_80] : memref<72x24xf32, #tpu.memory_space<vmem>>, vector<72x24xf32>
    %cst_81 = arith.constant dense<0.000000e+00> : vector<72x128xf32>
    %126 = tpu.matmul %125, %124, %cst_81 {dimension_numbers = #tpu.dot_dimension_numbers<[1], [0], [0], [1], [0, 0, 1, 1], [], []>} : vector<72x24xf32>, vector<24x128xf32>, vector<72x128xf32> -> vector<72x128xf32>
    %cst_82 = arith.constant 0.000000e+00 : f32
    %127 = vector.broadcast %cst_82 : f32 to vector<8x128xf32>
    %128 = vector.extract_strided_slice %126 {offsets = [0, 0], sizes = [8, 128], strides = [1, 1]} : vector<72x128xf32> to vector<8x128xf32>
    %c0_83 = arith.constant 0 : index
    %c0_84 = arith.constant 0 : index
    %c0_85 = arith.constant 0 : index
    %129 = vector.load %arg8[%c0_83, %c0_84, %c0_85] : memref<9x128x128xf32, #tpu.memory_space<vmem>>, vector<1x128x128xf32>
    %130 = vector.shape_cast %129 : vector<1x128x128xf32> to vector<128x128xf32>
    %cst_86 = arith.constant dense<0.000000e+00> : vector<8x128xf32>
    %131 = tpu.matmul %128, %130, %cst_86 {dimension_numbers = #tpu.dot_dimension_numbers<[1], [0], [0], [1], [0, 0, 1, 1], [], []>} : vector<8x128xf32>, vector<128x128xf32>, vector<8x128xf32> -> vector<8x128xf32>
    %132 = arith.addf %127, %131 : vector<8x128xf32>
    %133 = vector.extract_strided_slice %126 {offsets = [8, 0], sizes = [8, 128], strides = [1, 1]} : vector<72x128xf32> to vector<8x128xf32>
    %c1_87 = arith.constant 1 : index
    %c0_88 = arith.constant 0 : index
    %c0_89 = arith.constant 0 : index
    %134 = vector.load %arg8[%c1_87, %c0_88, %c0_89] : memref<9x128x128xf32, #tpu.memory_space<vmem>>, vector<1x128x128xf32>
    %135 = vector.shape_cast %134 : vector<1x128x128xf32> to vector<128x128xf32>
    %cst_90 = arith.constant dense<0.000000e+00> : vector<8x128xf32>
    %136 = tpu.matmul %133, %135, %cst_90 {dimension_numbers = #tpu.dot_dimension_numbers<[1], [0], [0], [1], [0, 0, 1, 1], [], []>} : vector<8x128xf32>, vector<128x128xf32>, vector<8x128xf32> -> vector<8x128xf32>
    %137 = arith.addf %132, %136 : vector<8x128xf32>
    %138 = vector.extract_strided_slice %126 {offsets = [16, 0], sizes = [8, 128], strides = [1, 1]} : vector<72x128xf32> to vector<8x128xf32>
    %c2_91 = arith.constant 2 : index
    %c0_92 = arith.constant 0 : index
    %c0_93 = arith.constant 0 : index
    %139 = vector.load %arg8[%c2_91, %c0_92, %c0_93] : memref<9x128x128xf32, #tpu.memory_space<vmem>>, vector<1x128x128xf32>
    %140 = vector.shape_cast %139 : vector<1x128x128xf32> to vector<128x128xf32>
    %cst_94 = arith.constant dense<0.000000e+00> : vector<8x128xf32>
    %141 = tpu.matmul %138, %140, %cst_94 {dimension_numbers = #tpu.dot_dimension_numbers<[1], [0], [0], [1], [0, 0, 1, 1], [], []>} : vector<8x128xf32>, vector<128x128xf32>, vector<8x128xf32> -> vector<8x128xf32>
    %142 = arith.addf %137, %141 : vector<8x128xf32>
    %143 = vector.extract_strided_slice %126 {offsets = [24, 0], sizes = [8, 128], strides = [1, 1]} : vector<72x128xf32> to vector<8x128xf32>
    %c3_95 = arith.constant 3 : index
    %c0_96 = arith.constant 0 : index
    %c0_97 = arith.constant 0 : index
    %144 = vector.load %arg8[%c3_95, %c0_96, %c0_97] : memref<9x128x128xf32, #tpu.memory_space<vmem>>, vector<1x128x128xf32>
    %145 = vector.shape_cast %144 : vector<1x128x128xf32> to vector<128x128xf32>
    %cst_98 = arith.constant dense<0.000000e+00> : vector<8x128xf32>
    %146 = tpu.matmul %143, %145, %cst_98 {dimension_numbers = #tpu.dot_dimension_numbers<[1], [0], [0], [1], [0, 0, 1, 1], [], []>} : vector<8x128xf32>, vector<128x128xf32>, vector<8x128xf32> -> vector<8x128xf32>
    %147 = arith.addf %142, %146 : vector<8x128xf32>
    %148 = vector.extract_strided_slice %126 {offsets = [32, 0], sizes = [8, 128], strides = [1, 1]} : vector<72x128xf32> to vector<8x128xf32>
    %c4_99 = arith.constant 4 : index
    %c0_100 = arith.constant 0 : index
    %c0_101 = arith.constant 0 : index
    %149 = vector.load %arg8[%c4_99, %c0_100, %c0_101] : memref<9x128x128xf32, #tpu.memory_space<vmem>>, vector<1x128x128xf32>
    %150 = vector.shape_cast %149 : vector<1x128x128xf32> to vector<128x128xf32>
    %cst_102 = arith.constant dense<0.000000e+00> : vector<8x128xf32>
    %151 = tpu.matmul %148, %150, %cst_102 {dimension_numbers = #tpu.dot_dimension_numbers<[1], [0], [0], [1], [0, 0, 1, 1], [], []>} : vector<8x128xf32>, vector<128x128xf32>, vector<8x128xf32> -> vector<8x128xf32>
    %152 = arith.addf %147, %151 : vector<8x128xf32>
    %153 = vector.extract_strided_slice %126 {offsets = [40, 0], sizes = [8, 128], strides = [1, 1]} : vector<72x128xf32> to vector<8x128xf32>
    %c5_103 = arith.constant 5 : index
    %c0_104 = arith.constant 0 : index
    %c0_105 = arith.constant 0 : index
    %154 = vector.load %arg8[%c5_103, %c0_104, %c0_105] : memref<9x128x128xf32, #tpu.memory_space<vmem>>, vector<1x128x128xf32>
    %155 = vector.shape_cast %154 : vector<1x128x128xf32> to vector<128x128xf32>
    %cst_106 = arith.constant dense<0.000000e+00> : vector<8x128xf32>
    %156 = tpu.matmul %153, %155, %cst_106 {dimension_numbers = #tpu.dot_dimension_numbers<[1], [0], [0], [1], [0, 0, 1, 1], [], []>} : vector<8x128xf32>, vector<128x128xf32>, vector<8x128xf32> -> vector<8x128xf32>
    %157 = arith.addf %152, %156 : vector<8x128xf32>
    %158 = vector.extract_strided_slice %126 {offsets = [48, 0], sizes = [8, 128], strides = [1, 1]} : vector<72x128xf32> to vector<8x128xf32>
    %c6_107 = arith.constant 6 : index
    %c0_108 = arith.constant 0 : index
    %c0_109 = arith.constant 0 : index
    %159 = vector.load %arg8[%c6_107, %c0_108, %c0_109] : memref<9x128x128xf32, #tpu.memory_space<vmem>>, vector<1x128x128xf32>
    %160 = vector.shape_cast %159 : vector<1x128x128xf32> to vector<128x128xf32>
    %cst_110 = arith.constant dense<0.000000e+00> : vector<8x128xf32>
    %161 = tpu.matmul %158, %160, %cst_110 {dimension_numbers = #tpu.dot_dimension_numbers<[1], [0], [0], [1], [0, 0, 1, 1], [], []>} : vector<8x128xf32>, vector<128x128xf32>, vector<8x128xf32> -> vector<8x128xf32>
    %162 = arith.addf %157, %161 : vector<8x128xf32>
    %163 = vector.extract_strided_slice %126 {offsets = [56, 0], sizes = [8, 128], strides = [1, 1]} : vector<72x128xf32> to vector<8x128xf32>
    %c7_111 = arith.constant 7 : index
    %c0_112 = arith.constant 0 : index
    %c0_113 = arith.constant 0 : index
    %164 = vector.load %arg8[%c7_111, %c0_112, %c0_113] : memref<9x128x128xf32, #tpu.memory_space<vmem>>, vector<1x128x128xf32>
    %165 = vector.shape_cast %164 : vector<1x128x128xf32> to vector<128x128xf32>
    %cst_114 = arith.constant dense<0.000000e+00> : vector<8x128xf32>
    %166 = tpu.matmul %163, %165, %cst_114 {dimension_numbers = #tpu.dot_dimension_numbers<[1], [0], [0], [1], [0, 0, 1, 1], [], []>} : vector<8x128xf32>, vector<128x128xf32>, vector<8x128xf32> -> vector<8x128xf32>
    %167 = arith.addf %162, %166 : vector<8x128xf32>
    %168 = vector.extract_strided_slice %126 {offsets = [64, 0], sizes = [8, 128], strides = [1, 1]} : vector<72x128xf32> to vector<8x128xf32>
    %c8_115 = arith.constant 8 : index
    %c0_116 = arith.constant 0 : index
    %c0_117 = arith.constant 0 : index
    %169 = vector.load %arg8[%c8_115, %c0_116, %c0_117] : memref<9x128x128xf32, #tpu.memory_space<vmem>>, vector<1x128x128xf32>
    %170 = vector.shape_cast %169 : vector<1x128x128xf32> to vector<128x128xf32>
    %cst_118 = arith.constant dense<0.000000e+00> : vector<8x128xf32>
    %171 = tpu.matmul %168, %170, %cst_118 {dimension_numbers = #tpu.dot_dimension_numbers<[1], [0], [0], [1], [0, 0, 1, 1], [], []>} : vector<8x128xf32>, vector<128x128xf32>, vector<8x128xf32> -> vector<8x128xf32>
    %172 = arith.addf %167, %171 : vector<8x128xf32>
    %c0_119 = arith.constant 0 : index
    %c0_120 = arith.constant 0 : index
    %173 = vector.load %arg9[%c0_119, %c0_120] : memref<1x128xf32, #tpu.memory_space<vmem>>, vector<1x128xf32>
    %174 = vector.broadcast %173 : vector<1x128xf32> to vector<8x128xf32>
    %175 = arith.addf %172, %174 : vector<8x128xf32>
    %176 = arith.negf %175 : vector<8x128xf32>
    %177 = math.exp %176 : vector<8x128xf32>
    %cst_121 = arith.constant 1.000000e+00 : f32
    %178 = vector.broadcast %cst_121 : f32 to vector<8x128xf32>
    %179 = arith.addf %178, %177 : vector<8x128xf32>
    %180 = arith.divf %178, %179 : vector<8x128xf32>
    %181 = arith.mulf %175, %180 : vector<8x128xf32>
    %c0_122 = arith.constant 0 : index
    %c0_123 = arith.constant 0 : index
    %182 = vector.load %arg10[%c0_122, %c0_123] : memref<128x512xf32, #tpu.memory_space<vmem>>, vector<128x512xf32>
    %cst_124 = arith.constant dense<0.000000e+00> : vector<8x512xf32>
    %183 = tpu.matmul %181, %182, %cst_124 {dimension_numbers = #tpu.dot_dimension_numbers<[1], [0], [0], [1], [0, 0, 1, 1], [], []>} : vector<8x128xf32>, vector<128x512xf32>, vector<8x512xf32> -> vector<8x512xf32>
    %c0_125 = arith.constant 0 : index
    %c0_126 = arith.constant 0 : index
    %184 = vector.load %arg11[%c0_125, %c0_126] : memref<1x512xf32, #tpu.memory_space<vmem>>, vector<1x512xf32>
    %185 = vector.broadcast %184 : vector<1x512xf32> to vector<8x512xf32>
    %186 = arith.addf %183, %185 : vector<8x512xf32>
    %187 = arith.negf %186 : vector<8x512xf32>
    %188 = math.exp %187 : vector<8x512xf32>
    %cst_127 = arith.constant 1.000000e+00 : f32
    %189 = vector.broadcast %cst_127 : f32 to vector<8x512xf32>
    %190 = arith.addf %189, %188 : vector<8x512xf32>
    %191 = arith.divf %189, %190 : vector<8x512xf32>
    %192 = arith.mulf %186, %191 : vector<8x512xf32>
    %c0_128 = arith.constant 0 : index
    %c0_129 = arith.constant 0 : index
    %193 = vector.load %arg12[%c0_128, %c0_129] : memref<512x128xf32, #tpu.memory_space<vmem>>, vector<512x128xf32>
    %cst_130 = arith.constant dense<0.000000e+00> : vector<8x128xf32>
    %194 = tpu.matmul %192, %193, %cst_130 {dimension_numbers = #tpu.dot_dimension_numbers<[1], [0], [0], [1], [0, 0, 1, 1], [], []>} : vector<8x512xf32>, vector<512x128xf32>, vector<8x128xf32> -> vector<8x128xf32>
    %c0_131 = arith.constant 0 : index
    %c0_132 = arith.constant 0 : index
    %195 = vector.load %arg13[%c0_131, %c0_132] : memref<1x128xf32, #tpu.memory_space<vmem>>, vector<1x128xf32>
    %196 = vector.broadcast %195 : vector<1x128xf32> to vector<8x128xf32>
    %197 = arith.addf %194, %196 : vector<8x128xf32>
    %c0_133 = arith.constant 0 : index
    %c0_134 = arith.constant 0 : index
    %198 = vector.load %arg14[%c0_133, %c0_134] : memref<8x128xf32, #tpu.memory_space<vmem>>, vector<8x128xf32>
    tpu.vector_store %arg14[%c0_133, %c0_134], %197 {strides = array<i32>} : memref<8x128xf32, #tpu.memory_space<vmem>>, vector<8x128xf32>,
    return
  }
}

</mosaic_0001>

<llo_original>
// kernel: dqn_forward.1
$region0: #{dqn_forward.1}
  #allocation0 [shape = 'u32[]', space=smem, size = 0x4, offset = 0x4, fixed_abs, tag = 'smem constant byte address 0x4 - core index']
  #allocation1 [shape = 'u32[144,128]{1,0:T(1,128)}', space=vmem, size = 0x12000, scoped, tag = 'internal scratch']
  %s0 = inlined_call_operand.vmem [shape: f32[168,128], index: 0, kind: input, shape index: {}]
  %s1 = inlined_call_operand.vmem [shape: f32[512,168], index: 1, kind: input, shape index: {}]
  %s2 = inlined_call_operand.vmem [shape: f32[4,128,128], index: 2, kind: input, shape index: {}]
  %s3 = inlined_call_operand.vmem [shape: f32[1,128], index: 3, kind: input, shape index: {}]
  %s4 = inlined_call_operand.vmem [shape: f32[384,128], index: 4, kind: input, shape index: {}]
  %s5 = inlined_call_operand.vmem [shape: f32[16,128,128], index: 5, kind: input, shape index: {}]
  %s6 = inlined_call_operand.vmem [shape: f32[1,128], index: 6, kind: input, shape index: {}]
  %s7 = inlined_call_operand.vmem [shape: f32[72,24], index: 7, kind: input, shape index: {}]
  %s8 = inlined_call_operand.vmem [shape: f32[9,128,128], index: 8, kind: input, shape index: {}]
  %s9 = inlined_call_operand.vmem [shape: f32[1,128], index: 9, kind: input, shape index: {}]
  %s10 = inlined_call_operand.vmem [shape: f32[128,512], index: 10, kind: input, shape index: {}]
  %s11 = inlined_call_operand.vmem [shape: f32[1,512], index: 11, kind: input, shape index: {}]
  %s12 = inlined_call_operand.vmem [shape: f32[512,128], index: 12, kind: input, shape index: {}]
  %s13 = inlined_call_operand.vmem [shape: f32[1,128], index: 13, kind: input, shape index: {}]
  %s14 = inlined_call_operand.vmem [shape: f32[8,128], index: 14, kind: output, shape index: {}]
  %s15 = sld [smem:[#allocation0]]
  $region66: #{dqn_forward.1} parent=0
    _
  %s17 = ssub.s32 1, %s15
  %s18 = scalar_select 0, %s17, %s15
  // Predicated region
  $region2: #{dqn_forward.1} parent=0 // pred_check
    _
  $region3: #{dqn_forward.1} parent=0 // pred_check_branch
    %20 = sbr.rel (0) target = $region5
  $region4: #{dqn_forward.1} parent=0 // pred_region
    _
  $region5: #{dqn_forward.1} parent=0 // pred_fallthru
    _
  // Predicated region
  $region6: #{dqn_forward.1} parent=0 // pred_check
    _
  $region7: #{dqn_forward.1} parent=0 // pred_check_branch
    %22 = sbr.rel (0) target = $region9
  $region8: #{dqn_forward.1} parent=0 // pred_region
    _
  $region9: #{dqn_forward.1} parent=0 // pred_fallthru
    _
  // Predicated region
  $region10: #{dqn_forward.1} parent=0 // pred_check
    _
  $region11: #{dqn_forward.1} parent=0 // pred_check_branch
    %24 = sbr.rel (0) target = $region13
  $region12: #{dqn_forward.1} parent=0 // pred_region
    _
  $region13: #{dqn_forward.1} parent=0 // pred_fallthru
    _
  // Predicated region
  $region14: #{dqn_forward.1} parent=0 // pred_check
    _
  $region15: #{dqn_forward.1} parent=0 // pred_check_branch
    %26 = sbr.rel (0) target = $region17
  $region16: #{dqn_forward.1} parent=0 // pred_region
    _
  $region17: #{dqn_forward.1} parent=0 // pred_fallthru
    _
  // Predicated region
  $region18: #{dqn_forward.1} parent=0 // pred_check
    _
  $region19: #{dqn_forward.1} parent=0 // pred_check_branch
    %28 = sbr.rel (0) target = $region21
  $region20: #{dqn_forward.1} parent=0 // pred_region
    _
  $region21: #{dqn_forward.1} parent=0 // pred_fallthru
    _
  // Predicated region
  $region22: #{dqn_forward.1} parent=0 // pred_check
    _
  $region23: #{dqn_forward.1} parent=0 // pred_check_branch
    %30 = sbr.rel (0) target = $region25
  $region24: #{dqn_forward.1} parent=0 // pred_region
    _
  $region25: #{dqn_forward.1} parent=0 // pred_fallthru
    _
  // Predicated region
  $region26: #{dqn_forward.1} parent=0 // pred_check
    _
  $region27: #{dqn_forward.1} parent=0 // pred_check_branch
    %32 = sbr.rel (0) target = $region29
  $region28: #{dqn_forward.1} parent=0 // pred_region
    _
  $region29: #{dqn_forward.1} parent=0 // pred_fallthru
    _
  // Predicated region
  $region30: #{dqn_forward.1} parent=0 // pred_check
    _
  $region31: #{dqn_forward.1} parent=0 // pred_check_branch
    %34 = sbr.rel (0) target = $region33
  $region32: #{dqn_forward.1} parent=0 // pred_region
    _
  $region33: #{dqn_forward.1} parent=0 // pred_fallthru
    _
  // Predicated region
  $region34: #{dqn_forward.1} parent=0 // pred_check
    _
  $region35: #{dqn_forward.1} parent=0 // pred_check_branch
    %36 = sbr.rel (0) target = $region37
  $region36: #{dqn_forward.1} parent=0 // pred_region
    _
  $region37: #{dqn_forward.1} parent=0 // pred_fallthru
    _
  // Predicated region
  $region38: #{dqn_forward.1} parent=0 // pred_check
    _
  $region39: #{dqn_forward.1} parent=0 // pred_check_branch
    %38 = sbr.rel (0) target = $region41
  $region40: #{dqn_forward.1} parent=0 // pred_region
    _
  $region41: #{dqn_forward.1} parent=0 // pred_fallthru
    _
  // Predicated region
  $region42: #{dqn_forward.1} parent=0 // pred_check
    _
  $region43: #{dqn_forward.1} parent=0 // pred_check_branch
    %40 = sbr.rel (0) target = $region45
  $region44: #{dqn_forward.1} parent=0 // pred_region
    _
  $region45: #{dqn_forward.1} parent=0 // pred_fallthru
    _
  // Predicated region
  $region46: #{dqn_forward.1} parent=0 // pred_check
    _
  $region47: #{dqn_forward.1} parent=0 // pred_check_branch
    %42 = sbr.rel (0) target = $region49
  $region48: #{dqn_forward.1} parent=0 // pred_region
    _
  $region49: #{dqn_forward.1} parent=0 // pred_fallthru
    _
  // Predicated region
  $region50: #{dqn_forward.1} parent=0 // pred_check
    _
  $region51: #{dqn_forward.1} parent=0 // pred_check_branch
    %44 = sbr.rel (0) target = $region53
  $region52: #{dqn_forward.1} parent=0 // pred_region
    _
  $region53: #{dqn_forward.1} parent=0 // pred_fallthru
    _
  // Predicated region
  $region54: #{dqn_forward.1} parent=0 // pred_check
    _
  $region55: #{dqn_forward.1} parent=0 // pred_check_branch
    %46 = sbr.rel (0) target = $region57
  $region56: #{dqn_forward.1} parent=0 // pred_region
    _
  $region57: #{dqn_forward.1} parent=0 // pred_fallthru
    _
  %v47 = vld [vmem:[%s0] sm:$0xff]
  %v48 = vld [vmem:[%s0 + $0x8] sm:$0xff]
  %v49 = vld [vmem:[%s0 + $0x10] sm:$0xff]
  %v50 = vld [vmem:[%s0 + $0x18] sm:$0xff]
  %v51 = vld [vmem:[%s0 + $0x20] sm:$0xff]
  %v52 = vld [vmem:[%s0 + $0x28] sm:$0xff]
  %v53 = vld [vmem:[%s0 + $0x30] sm:$0xff]
  %v54 = vld [vmem:[%s0 + $0x38] sm:$0xff]
  %v55 = vld [vmem:[%s0 + $0x40] sm:$0xff]
  %v56 = vld [vmem:[%s0 + $0x48] sm:$0xff]
  %v57 = vld [vmem:[%s0 + $0x50] sm:$0xff]
  %v58 = vld [vmem:[%s0 + $0x58] sm:$0xff]
  %v59 = vld [vmem:[%s0 + $0x60] sm:$0xff]
  %v60 = vld [vmem:[%s0 + $0x68] sm:$0xff]
  %v61 = vld [vmem:[%s0 + $0x70] sm:$0xff]
  %v62 = vld [vmem:[%s0 + $0x78] sm:$0xff]
  %v63 = vld [vmem:[%s0 + $0x80] sm:$0xff]
  %v64 = vld [vmem:[%s0 + $0x88] sm:$0xff]
  %v65 = vld [vmem:[%s0 + $0x90] sm:$0xff]
  %v66 = vld [vmem:[%s0 + $0x98] sm:$0xff]
  %v67 = vld [vmem:[%s0 + $0xa0] sm:$0xff]
  %v68 = vld [vmem:[%s1] sm:$0xff]
  %v69 = vld [vmem:[%s1 + $0x8] sm:$0xff]
  %v70 = vld [vmem:[%s1 + $0x10] sm:$0xff]
  %v71 = vld [vmem:[%s1 + $0x18] sm:$0xff]
  %v72 = vld [vmem:[%s1 + $0x20] sm:$0xff]
  %v73 = vld [vmem:[%s1 + $0x28] sm:$0xff]
  %v74 = vld [vmem:[%s1 + $0x30] sm:$0xff]
  %v75 = vld [vmem:[%s1 + $0x38] sm:$0xff]
  %v76 = vld [vmem:[%s1 + $0x40] sm:$0xff]
  %v77 = vld [vmem:[%s1 + $0x48] sm:$0xff]
  %v78 = vld [vmem:[%s1 + $0x50] sm:$0xff]
  %v79 = vld [vmem:[%s1 + $0x58] sm:$0xff]
  %v80 = vld [vmem:[%s1 + $0x60] sm:$0xff]
  %v81 = vld [vmem:[%s1 + $0x68] sm:$0xff]
  %v82 = vld [vmem:[%s1 + $0x70] sm:$0xff]
  %v83 = vld [vmem:[%s1 + $0x78] sm:$0xff]
  %v84 = vld [vmem:[%s1 + $0x80] sm:$0xff]
  %v85 = vld [vmem:[%s1 + $0x88] sm:$0xff]
  %v86 = vld [vmem:[%s1 + $0x90] sm:$0xff]
  %v87 = vld [vmem:[%s1 + $0x98] sm:$0xff]
  %v88 = vld [vmem:[%s1 + $0xa0] sm:$0xff]
  %v89 = vld [vmem:[%s1 + $0xa8] sm:$0xff]
  %v90 = vld [vmem:[%s1 + $0xb0] sm:$0xff]
  %v91 = vld [vmem:[%s1 + $0xb8] sm:$0xff]
  %v92 = vld [vmem:[%s1 + $0xc0] sm:$0xff]
  %v93 = vld [vmem:[%s1 + $0xc8] sm:$0xff]
  %v94 = vld [vmem:[%s1 + $0xd0] sm:$0xff]
  %v95 = vld [vmem:[%s1 + $0xd8] sm:$0xff]
  %v96 = vld [vmem:[%s1 + $0xe0] sm:$0xff]
  %v97 = vld [vmem:[%s1 + $0xe8] sm:$0xff]
  %v98 = vld [vmem:[%s1 + $0xf0] sm:$0xff]
  %v99 = vld [vmem:[%s1 + $0xf8] sm:$0xff]
  %v100 = vld [vmem:[%s1 + $0x100] sm:$0xff]
  %v101 = vld [vmem:[%s1 + $0x108] sm:$0xff]
  %v102 = vld [vmem:[%s1 + $0x110] sm:$0xff]
  %v103 = vld [vmem:[%s1 + $0x118] sm:$0xff]
  %v104 = vld [vmem:[%s1 + $0x120] sm:$0xff]
  %v105 = vld [vmem:[%s1 + $0x128] sm:$0xff]
  %v106 = vld [vmem:[%s1 + $0x130] sm:$0xff]
  %v107 = vld [vmem:[%s1 + $0x138] sm:$0xff]
  %v108 = vld [vmem:[%s1 + $0x140] sm:$0xff]
  %v109 = vld [vmem:[%s1 + $0x148] sm:$0xff]
  %v110 = vld [vmem:[%s1 + $0x150] sm:$0xff]
  %v111 = vld [vmem:[%s1 + $0x158] sm:$0xff]
  %v112 = vld [vmem:[%s1 + $0x160] sm:$0xff]
  %v113 = vld [vmem:[%s1 + $0x168] sm:$0xff]
  %v114 = vld [vmem:[%s1 + $0x170] sm:$0xff]
  %v115 = vld [vmem:[%s1 + $0x178] sm:$0xff]
  %v116 = vld [vmem:[%s1 + $0x180] sm:$0xff]
  %v117 = vld [vmem:[%s1 + $0x188] sm:$0xff]
  %v118 = vld [vmem:[%s1 + $0x190] sm:$0xff]
  %v119 = vld [vmem:[%s1 + $0x198] sm:$0xff]
  %v120 = vld [vmem:[%s1 + $0x1a0] sm:$0xff]
  %v121 = vld [vmem:[%s1 + $0x1a8] sm:$0xff]
  %v122 = vld [vmem:[%s1 + $0x1b0] sm:$0xff]
  %v123 = vld [vmem:[%s1 + $0x1b8] sm:$0xff]
  %v124 = vld [vmem:[%s1 + $0x1c0] sm:$0xff]
  %v125 = vld [vmem:[%s1 + $0x1c8] sm:$0xff]
  %v126 = vld [vmem:[%s1 + $0x1d0] sm:$0xff]
  %v127 = vld [vmem:[%s1 + $0x1d8] sm:$0xff]
  %v128 = vld [vmem:[%s1 + $0x1e0] sm:$0xff]
  %v129 = vld [vmem:[%s1 + $0x1e8] sm:$0xff]
  %v130 = vld [vmem:[%s1 + $0x1f0] sm:$0xff]
  %v131 = vld [vmem:[%s1 + $0x1f8] sm:$0xff]
  %v132 = vld [vmem:[%s1 + $0x200] sm:$0xff]
  %v133 = vld [vmem:[%s1 + $0x208] sm:$0xff]
  %v134 = vld [vmem:[%s1 + $0x210] sm:$0xff]
  %v135 = vld [vmem:[%s1 + $0x218] sm:$0xff]
  %v136 = vld [vmem:[%s1 + $0x220] sm:$0xff]
  %v137 = vld [vmem:[%s1 + $0x228] sm:$0xff]
  %v138 = vld [vmem:[%s1 + $0x230] sm:$0xff]
  %v139 = vld [vmem:[%s1 + $0x238] sm:$0xff]
  %v140 = vld [vmem:[%s1 + $0x240] sm:$0xff]
  %v141 = vld [vmem:[%s1 + $0x248] sm:$0xff]
  %v142 = vld [vmem:[%s1 + $0x250] sm:$0xff]
  %v143 = vld [vmem:[%s1 + $0x258] sm:$0xff]
  %v144 = vld [vmem:[%s1 + $0x260] sm:$0xff]
  %v145 = vld [vmem:[%s1 + $0x268] sm:$0xff]
  %v146 = vld [vmem:[%s1 + $0x270] sm:$0xff]
  %v147 = vld [vmem:[%s1 + $0x278] sm:$0xff]
  %v148 = vld [vmem:[%s1 + $0x280] sm:$0xff]
  %v149 = vld [vmem:[%s1 + $0x288] sm:$0xff]
  %v150 = vld [vmem:[%s1 + $0x290] sm:$0xff]
  %v151 = vld [vmem:[%s1 + $0x298] sm:$0xff]
  %v152 = vld [vmem:[%s1 + $0x2a0] sm:$0xff]
  %v153 = vld [vmem:[%s1 + $0x2a8] sm:$0xff]
  %v154 = vld [vmem:[%s1 + $0x2b0] sm:$0xff]
  %v155 = vld [vmem:[%s1 + $0x2b8] sm:$0xff]
  %v156 = vld [vmem:[%s1 + $0x2c0] sm:$0xff]
  %v157 = vld [vmem:[%s1 + $0x2c8] sm:$0xff]
  %v158 = vld [vmem:[%s1 + $0x2d0] sm:$0xff]
  %v159 = vld [vmem:[%s1 + $0x2d8] sm:$0xff]
  %v160 = vld [vmem:[%s1 + $0x2e0] sm:$0xff]
  %v161 = vld [vmem:[%s1 + $0x2e8] sm:$0xff]
  %v162 = vld [vmem:[%s1 + $0x2f0] sm:$0xff]
  %v163 = vld [vmem:[%s1 + $0x2f8] sm:$0xff]
  %v164 = vld [vmem:[%s1 + $0x300] sm:$0xff]
  %v165 = vld [vmem:[%s1 + $0x308] sm:$0xff]
  %v166 = vld [vmem:[%s1 + $0x310] sm:$0xff]
  %v167 = vld [vmem:[%s1 + $0x318] sm:$0xff]
  %v168 = vld [vmem:[%s1 + $0x320] sm:$0xff]
  %v169 = vld [vmem:[%s1 + $0x328] sm:$0xff]
  %v170 = vld [vmem:[%s1 + $0x330] sm:$0xff]
  %v171 = vld [vmem:[%s1 + $0x338] sm:$0xff]
  %v172 = vld [vmem:[%s1 + $0x340] sm:$0xff]
  %v173 = vld [vmem:[%s1 + $0x348] sm:$0xff]
  %v174 = vld [vmem:[%s1 + $0x350] sm:$0xff]
  %v175 = vld [vmem:[%s1 + $0x358] sm:$0xff]
  %v176 = vld [vmem:[%s1 + $0x360] sm:$0xff]
  %v177 = vld [vmem:[%s1 + $0x368] sm:$0xff]
  %v178 = vld [vmem:[%s1 + $0x370] sm:$0xff]
  %v179 = vld [vmem:[%s1 + $0x378] sm:$0xff]
  %v180 = vld [vmem:[%s1 + $0x380] sm:$0xff]
  %v181 = vld [vmem:[%s1 + $0x388] sm:$0xff]
  %v182 = vld [vmem:[%s1 + $0x390] sm:$0xff]
  %v183 = vld [vmem:[%s1 + $0x398] sm:$0xff]
  %v184 = vld [vmem:[%s1 + $0x3a0] sm:$0xff]
  %v185 = vld [vmem:[%s1 + $0x3a8] sm:$0xff]
  %v186 = vld [vmem:[%s1 + $0x3b0] sm:$0xff]
  %v187 = vld [vmem:[%s1 + $0x3b8] sm:$0xff]
  %v188 = vld [vmem:[%s1 + $0x3c0] sm:$0xff]
  %v189 = vld [vmem:[%s1 + $0x3c8] sm:$0xff]
  %v190 = vld [vmem:[%s1 + $0x3d0] sm:$0xff]
  %v191 = vld [vmem:[%s1 + $0x3d8] sm:$0xff]
  %v192 = vld [vmem:[%s1 + $0x3e0] sm:$0xff]
  %v193 = vld [vmem:[%s1 + $0x3e8] sm:$0xff]
  %v194 = vld [vmem:[%s1 + $0x3f0] sm:$0xff]
  %v195 = vld [vmem:[%s1 + $0x3f8] sm:$0xff]
  %vm196 = vcmask 326656
  %v198 = vsel %vm196, %v69, 0
  %v201 = vsel %vm196, %v71, 0
  %v204 = vsel %vm196, %v73, 0
  %v207 = vsel %vm196, %v75, 0
  %v210 = vsel %vm196, %v77, 0
  %v213 = vsel %vm196, %v79, 0
  %v216 = vsel %vm196, %v81, 0
  %v219 = vsel %vm196, %v83, 0
  %v222 = vsel %vm196, %v85, 0
  %v225 = vsel %vm196, %v87, 0
  %v228 = vsel %vm196, %v89, 0
  %v231 = vsel %vm196, %v91, 0
  %v234 = vsel %vm196, %v93, 0
  %v237 = vsel %vm196, %v95, 0
  %v240 = vsel %vm196, %v97, 0
  %v243 = vsel %vm196, %v99, 0
  %v246 = vsel %vm196, %v101, 0
  %v249 = vsel %vm196, %v103, 0
  %v252 = vsel %vm196, %v105, 0
  %v255 = vsel %vm196, %v107, 0
  %v258 = vsel %vm196, %v109, 0
  %v261 = vsel %vm196, %v111, 0
  %v264 = vsel %vm196, %v113, 0
  %v267 = vsel %vm196, %v115, 0
  %v270 = vsel %vm196, %v117, 0
  %v273 = vsel %vm196, %v119, 0
  %v276 = vsel %vm196, %v121, 0
  %v279 = vsel %vm196, %v123, 0
  %v282 = vsel %vm196, %v125, 0
  %v285 = vsel %vm196, %v127, 0
  %v288 = vsel %vm196, %v129, 0
  %v291 = vsel %vm196, %v131, 0
  %v294 = vsel %vm196, %v133, 0
  %v297 = vsel %vm196, %v135, 0
  %v300 = vsel %vm196, %v137, 0
  %v303 = vsel %vm196, %v139, 0
  %v306 = vsel %vm196, %v141, 0
  %v309 = vsel %vm196, %v143, 0
  %v312 = vsel %vm196, %v145, 0
  %v315 = vsel %vm196, %v147, 0
  %v318 = vsel %vm196, %v149, 0
  %v321 = vsel %vm196, %v151, 0
  %v324 = vsel %vm196, %v153, 0
  %v327 = vsel %vm196, %v155, 0
  %v330 = vsel %vm196, %v157, 0
  %v333 = vsel %vm196, %v159, 0
  %v336 = vsel %vm196, %v161, 0
  %v339 = vsel %vm196, %v163, 0
  %v342 = vsel %vm196, %v165, 0
  %v345 = vsel %vm196, %v167, 0
  %v348 = vsel %vm196, %v169, 0
  %v351 = vsel %vm196, %v171, 0
  %v354 = vsel %vm196, %v173, 0
  %v357 = vsel %vm196, %v175, 0
  %v360 = vsel %vm196, %v177, 0
  %v363 = vsel %vm196, %v179, 0
  %v366 = vsel %vm196, %v181, 0
  %v369 = vsel %vm196, %v183, 0
  %v372 = vsel %vm196, %v185, 0
  %v375 = vsel %vm196, %v187, 0
  %v378 = vsel %vm196, %v189, 0
  %v381 = vsel %vm196, %v191, 0
  %v384 = vsel %vm196, %v193, 0
  %v387 = vsel %vm196, %v195, 0
  %389 = vmatprep.subr.mxu0 0.0
  %390 = vmatpush1.msra.mxu0 %v47
  %391 = vmatprep.subr.mxu0 0.0
  %392 = vmatpush1.msra.mxu0 %v48
  %393 = vmatprep.subr.mxu0 0.0
  %394 = vmatpush1.msra.mxu0 %v49
  %395 = vmatprep.subr.mxu0 0.0
  %396 = vmatpush1.msra.mxu0 %v50
  %397 = vmatprep.subr.mxu0 0.0
  %398 = vmatpush1.msra.mxu0 %v51
  %399 = vmatprep.subr.mxu0 0.0
  %400 = vmatpush1.msra.mxu0 %v52
  %401 = vmatprep.subr.mxu0 0.0
  %402 = vmatpush1.msra.mxu0 %v53
  %403 = vmatprep.subr.mxu0 0.0
  %404 = vmatpush1.msra.mxu0 %v54
  %405 = vmatprep.subr.mxu0 0.0
  %406 = vmatpush1.msra.mxu0 %v55
  %407 = vmatprep.subr.mxu0 0.0
  %408 = vmatpush1.msra.mxu0 %v56
  %409 = vmatprep.subr.mxu0 0.0
  %410 = vmatpush1.msra.mxu0 %v57
  %411 = vmatprep.subr.mxu0 0.0
  %412 = vmatpush1.msra.mxu0 %v58
  %413 = vmatprep.subr.mxu0 0.0
  %414 = vmatpush1.msra.mxu0 %v59
  %415 = vmatprep.subr.mxu0 0.0
  %416 = vmatpush1.msra.mxu0 %v60
  %417 = vmatprep.subr.mxu0 0.0
  %418 = vmatpush1.msra.mxu0 %v61
  %419 = vmatprep.subr.mxu0 0.0
  %420 = vmatpush1.msra.mxu0 %v62
  %421 = vmatprep.subr.mxu0 0.0
  %422 = vmatpush1.msra.mxu0 %v63
  %423 = vmatprep.subr.mxu0 0.0
  %424 = vmatpush1.msra.mxu0 %v64
  %425 = vmatprep.subr.mxu0 0.0
  %426 = vmatpush1.msra.mxu0 %v65
  %427 = vmatprep.subr.mxu0 0.0
  %428 = vmatpush1.msra.mxu0 %v66
  %429 = vmatprep.subr.mxu0 0.0
  %430 = vmatpush1.msra.mxu0 %v67
  %431 = vmatprep.subr.mxu0 0.0
  %432 = vmatpush1.msra.mxu0 0.0
  %433 = vmatprep.subr.mxu0 0.0
  %434 = vmatpush1.msra.mxu0 0.0
  %435 = vmatprep.subr.mxu0 0.0
  %436 = vmatpush1.msra.mxu0 0.0
  %437 = vmatprep.subr.mxu0 0.0
  %438 = vmatpush1.msra.mxu0 0.0
  %439 = vmatprep.subr.mxu0 0.0
  %440 = vmatpush1.msra.mxu0 0.0
  %441 = vmatprep.subr.mxu0 0.0
  %442 = vmatpush1.msra.mxu0 0.0
  %443 = vmatprep.subr.mxu0 0.0
  %444 = vmatpush1.msra.mxu0 0.0
  %445 = vmatprep.subr.mxu0 0.0
  %446 = vmatpush1.msra.mxu0 0.0
  %447 = vmatprep.subr.mxu0 0.0
  %448 = vmatpush1.msra.mxu0 0.0
  %449 = vmatprep.subr.mxu0 0.0
  %450 = vmatpush1.msra.mxu0 0.0
  %451 = vmatprep.subr.mxu0 0.0
  %452 = vmatpush1.msra.mxu0 0.0
  %453 = vmatprep.mubr.f32.mxu0 %v198
  %454 = vmatmul.mubr.f32.gmra.mrb[0].mxu0 %v68
  %v455 = vpop.f32.mrb[0].mxu0
  %v456 = vadd.f32 0.0, %v455
  %v457 = vpop.f32.mrb[0].mxu0
  %458 = vmatprep.mubr.f32.mxu0 %v201
  %459 = vmatmul.mubr.f32.gmra.mrb[0].mxu0 %v70
  %v460 = vpop.f32.mrb[0].mxu0
  %v461 = vadd.f32 0.0, %v460
  %v462 = vpop.f32.mrb[0].mxu0
  %463 = vmatprep.mubr.f32.mxu0 %v204
  %464 = vmatmul.mubr.f32.gmra.mrb[0].mxu0 %v72
  %v465 = vpop.f32.mrb[0].mxu0
  %v466 = vadd.f32 0.0, %v465
  %v467 = vpop.f32.mrb[0].mxu0
  %468 = vmatprep.mubr.f32.mxu0 %v207
  %469 = vmatmul.mubr.f32.gmra.mrb[0].mxu0 %v74
  %v470 = vpop.f32.mrb[0].mxu0
  %v471 = vadd.f32 0.0, %v470
  %v472 = vpop.f32.mrb[0].mxu0
  %473 = vmatprep.mubr.f32.mxu0 %v210
  %474 = vmatmul.mubr.f32.gmra.mrb[0].mxu0 %v76
  %v475 = vpop.f32.mrb[0].mxu0
  %v476 = vadd.f32 0.0, %v475
  %v477 = vpop.f32.mrb[0].mxu0
  %478 = vmatprep.mubr.f32.mxu0 %v213
  %479 = vmatmul.mubr.f32.gmra.mrb[0].mxu0 %v78
  %v480 = vpop.f32.mrb[0].mxu0
  %v481 = vadd.f32 0.0, %v480
  %v482 = vpop.f32.mrb[0].mxu0
  %483 = vmatprep.mubr.f32.mxu0 %v216
  %484 = vmatmul.mubr.f32.gmra.mrb[0].mxu0 %v80
  %v485 = vpop.f32.mrb[0].mxu0
  %v486 = vadd.f32 0.0, %v485
  %v487 = vpop.f32.mrb[0].mxu0
  %488 = vmatprep.mubr.f32.mxu0 %v219
  %489 = vmatmul.mubr.f32.gmra.mrb[0].mxu0 %v82
  %v490 = vpop.f32.mrb[0].mxu0
  %v491 = vadd.f32 0.0, %v490
  %v492 = vpop.f32.mrb[0].mxu0
  %493 = vmatprep.mubr.f32.mxu0 %v222
  %494 = vmatmul.mubr.f32.gmra.mrb[0].mxu0 %v84
  %v495 = vpop.f32.mrb[0].mxu0
  %v496 = vadd.f32 0.0, %v495
  %v497 = vpop.f32.mrb[0].mxu0
  %498 = vmatprep.mubr.f32.mxu0 %v225
  %499 = vmatmul.mubr.f32.gmra.mrb[0].mxu0 %v86
  %v500 = vpop.f32.mrb[0].mxu0
  %v501 = vadd.f32 0.0, %v500
  %v502 = vpop.f32.mrb[0].mxu0
  %503 = vmatprep.mubr.f32.mxu0 %v228
  %504 = vmatmul.mubr.f32.gmra.mrb[0].mxu0 %v88
  %v505 = vpop.f32.mrb[0].mxu0
  %v506 = vadd.f32 0.0, %v505
  %v507 = vpop.f32.mrb[0].mxu0
  %508 = vmatprep.mubr.f32.mxu0 %v231
  %509 = vmatmul.mubr.f32.gmra.mrb[0].mxu0 %v90
  %v510 = vpop.f32.mrb[0].mxu0
  %v511 = vadd.f32 0.0, %v510
  %v512 = vpop.f32.mrb[0].mxu0
  %513 = vmatprep.mubr.f32.mxu0 %v234
  %514 = vmatmul.mubr.f32.gmra.mrb[0].mxu0 %v92
  %v515 = vpop.f32.mrb[0].mxu0
  %v516 = vadd.f32 0.0, %v515
  %v517 = vpop.f32.mrb[0].mxu0
  %518 = vmatprep.mubr.f32.mxu0 %v237
  %519 = vmatmul.mubr.f32.gmra.mrb[0].mxu0 %v94
  %v520 = vpop.f32.mrb[0].mxu0
  %v521 = vadd.f32 0.0, %v520
  %v522 = vpop.f32.mrb[0].mxu0
  %523 = vmatprep.mubr.f32.mxu0 %v240
  %524 = vmatmul.mubr.f32.gmra.mrb[0].mxu0 %v96
  %v525 = vpop.f32.mrb[0].mxu0
  %v526 = vadd.f32 0.0, %v525
  %v527 = vpop.f32.mrb[0].mxu0
  %528 = vmatprep.mubr.f32.mxu0 %v243
  %529 = vmatmul.mubr.f32.gmra.mrb[0].mxu0 %v98
  %v530 = vpop.f32.mrb[0].mxu0
  %v531 = vadd.f32 0.0, %v530
  %v532 = vpop.f32.mrb[0].mxu0
  %533 = vmatprep.mubr.f32.mxu0 %v246
  %534 = vmatmul.mubr.f32.gmra.mrb[0].mxu0 %v100
  %v535 = vpop.f32.mrb[0].mxu0
  %v536 = vadd.f32 0.0, %v535
  %v537 = vpop.f32.mrb[0].mxu0
  %538 = vmatprep.mubr.f32.mxu0 %v249
  %539 = vmatmul.mubr.f32.gmra.mrb[0].mxu0 %v102
  %v540 = vpop.f32.mrb[0].mxu0
  %v541 = vadd.f32 0.0, %v540
  %v542 = vpop.f32.mrb[0].mxu0
  %543 = vmatprep.mubr.f32.mxu0 %v252
  %544 = vmatmul.mubr.f32.gmra.mrb[0].mxu0 %v104
  %v545 = vpop.f32.mrb[0].mxu0
  %v546 = vadd.f32 0.0, %v545
  %v547 = vpop.f32.mrb[0].mxu0
  %548 = vmatprep.mubr.f32.mxu0 %v255
  %549 = vmatmul.mubr.f32.gmra.mrb[0].mxu0 %v106
  %v550 = vpop.f32.mrb[0].mxu0
  %v551 = vadd.f32 0.0, %v550
  %v552 = vpop.f32.mrb[0].mxu0
  %553 = vmatprep.mubr.f32.mxu0 %v258
  %554 = vmatmul.mubr.f32.gmra.mrb[0].mxu0 %v108
  %v555 = vpop.f32.mrb[0].mxu0
  %v556 = vadd.f32 0.0, %v555
  %v557 = vpop.f32.mrb[0].mxu0
  %558 = vmatprep.mubr.f32.mxu0 %v261
  %559 = vmatmul.mubr.f32.gmra.mrb[0].mxu0 %v110
  %v560 = vpop.f32.mrb[0].mxu0
  %v561 = vadd.f32 0.0, %v560
  %v562 = vpop.f32.mrb[0].mxu0
  %563 = vmatprep.mubr.f32.mxu0 %v264
  %564 = vmatmul.mubr.f32.gmra.mrb[0].mxu0 %v112
  %v565 = vpop.f32.mrb[0].mxu0
  %v566 = vadd.f32 0.0, %v565
  %v567 = vpop.f32.mrb[0].mxu0
  %568 = vmatprep.mubr.f32.mxu0 %v267
  %569 = vmatmul.mubr.f32.gmra.mrb[0].mxu0 %v114
  %v570 = vpop.f32.mrb[0].mxu0
  %v571 = vadd.f32 0.0, %v570
  %v572 = vpop.f32.mrb[0].mxu0
  %573 = vmatprep.mubr.f32.mxu0 %v270
  %574 = vmatmul.mubr.f32.gmra.mrb[0].mxu0 %v116
  %v575 = vpop.f32.mrb[0].mxu0
  %v576 = vadd.f32 0.0, %v575
  %v577 = vpop.f32.mrb[0].mxu0
  %578 = vmatprep.mubr.f32.mxu0 %v273
  %579 = vmatmul.mubr.f32.gmra.mrb[0].mxu0 %v118
  %v580 = vpop.f32.mrb[0].mxu0
  %v581 = vadd.f32 0.0, %v580
  %v582 = vpop.f32.mrb[0].mxu0
  %583 = vmatprep.mubr.f32.mxu0 %v276
  %584 = vmatmul.mubr.f32.gmra.mrb[0].mxu0 %v120
  %v585 = vpop.f32.mrb[0].mxu0
  %v586 = vadd.f32 0.0, %v585
  %v587 = vpop.f32.mrb[0].mxu0
  %588 = vmatprep.mubr.f32.mxu0 %v279
  %589 = vmatmul.mubr.f32.gmra.mrb[0].mxu0 %v122
  %v590 = vpop.f32.mrb[0].mxu0
  %v591 = vadd.f32 0.0, %v590
  %v592 = vpop.f32.mrb[0].mxu0
  %593 = vmatprep.mubr.f32.mxu0 %v282
  %594 = vmatmul.mubr.f32.gmra.mrb[0].mxu0 %v124
  %v595 = vpop.f32.mrb[0].mxu0
  %v596 = vadd.f32 0.0, %v595
  %v597 = vpop.f32.mrb[0].mxu0
  %598 = vmatprep.mubr.f32.mxu0 %v285
  %599 = vmatmul.mubr.f32.gmra.mrb[0].mxu0 %v126
  %v600 = vpop.f32.mrb[0].mxu0
  %v601 = vadd.f32 0.0, %v600
  %v602 = vpop.f32.mrb[0].mxu0
  %603 = vmatprep.mubr.f32.mxu0 %v288
  %604 = vmatmul.mubr.f32.gmra.mrb[0].mxu0 %v128
  %v605 = vpop.f32.mrb[0].mxu0
  %v606 = vadd.f32 0.0, %v605
  %v607 = vpop.f32.mrb[0].mxu0
  %608 = vmatprep.mubr.f32.mxu0 %v291
  %609 = vmatmul.mubr.f32.gmra.mrb[0].mxu0 %v130
  %v610 = vpop.f32.mrb[0].mxu0
  %v611 = vadd.f32 0.0, %v610
  %v612 = vpop.f32.mrb[0].mxu0
  %613 = vmatprep.mubr.f32.mxu0 %v294
  %614 = vmatmul.mubr.f32.gmra.mrb[0].mxu0 %v132
  %v615 = vpop.f32.mrb[0].mxu0
  %v616 = vadd.f32 0.0, %v615
  %v617 = vpop.f32.mrb[0].mxu0
  %618 = vmatprep.mubr.f32.mxu0 %v297
  %619 = vmatmul.mubr.f32.gmra.mrb[0].mxu0 %v134
  %v620 = vpop.f32.mrb[0].mxu0
  %v621 = vadd.f32 0.0, %v620
  %v622 = vpop.f32.mrb[0].mxu0
  %623 = vmatprep.mubr.f32.mxu0 %v300
  %624 = vmatmul.mubr.f32.gmra.mrb[0].mxu0 %v136
  %v625 = vpop.f32.mrb[0].mxu0
  %v626 = vadd.f32 0.0, %v625
  %v627 = vpop.f32.mrb[0].mxu0
  %628 = vmatprep.mubr.f32.mxu0 %v303
  %629 = vmatmul.mubr.f32.gmra.mrb[0].mxu0 %v138
  %v630 = vpop.f32.mrb[0].mxu0
  %v631 = vadd.f32 0.0, %v630
  %v632 = vpop.f32.mrb[0].mxu0
  %633 = vmatprep.mubr.f32.mxu0 %v306
  %634 = vmatmul.mubr.f32.gmra.mrb[0].mxu0 %v140
  %v635 = vpop.f32.mrb[0].mxu0
  %v636 = vadd.f32 0.0, %v635
  %v637 = vpop.f32.mrb[0].mxu0
  %638 = vmatprep.mubr.f32.mxu0 %v309
  %639 = vmatmul.mubr.f32.gmra.mrb[0].mxu0 %v142
  %v640 = vpop.f32.mrb[0].mxu0
  %v641 = vadd.f32 0.0, %v640
  %v642 = vpop.f32.mrb[0].mxu0
  %643 = vmatprep.mubr.f32.mxu0 %v312
  %644 = vmatmul.mubr.f32.gmra.mrb[0].mxu0 %v144
  %v645 = vpop.f32.mrb[0].mxu0
  %v646 = vadd.f32 0.0, %v645
  %v647 = vpop.f32.mrb[0].mxu0
  %648 = vmatprep.mubr.f32.mxu0 %v315
  %649 = vmatmul.mubr.f32.gmra.mrb[0].mxu0 %v146
  %v650 = vpop.f32.mrb[0].mxu0
  %v651 = vadd.f32 0.0, %v650
  %v652 = vpop.f32.mrb[0].mxu0
  %653 = vmatprep.mubr.f32.mxu0 %v318
  %654 = vmatmul.mubr.f32.gmra.mrb[0].mxu0 %v148
  %v655 = vpop.f32.mrb[0].mxu0
  %v656 = vadd.f32 0.0, %v655
  %v657 = vpop.f32.mrb[0].mxu0
  %658 = vmatprep.mubr.f32.mxu0 %v321
  %659 = vmatmul.mubr.f32.gmra.mrb[0].mxu0 %v150
  %v660 = vpop.f32.mrb[0].mxu0
  %v661 = vadd.f32 0.0, %v660
  %v662 = vpop.f32.mrb[0].mxu0
  %663 = vmatprep.mubr.f32.mxu0 %v324
  %664 = vmatmul.mubr.f32.gmra.mrb[0].mxu0 %v152
  %v665 = vpop.f32.mrb[0].mxu0
  %v666 = vadd.f32 0.0, %v665
  %v667 = vpop.f32.mrb[0].mxu0
  %668 = vmatprep.mubr.f32.mxu0 %v327
  %669 = vmatmul.mubr.f32.gmra.mrb[0].mxu0 %v154
  %v670 = vpop.f32.mrb[0].mxu0
  %v671 = vadd.f32 0.0, %v670
  %v672 = vpop.f32.mrb[0].mxu0
  %673 = vmatprep.mubr.f32.mxu0 %v330
  %674 = vmatmul.mubr.f32.gmra.mrb[0].mxu0 %v156
  %v675 = vpop.f32.mrb[0].mxu0
  %v676 = vadd.f32 0.0, %v675
  %v677 = vpop.f32.mrb[0].mxu0
  %678 = vmatprep.mubr.f32.mxu0 %v333
  %679 = vmatmul.mubr.f32.gmra.mrb[0].mxu0 %v158
  %v680 = vpop.f32.mrb[0].mxu0
  %v681 = vadd.f32 0.0, %v680
  %v682 = vpop.f32.mrb[0].mxu0
  %683 = vmatprep.mubr.f32.mxu0 %v336
  %684 = vmatmul.mubr.f32.gmra.mrb[0].mxu0 %v160
  %v685 = vpop.f32.mrb[0].mxu0
  %v686 = vadd.f32 0.0, %v685
  %v687 = vpop.f32.mrb[0].mxu0
  %688 = vmatprep.mubr.f32.mxu0 %v339
  %689 = vmatmul.mubr.f32.gmra.mrb[0].mxu0 %v162
  %v690 = vpop.f32.mrb[0].mxu0
  %v691 = vadd.f32 0.0, %v690
  %v692 = vpop.f32.mrb[0].mxu0
  %693 = vmatprep.mubr.f32.mxu0 %v342
  %694 = vmatmul.mubr.f32.gmra.mrb[0].mxu0 %v164
  %v695 = vpop.f32.mrb[0].mxu0
  %v696 = vadd.f32 0.0, %v695
  %v697 = vpop.f32.mrb[0].mxu0
  %698 = vmatprep.mubr.f32.mxu0 %v345
  %699 = vmatmul.mubr.f32.gmra.mrb[0].mxu0 %v166
  %v700 = vpop.f32.mrb[0].mxu0
  %v701 = vadd.f32 0.0, %v700
  %v702 = vpop.f32.mrb[0].mxu0
  %703 = vmatprep.mubr.f32.mxu0 %v348
  %704 = vmatmul.mubr.f32.gmra.mrb[0].mxu0 %v168
  %v705 = vpop.f32.mrb[0].mxu0
  %v706 = vadd.f32 0.0, %v705
  %v707 = vpop.f32.mrb[0].mxu0
  %708 = vmatprep.mubr.f32.mxu0 %v351
  %709 = vmatmul.mubr.f32.gmra.mrb[0].mxu0 %v170
  %v710 = vpop.f32.mrb[0].mxu0
  %v711 = vadd.f32 0.0, %v710
  %v712 = vpop.f32.mrb[0].mxu0
  %713 = vmatprep.mubr.f32.mxu0 %v354
  %714 = vmatmul.mubr.f32.gmra.mrb[0].mxu0 %v172
  %v715 = vpop.f32.mrb[0].mxu0
  %v716 = vadd.f32 0.0, %v715
  %v717 = vpop.f32.mrb[0].mxu0
  %718 = vmatprep.mubr.f32.mxu0 %v357
  %719 = vmatmul.mubr.f32.gmra.mrb[0].mxu0 %v174
  %v720 = vpop.f32.mrb[0].mxu0
  %v721 = vadd.f32 0.0, %v720
  %v722 = vpop.f32.mrb[0].mxu0
  %723 = vmatprep.mubr.f32.mxu0 %v360
  %724 = vmatmul.mubr.f32.gmra.mrb[0].mxu0 %v176
  %v725 = vpop.f32.mrb[0].mxu0
  %v726 = vadd.f32 0.0, %v725
  %v727 = vpop.f32.mrb[0].mxu0
  %728 = vmatprep.mubr.f32.mxu0 %v363
  %729 = vmatmul.mubr.f32.gmra.mrb[0].mxu0 %v178
  %v730 = vpop.f32.mrb[0].mxu0
  %v731 = vadd.f32 0.0, %v730
  %v732 = vpop.f32.mrb[0].mxu0
  %733 = vmatprep.mubr.f32.mxu0 %v366
  %734 = vmatmul.mubr.f32.gmra.mrb[0].mxu0 %v180
  %v735 = vpop.f32.mrb[0].mxu0
  %v736 = vadd.f32 0.0, %v735
  %v737 = vpop.f32.mrb[0].mxu0
  %738 = vmatprep.mubr.f32.mxu0 %v369
  %739 = vmatmul.mubr.f32.gmra.mrb[0].mxu0 %v182
  %v740 = vpop.f32.mrb[0].mxu0
  %v741 = vadd.f32 0.0, %v740
  %v742 = vpop.f32.mrb[0].mxu0
  %743 = vmatprep.mubr.f32.mxu0 %v372
  %744 = vmatmul.mubr.f32.gmra.mrb[0].mxu0 %v184
  %v745 = vpop.f32.mrb[0].mxu0
  %v746 = vadd.f32 0.0, %v745
  %v747 = vpop.f32.mrb[0].mxu0
  %748 = vmatprep.mubr.f32.mxu0 %v375
  %749 = vmatmul.mubr.f32.gmra.mrb[0].mxu0 %v186
  %v750 = vpop.f32.mrb[0].mxu0
  %v751 = vadd.f32 0.0, %v750
  %v752 = vpop.f32.mrb[0].mxu0
  %753 = vmatprep.mubr.f32.mxu0 %v378
  %754 = vmatmul.mubr.f32.gmra.mrb[0].mxu0 %v188
  %v755 = vpop.f32.mrb[0].mxu0
  %v756 = vadd.f32 0.0, %v755
  %v757 = vpop.f32.mrb[0].mxu0
  %758 = vmatprep.mubr.f32.mxu0 %v381
  %759 = vmatmul.mubr.f32.gmra.mrb[0].mxu0 %v190
  %v760 = vpop.f32.mrb[0].mxu0
  %v761 = vadd.f32 0.0, %v760
  %v762 = vpop.f32.mrb[0].mxu0
  %763 = vmatprep.mubr.f32.mxu0 %v384
  %764 = vmatmul.mubr.f32.gmra.mrb[0].mxu0 %v192
  %v765 = vpop.f32.mrb[0].mxu0
  %v766 = vadd.f32 0.0, %v765
  %v767 = vpop.f32.mrb[0].mxu0
  %768 = vmatprep.mubr.f32.mxu0 %v387
  %769 = vmatmul.mubr.f32.gmra.mrb[0].mxu0 %v194
  %v770 = vpop.f32.mrb[0].mxu0
  %v771 = vadd.f32 0.0, %v770
  %v772 = vpop.f32.mrb[0].mxu0
  %773 = vdwg.mxu0
  %v774 = vld [vmem:[%s2] sm:$0xff]
  %v775 = vld [vmem:[%s2 + $0x8] sm:$0xff]
  %v776 = vld [vmem:[%s2 + $0x10] sm:$0xff]
  %v777 = vld [vmem:[%s2 + $0x18] sm:$0xff]
  %v778 = vld [vmem:[%s2 + $0x20] sm:$0xff]
  %v779 = vld [vmem:[%s2 + $0x28] sm:$0xff]
  %v780 = vld [vmem:[%s2 + $0x30] sm:$0xff]
  %v781 = vld [vmem:[%s2 + $0x38] sm:$0xff]
  %v782 = vld [vmem:[%s2 + $0x40] sm:$0xff]
  %v783 = vld [vmem:[%s2 + $0x48] sm:$0xff]
  %v784 = vld [vmem:[%s2 + $0x50] sm:$0xff]
  %v785 = vld [vmem:[%s2 + $0x58] sm:$0xff]
  %v786 = vld [vmem:[%s2 + $0x60] sm:$0xff]
  %v787 = vld [vmem:[%s2 + $0x68] sm:$0xff]
  %v788 = vld [vmem:[%s2 + $0x70] sm:$0xff]
  %v789 = vld [vmem:[%s2 + $0x78] sm:$0xff]
  %s790 = scalar_lea.vmem %s2, 128
  %v791 = vld [vmem:[%s790] sm:$0xff]
  %v792 = vld [vmem:[%s790 + $0x8] sm:$0xff]
  %v793 = vld [vmem:[%s790 + $0x10] sm:$0xff]
  %v794 = vld [vmem:[%s790 + $0x18] sm:$0xff]
  %v795 = vld [vmem:[%s790 + $0x20] sm:$0xff]
  %v796 = vld [vmem:[%s790 + $0x28] sm:$0xff]
  %v797 = vld [vmem:[%s790 + $0x30] sm:$0xff]
  %v798 = vld [vmem:[%s790 + $0x38] sm:$0xff]
  %v799 = vld [vmem:[%s790 + $0x40] sm:$0xff]
  %v800 = vld [vmem:[%s790 + $0x48] sm:$0xff]
  %v801 = vld [vmem:[%s790 + $0x50] sm:$0xff]
  %v802 = vld [vmem:[%s790 + $0x58] sm:$0xff]
  %v803 = vld [vmem:[%s790 + $0x60] sm:$0xff]
  %v804 = vld [vmem:[%s790 + $0x68] sm:$0xff]
  %v805 = vld [vmem:[%s790 + $0x70] sm:$0xff]
  %v806 = vld [vmem:[%s790 + $0x78] sm:$0xff]
  %807 = vmatprep.subr.mxu0 0.0
  %808 = vmatpush1.msra.mxu0 %v791
  %809 = vmatprep.subr.mxu0 0.0
  %810 = vmatpush1.msra.mxu0 %v792
  %811 = vmatprep.subr.mxu0 0.0
  %812 = vmatpush1.msra.mxu0 %v793
  %813 = vmatprep.subr.mxu0 0.0
  %814 = vmatpush1.msra.mxu0 %v794
  %815 = vmatprep.subr.mxu0 0.0
  %816 = vmatpush1.msra.mxu0 %v795
  %817 = vmatprep.subr.mxu0 0.0
  %818 = vmatpush1.msra.mxu0 %v796
  %819 = vmatprep.subr.mxu0 0.0
  %820 = vmatpush1.msra.mxu0 %v797
  %821 = vmatprep.subr.mxu0 0.0
  %822 = vmatpush1.msra.mxu0 %v798
  %823 = vmatprep.subr.mxu0 0.0
  %824 = vmatpush1.msra.mxu0 %v799
  %825 = vmatprep.subr.mxu0 0.0
  %826 = vmatpush1.msra.mxu0 %v800
  %827 = vmatprep.subr.mxu0 0.0
  %828 = vmatpush1.msra.mxu0 %v801
  %829 = vmatprep.subr.mxu0 0.0
  %830 = vmatpush1.msra.mxu0 %v802
  %831 = vmatprep.subr.mxu0 0.0
  %832 = vmatpush1.msra.mxu0 %v803
  %833 = vmatprep.subr.mxu0 0.0
  %834 = vmatpush1.msra.mxu0 %v804
  %835 = vmatprep.subr.mxu0 0.0
  %836 = vmatpush1.msra.mxu0 %v805
  %837 = vmatprep.subr.mxu0 0.0
  %838 = vmatpush1.msra.mxu0 %v806
  %839 = vmatprep.subr.mxu0 0.0
  %840 = vmatpush1.msra.mxu0 0.0
  %841 = vmatprep.subr.mxu0 0.0
  %842 = vmatpush1.msra.mxu0 0.0
  %843 = vmatprep.subr.mxu0 0.0
  %844 = vmatpush1.msra.mxu0 0.0
  %845 = vmatprep.subr.mxu0 0.0
  %846 = vmatpush1.msra.mxu0 0.0
  %847 = vmatprep.subr.mxu0 0.0
  %848 = vmatpush1.msra.mxu0 0.0
  %849 = vmatprep.subr.mxu0 0.0
  %850 = vmatpush1.msra.mxu0 0.0
  %851 = vmatprep.subr.mxu0 0.0
  %852 = vmatpush1.msra.mxu0 0.0
  %853 = vmatprep.subr.mxu0 0.0
  %854 = vmatpush1.msra.mxu0 0.0
  %855 = vmatprep.subr.mxu0 0.0
  %856 = vmatpush1.msra.mxu0 0.0
  %857 = vmatprep.subr.mxu0 0.0
  %858 = vmatpush1.msra.mxu0 0.0
  %859 = vmatprep.subr.mxu0 0.0
  %860 = vmatpush1.msra.mxu0 0.0
  %861 = vmatprep.subr.mxu0 0.0
  %862 = vmatpush1.msra.mxu0 0.0
  %863 = vmatprep.subr.mxu0 0.0
  %864 = vmatpush1.msra.mxu0 0.0
  %865 = vmatprep.subr.mxu0 0.0
  %866 = vmatpush1.msra.mxu0 0.0
  %867 = vmatprep.subr.mxu0 0.0
  %868 = vmatpush1.msra.mxu0 0.0
  %869 = vmatprep.subr.mxu0 0.0
  %870 = vmatpush1.msra.mxu0 0.0
  %871 = vmatprep.mubr.f32.mxu0 0.0
  %872 = vmatmul.mubr.f32.gmra.mrb[0].mxu0 %v536
  %v873 = vpop.f32.mrb[0].mxu0
  %v874 = vadd.f32 0.0, %v873
  %v875 = vpop.f32.mrb[0].mxu0
  %876 = vmatprep.mubr.f32.mxu0 0.0
  %877 = vmatmul.mubr.f32.gmra.mrb[0].mxu0 %v541
  %v878 = vpop.f32.mrb[0].mxu0
  %v879 = vadd.f32 0.0, %v878
  %v880 = vpop.f32.mrb[0].mxu0
  %881 = vmatprep.mubr.f32.mxu0 0.0
  %882 = vmatmul.mubr.f32.gmra.mrb[0].mxu0 %v546
  %v883 = vpop.f32.mrb[0].mxu0
  %v884 = vadd.f32 0.0, %v883
  %v885 = vpop.f32.mrb[0].mxu0
  %886 = vmatprep.mubr.f32.mxu0 0.0
  %887 = vmatmul.mubr.f32.gmra.mrb[0].mxu0 %v551
  %v888 = vpop.f32.mrb[0].mxu0
  %v889 = vadd.f32 0.0, %v888
  %v890 = vpop.f32.mrb[0].mxu0
  %891 = vmatprep.mubr.f32.mxu0 0.0
  %892 = vmatmul.mubr.f32.gmra.mrb[0].mxu0 %v556
  %v893 = vpop.f32.mrb[0].mxu0
  %v894 = vadd.f32 0.0, %v893
  %v895 = vpop.f32.mrb[0].mxu0
  %896 = vmatprep.mubr.f32.mxu0 0.0
  %897 = vmatmul.mubr.f32.gmra.mrb[0].mxu0 %v561
  %v898 = vpop.f32.mrb[0].mxu0
  %v899 = vadd.f32 0.0, %v898
  %v900 = vpop.f32.mrb[0].mxu0
  %901 = vmatprep.mubr.f32.mxu0 0.0
  %902 = vmatmul.mubr.f32.gmra.mrb[0].mxu0 %v566
  %v903 = vpop.f32.mrb[0].mxu0
  %v904 = vadd.f32 0.0, %v903
  %v905 = vpop.f32.mrb[0].mxu0
  %906 = vmatprep.mubr.f32.mxu0 0.0
  %907 = vmatmul.mubr.f32.gmra.mrb[0].mxu0 %v571
  %v908 = vpop.f32.mrb[0].mxu0
  %v909 = vadd.f32 0.0, %v908
  %v910 = vpop.f32.mrb[0].mxu0
  %911 = vmatprep.mubr.f32.mxu0 0.0
  %912 = vmatmul.mubr.f32.gmra.mrb[0].mxu0 %v576
  %v913 = vpop.f32.mrb[0].mxu0
  %v914 = vadd.f32 0.0, %v913
  %v915 = vpop.f32.mrb[0].mxu0
  %916 = vmatprep.mubr.f32.mxu0 0.0
  %917 = vmatmul.mubr.f32.gmra.mrb[0].mxu0 %v581
  %v918 = vpop.f32.mrb[0].mxu0
  %v919 = vadd.f32 0.0, %v918
  %v920 = vpop.f32.mrb[0].mxu0
  %921 = vmatprep.mubr.f32.mxu0 0.0
  %922 = vmatmul.mubr.f32.gmra.mrb[0].mxu0 %v586
  %v923 = vpop.f32.mrb[0].mxu0
  %v924 = vadd.f32 0.0, %v923
  %v925 = vpop.f32.mrb[0].mxu0
  %926 = vmatprep.mubr.f32.mxu0 0.0
  %927 = vmatmul.mubr.f32.gmra.mrb[0].mxu0 %v591
  %v928 = vpop.f32.mrb[0].mxu0
  %v929 = vadd.f32 0.0, %v928
  %v930 = vpop.f32.mrb[0].mxu0
  %931 = vmatprep.mubr.f32.mxu0 0.0
  %932 = vmatmul.mubr.f32.gmra.mrb[0].mxu0 %v596
  %v933 = vpop.f32.mrb[0].mxu0
  %v934 = vadd.f32 0.0, %v933
  %v935 = vpop.f32.mrb[0].mxu0
  %936 = vmatprep.mubr.f32.mxu0 0.0
  %937 = vmatmul.mubr.f32.gmra.mrb[0].mxu0 %v601
  %v938 = vpop.f32.mrb[0].mxu0
  %v939 = vadd.f32 0.0, %v938
  %v940 = vpop.f32.mrb[0].mxu0
  %941 = vmatprep.mubr.f32.mxu0 0.0
  %942 = vmatmul.mubr.f32.gmra.mrb[0].mxu0 %v606
  %v943 = vpop.f32.mrb[0].mxu0
  %v944 = vadd.f32 0.0, %v943
  %v945 = vpop.f32.mrb[0].mxu0
  %946 = vmatprep.mubr.f32.mxu0 0.0
  %947 = vmatmul.mubr.f32.gmra.mrb[0].mxu0 %v611
  %v948 = vpop.f32.mrb[0].mxu0
  %v949 = vadd.f32 0.0, %v948
  %v950 = vpop.f32.mrb[0].mxu0
  %951 = vdwg.mxu0
  %952 = vmatprep.subr.mxu0 0.0
  %953 = vmatpush1.msra.mxu0 %v774
  %954 = vmatprep.subr.mxu0 0.0
  %955 = vmatpush1.msra.mxu0 %v775
  %956 = vmatprep.subr.mxu0 0.0
  %957 = vmatpush1.msra.mxu0 %v776
  %958 = vmatprep.subr.mxu0 0.0
  %959 = vmatpush1.msra.mxu0 %v777
  %960 = vmatprep.subr.mxu0 0.0
  %961 = vmatpush1.msra.mxu0 %v778
  %962 = vmatprep.subr.mxu0 0.0
  %963 = vmatpush1.msra.mxu0 %v779
  %964 = vmatprep.subr.mxu0 0.0
  %965 = vmatpush1.msra.mxu0 %v780
  %966 = vmatprep.subr.mxu0 0.0
  %967 = vmatpush1.msra.mxu0 %v781
  %968 = vmatprep.subr.mxu0 0.0
  %969 = vmatpush1.msra.mxu0 %v782
  %970 = vmatprep.subr.mxu0 0.0
  %971 = vmatpush1.msra.mxu0 %v783
  %972 = vmatprep.subr.mxu0 0.0
  %973 = vmatpush1.msra.mxu0 %v784
  %974 = vmatprep.subr.mxu0 0.0
  %975 = vmatpush1.msra.mxu0 %v785
  %976 = vmatprep.subr.mxu0 0.0
  %977 = vmatpush1.msra.mxu0 %v786
  %978 = vmatprep.subr.mxu0 0.0
  %979 = vmatpush1.msra.mxu0 %v787
  %980 = vmatprep.subr.mxu0 0.0
  %981 = vmatpush1.msra.mxu0 %v788
  %982 = vmatprep.subr.mxu0 0.0
  %983 = vmatpush1.msra.mxu0 %v789
  %984 = vmatprep.subr.mxu0 0.0
  %985 = vmatpush1.msra.mxu0 0.0
  %986 = vmatprep.subr.mxu0 0.0
  %987 = vmatpush1.msra.mxu0 0.0
  %988 = vmatprep.subr.mxu0 0.0
  %989 = vmatpush1.msra.mxu0 0.0
  %990 = vmatprep.subr.mxu0 0.0
  %991 = vmatpush1.msra.mxu0 0.0
  %992 = vmatprep.subr.mxu0 0.0
  %993 = vmatpush1.msra.mxu0 0.0
  %994 = vmatprep.subr.mxu0 0.0
  %995 = vmatpush1.msra.mxu0 0.0
  %996 = vmatprep.subr.mxu0 0.0
  %997 = vmatpush1.msra.mxu0 0.0
  %998 = vmatprep.subr.mxu0 0.0
  %999 = vmatpush1.msra.mxu0 0.0
  %1000 = vmatprep.subr.mxu0 0.0
  %1001 = vmatpush1.msra.mxu0 0.0
  %1002 = vmatprep.subr.mxu0 0.0
  %1003 = vmatpush1.msra.mxu0 0.0
  %1004 = vmatprep.subr.mxu0 0.0
  %1005 = vmatpush1.msra.mxu0 0.0
  %1006 = vmatprep.subr.mxu0 0.0
  %1007 = vmatpush1.msra.mxu0 0.0
  %1008 = vmatprep.subr.mxu0 0.0
  %1009 = vmatpush1.msra.mxu0 0.0
  %1010 = vmatprep.subr.mxu0 0.0
  %1011 = vmatpush1.msra.mxu0 0.0
  %1012 = vmatprep.subr.mxu0 0.0
  %1013 = vmatpush1.msra.mxu0 0.0
  %1014 = vmatprep.subr.mxu0 0.0
  %1015 = vmatpush1.msra.mxu0 0.0
  %1016 = vmatprep.mubr.f32.mxu0 0.0
  %1017 = vmatmul.mubr.f32.gmra.mrb[0].mxu0 %v456
  %v1018 = vpop.f32.mrb[0].mxu0
  %v1019 = vadd.f32 %v874, %v1018
  %v1020 = vpop.f32.mrb[0].mxu0
  %1021 = vmatprep.mubr.f32.mxu0 0.0
  %1022 = vmatmul.mubr.f32.gmra.mrb[0].mxu0 %v461
  %v1023 = vpop.f32.mrb[0].mxu0
  %v1024 = vadd.f32 %v879, %v1023
  %v1025 = vpop.f32.mrb[0].mxu0
  %1026 = vmatprep.mubr.f32.mxu0 0.0
  %1027 = vmatmul.mubr.f32.gmra.mrb[0].mxu0 %v466
  %v1028 = vpop.f32.mrb[0].mxu0
  %v1029 = vadd.f32 %v884, %v1028
  %v1030 = vpop.f32.mrb[0].mxu0
  %1031 = vmatprep.mubr.f32.mxu0 0.0
  %1032 = vmatmul.mubr.f32.gmra.mrb[0].mxu0 %v471
  %v1033 = vpop.f32.mrb[0].mxu0
  %v1034 = vadd.f32 %v889, %v1033
  %v1035 = vpop.f32.mrb[0].mxu0
  %1036 = vmatprep.mubr.f32.mxu0 0.0
  %1037 = vmatmul.mubr.f32.gmra.mrb[0].mxu0 %v476
  %v1038 = vpop.f32.mrb[0].mxu0
  %v1039 = vadd.f32 %v894, %v1038
  %v1040 = vpop.f32.mrb[0].mxu0
  %1041 = vmatprep.mubr.f32.mxu0 0.0
  %1042 = vmatmul.mubr.f32.gmra.mrb[0].mxu0 %v481
  %v1043 = vpop.f32.mrb[0].mxu0
  %v1044 = vadd.f32 %v899, %v1043
  %v1045 = vpop.f32.mrb[0].mxu0
  %1046 = vmatprep.mubr.f32.mxu0 0.0
  %1047 = vmatmul.mubr.f32.gmra.mrb[0].mxu0 %v486
  %v1048 = vpop.f32.mrb[0].mxu0
  %v1049 = vadd.f32 %v904, %v1048
  %v1050 = vpop.f32.mrb[0].mxu0
  %1051 = vmatprep.mubr.f32.mxu0 0.0
  %1052 = vmatmul.mubr.f32.gmra.mrb[0].mxu0 %v491
  %v1053 = vpop.f32.mrb[0].mxu0
  %v1054 = vadd.f32 %v909, %v1053
  %v1055 = vpop.f32.mrb[0].mxu0
  %1056 = vmatprep.mubr.f32.mxu0 0.0
  %1057 = vmatmul.mubr.f32.gmra.mrb[0].mxu0 %v496
  %v1058 = vpop.f32.mrb[0].mxu0
  %v1059 = vadd.f32 %v914, %v1058
  %v1060 = vpop.f32.mrb[0].mxu0
  %1061 = vmatprep.mubr.f32.mxu0 0.0
  %1062 = vmatmul.mubr.f32.gmra.mrb[0].mxu0 %v501
  %v1063 = vpop.f32.mrb[0].mxu0
  %v1064 = vadd.f32 %v919, %v1063
  %v1065 = vpop.f32.mrb[0].mxu0
  %1066 = vmatprep.mubr.f32.mxu0 0.0
  %1067 = vmatmul.mubr.f32.gmra.mrb[0].mxu0 %v506
  %v1068 = vpop.f32.mrb[0].mxu0
  %v1069 = vadd.f32 %v924, %v1068
  %v1070 = vpop.f32.mrb[0].mxu0
  %1071 = vmatprep.mubr.f32.mxu0 0.0
  %1072 = vmatmul.mubr.f32.gmra.mrb[0].mxu0 %v511
  %v1073 = vpop.f32.mrb[0].mxu0
  %v1074 = vadd.f32 %v929, %v1073
  %v1075 = vpop.f32.mrb[0].mxu0
  %1076 = vmatprep.mubr.f32.mxu0 0.0
  %1077 = vmatmul.mubr.f32.gmra.mrb[0].mxu0 %v516
  %v1078 = vpop.f32.mrb[0].mxu0
  %v1079 = vadd.f32 %v934, %v1078
  %v1080 = vpop.f32.mrb[0].mxu0
  %1081 = vmatprep.mubr.f32.mxu0 0.0
  %1082 = vmatmul.mubr.f32.gmra.mrb[0].mxu0 %v521
  %v1083 = vpop.f32.mrb[0].mxu0
  %v1084 = vadd.f32 %v939, %v1083
  %v1085 = vpop.f32.mrb[0].mxu0
  %1086 = vmatprep.mubr.f32.mxu0 0.0
  %1087 = vmatmul.mubr.f32.gmra.mrb[0].mxu0 %v526
  %v1088 = vpop.f32.mrb[0].mxu0
  %v1089 = vadd.f32 %v944, %v1088
  %v1090 = vpop.f32.mrb[0].mxu0
  %1091 = vmatprep.mubr.f32.mxu0 0.0
  %1092 = vmatmul.mubr.f32.gmra.mrb[0].mxu0 %v531
  %v1093 = vpop.f32.mrb[0].mxu0
  %v1094 = vadd.f32 %v949, %v1093
  %v1095 = vpop.f32.mrb[0].mxu0
  %1096 = vdwg.mxu0
  %s1097 = scalar_lea.vmem %s2, 256
  %v1098 = vld [vmem:[%s1097] sm:$0xff]
  %v1099 = vld [vmem:[%s1097 + $0x8] sm:$0xff]
  %v1100 = vld [vmem:[%s1097 + $0x10] sm:$0xff]
  %v1101 = vld [vmem:[%s1097 + $0x18] sm:$0xff]
  %v1102 = vld [vmem:[%s1097 + $0x20] sm:$0xff]
  %v1103 = vld [vmem:[%s1097 + $0x28] sm:$0xff]
  %v1104 = vld [vmem:[%s1097 + $0x30] sm:$0xff]
  %v1105 = vld [vmem:[%s1097 + $0x38] sm:$0xff]
  %v1106 = vld [vmem:[%s1097 + $0x40] sm:$0xff]
  %v1107 = vld [vmem:[%s1097 + $0x48] sm:$0xff]
  %v1108 = vld [vmem:[%s1097 + $0x50] sm:$0xff]
  %v1109 = vld [vmem:[%s1097 + $0x58] sm:$0xff]
  %v1110 = vld [vmem:[%s1097 + $0x60] sm:$0xff]
  %v1111 = vld [vmem:[%s1097 + $0x68] sm:$0xff]
  %v1112 = vld [vmem:[%s1097 + $0x70] sm:$0xff]
  %v1113 = vld [vmem:[%s1097 + $0x78] sm:$0xff]
  %1114 = vmatprep.subr.mxu0 0.0
  %1115 = vmatpush1.msra.mxu0 %v1098
  %1116 = vmatprep.subr.mxu0 0.0
  %1117 = vmatpush1.msra.mxu0 %v1099
  %1118 = vmatprep.subr.mxu0 0.0
  %1119 = vmatpush1.msra.mxu0 %v1100
  %1120 = vmatprep.subr.mxu0 0.0
  %1121 = vmatpush1.msra.mxu0 %v1101
  %1122 = vmatprep.subr.mxu0 0.0
  %1123 = vmatpush1.msra.mxu0 %v1102
  %1124 = vmatprep.subr.mxu0 0.0
  %1125 = vmatpush1.msra.mxu0 %v1103
  %1126 = vmatprep.subr.mxu0 0.0
  %1127 = vmatpush1.msra.mxu0 %v1104
  %1128 = vmatprep.subr.mxu0 0.0
  %1129 = vmatpush1.msra.mxu0 %v1105
  %1130 = vmatprep.subr.mxu0 0.0
  %1131 = vmatpush1.msra.mxu0 %v1106
  %1132 = vmatprep.subr.mxu0 0.0
  %1133 = vmatpush1.msra.mxu0 %v1107
  %1134 = vmatprep.subr.mxu0 0.0
  %1135 = vmatpush1.msra.mxu0 %v1108
  %1136 = vmatprep.subr.mxu0 0.0
  %1137 = vmatpush1.msra.mxu0 %v1109
  %1138 = vmatprep.subr.mxu0 0.0
  %1139 = vmatpush1.msra.mxu0 %v1110
  %1140 = vmatprep.subr.mxu0 0.0
  %1141 = vmatpush1.msra.mxu0 %v1111
  %1142 = vmatprep.subr.mxu0 0.0
  %1143 = vmatpush1.msra.mxu0 %v1112
  %1144 = vmatprep.subr.mxu0 0.0
  %1145 = vmatpush1.msra.mxu0 %v1113
  %1146 = vmatprep.subr.mxu0 0.0
  %1147 = vmatpush1.msra.mxu0 0.0
  %1148 = vmatprep.subr.mxu0 0.0
  %1149 = vmatpush1.msra.mxu0 0.0
  %1150 = vmatprep.subr.mxu0 0.0
  %1151 = vmatpush1.msra.mxu0 0.0
  %1152 = vmatprep.subr.mxu0 0.0
  %1153 = vmatpush1.msra.mxu0 0.0
  %1154 = vmatprep.subr.mxu0 0.0
  %1155 = vmatpush1.msra.mxu0 0.0
  %1156 = vmatprep.subr.mxu0 0.0
  %1157 = vmatpush1.msra.mxu0 0.0
  %1158 = vmatprep.subr.mxu0 0.0
  %1159 = vmatpush1.msra.mxu0 0.0
  %1160 = vmatprep.subr.mxu0 0.0
  %1161 = vmatpush1.msra.mxu0 0.0
  %1162 = vmatprep.subr.mxu0 0.0
  %1163 = vmatpush1.msra.mxu0 0.0
  %1164 = vmatprep.subr.mxu0 0.0
  %1165 = vmatpush1.msra.mxu0 0.0
  %1166 = vmatprep.subr.mxu0 0.0
  %1167 = vmatpush1.msra.mxu0 0.0
  %1168 = vmatprep.subr.mxu0 0.0
  %1169 = vmatpush1.msra.mxu0 0.0
  %1170 = vmatprep.subr.mxu0 0.0
  %1171 = vmatpush1.msra.mxu0 0.0
  %1172 = vmatprep.subr.mxu0 0.0
  %1173 = vmatpush1.msra.mxu0 0.0
  %1174 = vmatprep.subr.mxu0 0.0
  %1175 = vmatpush1.msra.mxu0 0.0
  %1176 = vmatprep.subr.mxu0 0.0
  %1177 = vmatpush1.msra.mxu0 0.0
  %1178 = vmatprep.mubr.f32.mxu0 0.0
  %1179 = vmatmul.mubr.f32.gmra.mrb[0].mxu0 %v616
  %v1180 = vpop.f32.mrb[0].mxu0
  %v1181 = vadd.f32 0.0, %v1180
  %v1182 = vpop.f32.mrb[0].mxu0
  %1183 = vmatprep.mubr.f32.mxu0 0.0
  %1184 = vmatmul.mubr.f32.gmra.mrb[0].mxu0 %v621
  %v1185 = vpop.f32.mrb[0].mxu0
  %v1186 = vadd.f32 0.0, %v1185
  %v1187 = vpop.f32.mrb[0].mxu0
  %1188 = vmatprep.mubr.f32.mxu0 0.0
  %1189 = vmatmul.mubr.f32.gmra.mrb[0].mxu0 %v626
  %v1190 = vpop.f32.mrb[0].mxu0
  %v1191 = vadd.f32 0.0, %v1190
  %v1192 = vpop.f32.mrb[0].mxu0
  %1193 = vmatprep.mubr.f32.mxu0 0.0
  %1194 = vmatmul.mubr.f32.gmra.mrb[0].mxu0 %v631
  %v1195 = vpop.f32.mrb[0].mxu0
  %v1196 = vadd.f32 0.0, %v1195
  %v1197 = vpop.f32.mrb[0].mxu0
  %1198 = vmatprep.mubr.f32.mxu0 0.0
  %1199 = vmatmul.mubr.f32.gmra.mrb[0].mxu0 %v636
  %v1200 = vpop.f32.mrb[0].mxu0
  %v1201 = vadd.f32 0.0, %v1200
  %v1202 = vpop.f32.mrb[0].mxu0
  %1203 = vmatprep.mubr.f32.mxu0 0.0
  %1204 = vmatmul.mubr.f32.gmra.mrb[0].mxu0 %v641
  %v1205 = vpop.f32.mrb[0].mxu0
  %v1206 = vadd.f32 0.0, %v1205
  %v1207 = vpop.f32.mrb[0].mxu0
  %1208 = vmatprep.mubr.f32.mxu0 0.0
  %1209 = vmatmul.mubr.f32.gmra.mrb[0].mxu0 %v646
  %v1210 = vpop.f32.mrb[0].mxu0
  %v1211 = vadd.f32 0.0, %v1210
  %v1212 = vpop.f32.mrb[0].mxu0
  %1213 = vmatprep.mubr.f32.mxu0 0.0
  %1214 = vmatmul.mubr.f32.gmra.mrb[0].mxu0 %v651
  %v1215 = vpop.f32.mrb[0].mxu0
  %v1216 = vadd.f32 0.0, %v1215
  %v1217 = vpop.f32.mrb[0].mxu0
  %1218 = vmatprep.mubr.f32.mxu0 0.0
  %1219 = vmatmul.mubr.f32.gmra.mrb[0].mxu0 %v656
  %v1220 = vpop.f32.mrb[0].mxu0
  %v1221 = vadd.f32 0.0, %v1220
  %v1222 = vpop.f32.mrb[0].mxu0
  %1223 = vmatprep.mubr.f32.mxu0 0.0
  %1224 = vmatmul.mubr.f32.gmra.mrb[0].mxu0 %v661
  %v1225 = vpop.f32.mrb[0].mxu0
  %v1226 = vadd.f32 0.0, %v1225
  %v1227 = vpop.f32.mrb[0].mxu0
  %1228 = vmatprep.mubr.f32.mxu0 0.0
  %1229 = vmatmul.mubr.f32.gmra.mrb[0].mxu0 %v666
  %v1230 = vpop.f32.mrb[0].mxu0
  %v1231 = vadd.f32 0.0, %v1230
  %v1232 = vpop.f32.mrb[0].mxu0
  %1233 = vmatprep.mubr.f32.mxu0 0.0
  %1234 = vmatmul.mubr.f32.gmra.mrb[0].mxu0 %v671
  %v1235 = vpop.f32.mrb[0].mxu0
  %v1236 = vadd.f32 0.0, %v1235
  %v1237 = vpop.f32.mrb[0].mxu0
  %1238 = vmatprep.mubr.f32.mxu0 0.0
  %1239 = vmatmul.mubr.f32.gmra.mrb[0].mxu0 %v676
  %v1240 = vpop.f32.mrb[0].mxu0
  %v1241 = vadd.f32 0.0, %v1240
  %v1242 = vpop.f32.mrb[0].mxu0
  %1243 = vmatprep.mubr.f32.mxu0 0.0
  %1244 = vmatmul.mubr.f32.gmra.mrb[0].mxu0 %v681
  %v1245 = vpop.f32.mrb[0].mxu0
  %v1246 = vadd.f32 0.0, %v1245
  %v1247 = vpop.f32.mrb[0].mxu0
  %1248 = vmatprep.mubr.f32.mxu0 0.0
  %1249 = vmatmul.mubr.f32.gmra.mrb[0].mxu0 %v686
  %v1250 = vpop.f32.mrb[0].mxu0
  %v1251 = vadd.f32 0.0, %v1250
  %v1252 = vpop.f32.mrb[0].mxu0
  %1253 = vmatprep.mubr.f32.mxu0 0.0
  %1254 = vmatmul.mubr.f32.gmra.mrb[0].mxu0 %v691
  %v1255 = vpop.f32.mrb[0].mxu0
  %v1256 = vadd.f32 0.0, %v1255
  %v1257 = vpop.f32.mrb[0].mxu0
  %1258 = vdwg.mxu0
  %v1259 = vadd.f32 %v1019, %v1181
  %v1260 = vadd.f32 %v1024, %v1186
  %v1261 = vadd.f32 %v1029, %v1191
  %v1262 = vadd.f32 %v1034, %v1196
  %v1263 = vadd.f32 %v1039, %v1201
  %v1264 = vadd.f32 %v1044, %v1206
  %v1265 = vadd.f32 %v1049, %v1211
  %v1266 = vadd.f32 %v1054, %v1216
  %v1267 = vadd.f32 %v1059, %v1221
  %v1268 = vadd.f32 %v1064, %v1226
  %v1269 = vadd.f32 %v1069, %v1231
  %v1270 = vadd.f32 %v1074, %v1236
  %v1271 = vadd.f32 %v1079, %v1241
  %v1272 = vadd.f32 %v1084, %v1246
  %v1273 = vadd.f32 %v1089, %v1251
  %v1274 = vadd.f32 %v1094, %v1256
  %s1275 = scalar_lea.vmem %s2, 384
  %v1276 = vld [vmem:[%s1275] sm:$0xff]
  %v1277 = vld [vmem:[%s1275 + $0x8] sm:$0xff]
  %v1278 = vld [vmem:[%s1275 + $0x10] sm:$0xff]
  %v1279 = vld [vmem:[%s1275 + $0x18] sm:$0xff]
  %v1280 = vld [vmem:[%s1275 + $0x20] sm:$0xff]
  %v1281 = vld [vmem:[%s1275 + $0x28] sm:$0xff]
  %v1282 = vld [vmem:[%s1275 + $0x30] sm:$0xff]
  %v1283 = vld [vmem:[%s1275 + $0x38] sm:$0xff]
  %v1284 = vld [vmem:[%s1275 + $0x40] sm:$0xff]
  %v1285 = vld [vmem:[%s1275 + $0x48] sm:$0xff]
  %v1286 = vld [vmem:[%s1275 + $0x50] sm:$0xff]
  %v1287 = vld [vmem:[%s1275 + $0x58] sm:$0xff]
  %v1288 = vld [vmem:[%s1275 + $0x60] sm:$0xff]
  %v1289 = vld [vmem:[%s1275 + $0x68] sm:$0xff]
  %v1290 = vld [vmem:[%s1275 + $0x70] sm:$0xff]
  %v1291 = vld [vmem:[%s1275 + $0x78] sm:$0xff]
  %1292 = vmatprep.subr.mxu0 0.0
  %1293 = vmatpush1.msra.mxu0 %v1276
  %1294 = vmatprep.subr.mxu0 0.0
  %1295 = vmatpush1.msra.mxu0 %v1277
  %1296 = vmatprep.subr.mxu0 0.0
  %1297 = vmatpush1.msra.mxu0 %v1278
  %1298 = vmatprep.subr.mxu0 0.0
  %1299 = vmatpush1.msra.mxu0 %v1279
  %1300 = vmatprep.subr.mxu0 0.0
  %1301 = vmatpush1.msra.mxu0 %v1280
  %1302 = vmatprep.subr.mxu0 0.0
  %1303 = vmatpush1.msra.mxu0 %v1281
  %1304 = vmatprep.subr.mxu0 0.0
  %1305 = vmatpush1.msra.mxu0 %v1282
  %1306 = vmatprep.subr.mxu0 0.0
  %1307 = vmatpush1.msra.mxu0 %v1283
  %1308 = vmatprep.subr.mxu0 0.0
  %1309 = vmatpush1.msra.mxu0 %v1284
  %1310 = vmatprep.subr.mxu0 0.0
  %1311 = vmatpush1.msra.mxu0 %v1285
  %1312 = vmatprep.subr.mxu0 0.0
  %1313 = vmatpush1.msra.mxu0 %v1286
  %1314 = vmatprep.subr.mxu0 0.0
  %1315 = vmatpush1.msra.mxu0 %v1287
  %1316 = vmatprep.subr.mxu0 0.0
  %1317 = vmatpush1.msra.mxu0 %v1288
  %1318 = vmatprep.subr.mxu0 0.0
  %1319 = vmatpush1.msra.mxu0 %v1289
  %1320 = vmatprep.subr.mxu0 0.0
  %1321 = vmatpush1.msra.mxu0 %v1290
  %1322 = vmatprep.subr.mxu0 0.0
  %1323 = vmatpush1.msra.mxu0 %v1291
  %1324 = vmatprep.subr.mxu0 0.0
  %1325 = vmatpush1.msra.mxu0 0.0
  %1326 = vmatprep.subr.mxu0 0.0
  %1327 = vmatpush1.msra.mxu0 0.0
  %1328 = vmatprep.subr.mxu0 0.0
  %1329 = vmatpush1.msra.mxu0 0.0
  %1330 = vmatprep.subr.mxu0 0.0
  %1331 = vmatpush1.msra.mxu0 0.0
  %1332 = vmatprep.subr.mxu0 0.0
  %1333 = vmatpush1.msra.mxu0 0.0
  %1334 = vmatprep.subr.mxu0 0.0
  %1335 = vmatpush1.msra.mxu0 0.0
  %1336 = vmatprep.subr.mxu0 0.0
  %1337 = vmatpush1.msra.mxu0 0.0
  %1338 = vmatprep.subr.mxu0 0.0
  %1339 = vmatpush1.msra.mxu0 0.0
  %1340 = vmatprep.subr.mxu0 0.0
  %1341 = vmatpush1.msra.mxu0 0.0
  %1342 = vmatprep.subr.mxu0 0.0
  %1343 = vmatpush1.msra.mxu0 0.0
  %1344 = vmatprep.subr.mxu0 0.0
  %1345 = vmatpush1.msra.mxu0 0.0
  %1346 = vmatprep.subr.mxu0 0.0
  %1347 = vmatpush1.msra.mxu0 0.0
  %1348 = vmatprep.subr.mxu0 0.0
  %1349 = vmatpush1.msra.mxu0 0.0
  %1350 = vmatprep.subr.mxu0 0.0
  %1351 = vmatpush1.msra.mxu0 0.0
  %1352 = vmatprep.subr.mxu0 0.0
  %1353 = vmatpush1.msra.mxu0 0.0
  %1354 = vmatprep.subr.mxu0 0.0
  %1355 = vmatpush1.msra.mxu0 0.0
  %1356 = vmatprep.mubr.f32.mxu0 0.0
  %1357 = vmatmul.mubr.f32.gmra.mrb[0].mxu0 %v696
  %v1358 = vpop.f32.mrb[0].mxu0
  %v1359 = vadd.f32 0.0, %v1358
  %v1360 = vpop.f32.mrb[0].mxu0
  %1361 = vmatprep.mubr.f32.mxu0 0.0
  %1362 = vmatmul.mubr.f32.gmra.mrb[0].mxu0 %v701
  %v1363 = vpop.f32.mrb[0].mxu0
  %v1364 = vadd.f32 0.0, %v1363
  %v1365 = vpop.f32.mrb[0].mxu0
  %1366 = vmatprep.mubr.f32.mxu0 0.0
  %1367 = vmatmul.mubr.f32.gmra.mrb[0].mxu0 %v706
  %v1368 = vpop.f32.mrb[0].mxu0
  %v1369 = vadd.f32 0.0, %v1368
  %v1370 = vpop.f32.mrb[0].mxu0
  %1371 = vmatprep.mubr.f32.mxu0 0.0
  %1372 = vmatmul.mubr.f32.gmra.mrb[0].mxu0 %v711
  %v1373 = vpop.f32.mrb[0].mxu0
  %v1374 = vadd.f32 0.0, %v1373
  %v1375 = vpop.f32.mrb[0].mxu0
  %1376 = vmatprep.mubr.f32.mxu0 0.0
  %1377 = vmatmul.mubr.f32.gmra.mrb[0].mxu0 %v716
  %v1378 = vpop.f32.mrb[0].mxu0
  %v1379 = vadd.f32 0.0, %v1378
  %v1380 = vpop.f32.mrb[0].mxu0
  %1381 = vmatprep.mubr.f32.mxu0 0.0
  %1382 = vmatmul.mubr.f32.gmra.mrb[0].mxu0 %v721
  %v1383 = vpop.f32.mrb[0].mxu0
  %v1384 = vadd.f32 0.0, %v1383
  %v1385 = vpop.f32.mrb[0].mxu0
  %1386 = vmatprep.mubr.f32.mxu0 0.0
  %1387 = vmatmul.mubr.f32.gmra.mrb[0].mxu0 %v726
  %v1388 = vpop.f32.mrb[0].mxu0
  %v1389 = vadd.f32 0.0, %v1388
  %v1390 = vpop.f32.mrb[0].mxu0
  %1391 = vmatprep.mubr.f32.mxu0 0.0
  %1392 = vmatmul.mubr.f32.gmra.mrb[0].mxu0 %v731
  %v1393 = vpop.f32.mrb[0].mxu0
  %v1394 = vadd.f32 0.0, %v1393
  %v1395 = vpop.f32.mrb[0].mxu0
  %1396 = vmatprep.mubr.f32.mxu0 0.0
  %1397 = vmatmul.mubr.f32.gmra.mrb[0].mxu0 %v736
  %v1398 = vpop.f32.mrb[0].mxu0
  %v1399 = vadd.f32 0.0, %v1398
  %v1400 = vpop.f32.mrb[0].mxu0
  %1401 = vmatprep.mubr.f32.mxu0 0.0
  %1402 = vmatmul.mubr.f32.gmra.mrb[0].mxu0 %v741
  %v1403 = vpop.f32.mrb[0].mxu0
  %v1404 = vadd.f32 0.0, %v1403
  %v1405 = vpop.f32.mrb[0].mxu0
  %1406 = vmatprep.mubr.f32.mxu0 0.0
  %1407 = vmatmul.mubr.f32.gmra.mrb[0].mxu0 %v746
  %v1408 = vpop.f32.mrb[0].mxu0
  %v1409 = vadd.f32 0.0, %v1408
  %v1410 = vpop.f32.mrb[0].mxu0
  %1411 = vmatprep.mubr.f32.mxu0 0.0
  %1412 = vmatmul.mubr.f32.gmra.mrb[0].mxu0 %v751
  %v1413 = vpop.f32.mrb[0].mxu0
  %v1414 = vadd.f32 0.0, %v1413
  %v1415 = vpop.f32.mrb[0].mxu0
  %1416 = vmatprep.mubr.f32.mxu0 0.0
  %1417 = vmatmul.mubr.f32.gmra.mrb[0].mxu0 %v756
  %v1418 = vpop.f32.mrb[0].mxu0
  %v1419 = vadd.f32 0.0, %v1418
  %v1420 = vpop.f32.mrb[0].mxu0
  %1421 = vmatprep.mubr.f32.mxu0 0.0
  %1422 = vmatmul.mubr.f32.gmra.mrb[0].mxu0 %v761
  %v1423 = vpop.f32.mrb[0].mxu0
  %v1424 = vadd.f32 0.0, %v1423
  %v1425 = vpop.f32.mrb[0].mxu0
  %1426 = vmatprep.mubr.f32.mxu0 0.0
  %1427 = vmatmul.mubr.f32.gmra.mrb[0].mxu0 %v766
  %v1428 = vpop.f32.mrb[0].mxu0
  %v1429 = vadd.f32 0.0, %v1428
  %v1430 = vpop.f32.mrb[0].mxu0
  %1431 = vmatprep.mubr.f32.mxu0 0.0
  %1432 = vmatmul.mubr.f32.gmra.mrb[0].mxu0 %v771
  %v1433 = vpop.f32.mrb[0].mxu0
  %v1434 = vadd.f32 0.0, %v1433
  %v1435 = vpop.f32.mrb[0].mxu0
  %1436 = vdwg.mxu0
  %v1437 = vadd.f32 %v1259, %v1359
  %v1438 = vadd.f32 %v1260, %v1364
  %v1439 = vadd.f32 %v1261, %v1369
  %v1440 = vadd.f32 %v1262, %v1374
  %v1441 = vadd.f32 %v1263, %v1379
  %v1442 = vadd.f32 %v1264, %v1384
  %v1443 = vadd.f32 %v1265, %v1389
  %v1444 = vadd.f32 %v1266, %v1394
  %v1445 = vadd.f32 %v1267, %v1399
  %v1446 = vadd.f32 %v1268, %v1404
  %v1447 = vadd.f32 %v1269, %v1409
  %v1448 = vadd.f32 %v1270, %v1414
  %v1449 = vadd.f32 %v1271, %v1419
  %v1450 = vadd.f32 %v1272, %v1424
  %v1451 = vadd.f32 %v1273, %v1429
  %v1452 = vadd.f32 %v1274, %v1434
  %v1453 = vld [vmem:[%s3] sm:$0x1]
  %v1455 = vlaneseq
  %v1456 = vshrl.u32 %v1455, 7
  %v1457 = vsub.s32 0, %v1456
  %v1458 = vrot.slane %v1453, %v1457
  %v1460 = vadd.f32 %v1437, %v1458
  %v1461 = vadd.f32 %v1438, %v1458
  %v1462 = vadd.f32 %v1439, %v1458
  %v1463 = vadd.f32 %v1440, %v1458
  %v1464 = vadd.f32 %v1441, %v1458
  %v1465 = vadd.f32 %v1442, %v1458
  %v1466 = vadd.f32 %v1443, %v1458
  %v1467 = vadd.f32 %v1444, %v1458
  %v1468 = vadd.f32 %v1445, %v1458
  %v1469 = vadd.f32 %v1446, %v1458
  %v1470 = vadd.f32 %v1447, %v1458
  %v1471 = vadd.f32 %v1448, %v1458
  %v1472 = vadd.f32 %v1449, %v1458
  %v1473 = vadd.f32 %v1450, %v1458
  %v1474 = vadd.f32 %v1451, %v1458
  %v1475 = vadd.f32 %v1452, %v1458
  %v1476 = vxor.u32 %v1460, 2147483648
  %v1477 = vxor.u32 %v1461, 2147483648
  %v1478 = vxor.u32 %v1462, 2147483648
  %v1479 = vxor.u32 %v1463, 2147483648
  %v1480 = vxor.u32 %v1464, 2147483648
  %v1481 = vxor.u32 %v1465, 2147483648
  %v1482 = vxor.u32 %v1466, 2147483648
  %v1483 = vxor.u32 %v1467, 2147483648
  %v1484 = vxor.u32 %v1468, 2147483648
  %v1485 = vxor.u32 %v1469, 2147483648
  %v1486 = vxor.u32 %v1470, 2147483648
  %v1487 = vxor.u32 %v1471, 2147483648
  %v1488 = vxor.u32 %v1472, 2147483648
  %v1489 = vxor.u32 %v1473, 2147483648
  %v1490 = vxor.u32 %v1474, 2147483648
  %v1491 = vxor.u32 %v1475, 2147483648
  %v1492 = vmul.f32 %v1476, 1.442695
  %v1493 = vpow.pop %v1492
  %v1494 = vmul.f32 %v1477, 1.442695
  %v1495 = vpow.pop %v1494
  %v1496 = vmul.f32 %v1478, 1.442695
  %v1497 = vpow.pop %v1496
  %v1498 = vmul.f32 %v1479, 1.442695
  %v1499 = vpow.pop %v1498
  %v1500 = vmul.f32 %v1480, 1.442695
  %v1501 = vpow.pop %v1500
  %v1502 = vmul.f32 %v1481, 1.442695
  %v1503 = vpow.pop %v1502
  %v1504 = vmul.f32 %v1482, 1.442695
  %v1505 = vpow.pop %v1504
  %v1506 = vmul.f32 %v1483, 1.442695
  %v1507 = vpow.pop %v1506
  %v1508 = vmul.f32 %v1484, 1.442695
  %v1509 = vpow.pop %v1508
  %v1510 = vmul.f32 %v1485, 1.442695
  %v1511 = vpow.pop %v1510
  %v1512 = vmul.f32 %v1486, 1.442695
  %v1513 = vpow.pop %v1512
  %v1514 = vmul.f32 %v1487, 1.442695
  %v1515 = vpow.pop %v1514
  %v1516 = vmul.f32 %v1488, 1.442695
  %v1517 = vpow.pop %v1516
  %v1518 = vmul.f32 %v1489, 1.442695
  %v1519 = vpow.pop %v1518
  %v1520 = vmul.f32 %v1490, 1.442695
  %v1521 = vpow.pop %v1520
  %v1522 = vmul.f32 %v1491, 1.442695
  %v1523 = vpow.pop %v1522
  %v1524 = vadd.f32 %v1493, 1.0
  %v1525 = vadd.f32 %v1495, 1.0
  %v1526 = vadd.f32 %v1497, 1.0
  %v1527 = vadd.f32 %v1499, 1.0
  %v1528 = vadd.f32 %v1501, 1.0
  %v1529 = vadd.f32 %v1503, 1.0
  %v1530 = vadd.f32 %v1505, 1.0
  %v1531 = vadd.f32 %v1507, 1.0
  %v1532 = vadd.f32 %v1509, 1.0
  %v1533 = vadd.f32 %v1511, 1.0
  %v1534 = vadd.f32 %v1513, 1.0
  %v1535 = vadd.f32 %v1515, 1.0
  %v1536 = vadd.f32 %v1517, 1.0
  %v1537 = vadd.f32 %v1519, 1.0
  %v1538 = vadd.f32 %v1521, 1.0
  %v1539 = vadd.f32 %v1523, 1.0
  %v1540 = vrcp.pop %v1524
  %v1541 = vmul.f32 1.0, %v1540
  %v1542 = vrcp.pop %v1525
  %v1543 = vmul.f32 1.0, %v1542
  %v1544 = vrcp.pop %v1526
  %v1545 = vmul.f32 1.0, %v1544
  %v1546 = vrcp.pop %v1527
  %v1547 = vmul.f32 1.0, %v1546
  %v1548 = vrcp.pop %v1528
  %v1549 = vmul.f32 1.0, %v1548
  %v1550 = vrcp.pop %v1529
  %v1551 = vmul.f32 1.0, %v1550
  %v1552 = vrcp.pop %v1530
  %v1553 = vmul.f32 1.0, %v1552
  %v1554 = vrcp.pop %v1531
  %v1555 = vmul.f32 1.0, %v1554
  %v1556 = vrcp.pop %v1532
  %v1557 = vmul.f32 1.0, %v1556
  %v1558 = vrcp.pop %v1533
  %v1559 = vmul.f32 1.0, %v1558
  %v1560 = vrcp.pop %v1534
  %v1561 = vmul.f32 1.0, %v1560
  %v1562 = vrcp.pop %v1535
  %v1563 = vmul.f32 1.0, %v1562
  %v1564 = vrcp.pop %v1536
  %v1565 = vmul.f32 1.0, %v1564
  %v1566 = vrcp.pop %v1537
  %v1567 = vmul.f32 1.0, %v1566
  %v1568 = vrcp.pop %v1538
  %v1569 = vmul.f32 1.0, %v1568
  %v1570 = vrcp.pop %v1539
  %v1571 = vmul.f32 1.0, %v1570
  %v1572 = vmul.f32 %v1460, %v1541
  %v1573 = vmul.f32 %v1461, %v1543
  %v1574 = vmul.f32 %v1462, %v1545
  %v1575 = vmul.f32 %v1463, %v1547
  %v1576 = vmul.f32 %v1464, %v1549
  %v1577 = vmul.f32 %v1465, %v1551
  %v1578 = vmul.f32 %v1466, %v1553
  %v1579 = vmul.f32 %v1467, %v1555
  %v1580 = vmul.f32 %v1468, %v1557
  %v1581 = vmul.f32 %v1469, %v1559
  %v1582 = vmul.f32 %v1470, %v1561
  %v1583 = vmul.f32 %v1471, %v1563
  %v1584 = vmul.f32 %v1472, %v1565
  %v1585 = vmul.f32 %v1473, %v1567
  %v1586 = vmul.f32 %v1474, %v1569
  %v1587 = vmul.f32 %v1475, %v1571
  %v1588 = vld [vmem:[%s4] sm:$0xff]
  %v1589 = vld [vmem:[%s4 + $0x8] sm:$0xff]
  %v1590 = vld [vmem:[%s4 + $0x10] sm:$0xff]
  %v1591 = vld [vmem:[%s4 + $0x18] sm:$0xff]
  %v1592 = vld [vmem:[%s4 + $0x20] sm:$0xff]
  %v1593 = vld [vmem:[%s4 + $0x28] sm:$0xff]
  %v1594 = vld [vmem:[%s4 + $0x30] sm:$0xff]
  %v1595 = vld [vmem:[%s4 + $0x38] sm:$0xff]
  %v1596 = vld [vmem:[%s4 + $0x40] sm:$0xff]
  %v1597 = vld [vmem:[%s4 + $0x48] sm:$0xff]
  %v1598 = vld [vmem:[%s4 + $0x50] sm:$0xff]
  %v1599 = vld [vmem:[%s4 + $0x58] sm:$0xff]
  %v1600 = vld [vmem:[%s4 + $0x60] sm:$0xff]
  %v1601 = vld [vmem:[%s4 + $0x68] sm:$0xff]
  %v1602 = vld [vmem:[%s4 + $0x70] sm:$0xff]
  %v1603 = vld [vmem:[%s4 + $0x78] sm:$0xff]
  %v1604 = vld [vmem:[%s4 + $0x80] sm:$0xff]
  %v1605 = vld [vmem:[%s4 + $0x88] sm:$0xff]
  %v1606 = vld [vmem:[%s4 + $0x90] sm:$0xff]
  %v1607 = vld [vmem:[%s4 + $0x98] sm:$0xff]
  %v1608 = vld [vmem:[%s4 + $0xa0] sm:$0xff]
  %v1609 = vld [vmem:[%s4 + $0xa8] sm:$0xff]
  %v1610 = vld [vmem:[%s4 + $0xb0] sm:$0xff]
  %v1611 = vld [vmem:[%s4 + $0xb8] sm:$0xff]
  %v1612 = vld [vmem:[%s4 + $0xc0] sm:$0xff]
  %v1613 = vld [vmem:[%s4 + $0xc8] sm:$0xff]
  %v1614 = vld [vmem:[%s4 + $0xd0] sm:$0xff]
  %v1615 = vld [vmem:[%s4 + $0xd8] sm:$0xff]
  %v1616 = vld [vmem:[%s4 + $0xe0] sm:$0xff]
  %v1617 = vld [vmem:[%s4 + $0xe8] sm:$0xff]
  %v1618 = vld [vmem:[%s4 + $0xf0] sm:$0xff]
  %v1619 = vld [vmem:[%s4 + $0xf8] sm:$0xff]
  %v1620 = vld [vmem:[%s4 + $0x100] sm:$0xff]
  %v1621 = vld [vmem:[%s4 + $0x108] sm:$0xff]
  %v1622 = vld [vmem:[%s4 + $0x110] sm:$0xff]
  %v1623 = vld [vmem:[%s4 + $0x118] sm:$0xff]
  %v1624 = vld [vmem:[%s4 + $0x120] sm:$0xff]
  %v1625 = vld [vmem:[%s4 + $0x128] sm:$0xff]
  %v1626 = vld [vmem:[%s4 + $0x130] sm:$0xff]
  %v1627 = vld [vmem:[%s4 + $0x138] sm:$0xff]
  %v1628 = vld [vmem:[%s4 + $0x140] sm:$0xff]
  %v1629 = vld [vmem:[%s4 + $0x148] sm:$0xff]
  %v1630 = vld [vmem:[%s4 + $0x150] sm:$0xff]
  %v1631 = vld [vmem:[%s4 + $0x158] sm:$0xff]
  %v1632 = vld [vmem:[%s4 + $0x160] sm:$0xff]
  %v1633 = vld [vmem:[%s4 + $0x168] sm:$0xff]
  %v1634 = vld [vmem:[%s4 + $0x170] sm:$0xff]
  %v1635 = vld [vmem:[%s4 + $0x178] sm:$0xff]
  %1636 = vmatprep.subr.mxu0 0.0
  %1637 = vmatpush1.msra.mxu0 %v1572
  %1638 = vmatprep.subr.mxu0 0.0
  %1639 = vmatpush1.msra.mxu0 %v1573
  %1640 = vmatprep.subr.mxu0 0.0
  %1641 = vmatpush1.msra.mxu0 %v1574
  %1642 = vmatprep.subr.mxu0 0.0
  %1643 = vmatpush1.msra.mxu0 %v1575
  %1644 = vmatprep.subr.mxu0 0.0
  %1645 = vmatpush1.msra.mxu0 %v1576
  %1646 = vmatprep.subr.mxu0 0.0
  %1647 = vmatpush1.msra.mxu0 %v1577
  %1648 = vmatprep.subr.mxu0 0.0
  %1649 = vmatpush1.msra.mxu0 %v1578
  %1650 = vmatprep.subr.mxu0 0.0
  %1651 = vmatpush1.msra.mxu0 %v1579
  %1652 = vmatprep.subr.mxu0 0.0
  %1653 = vmatpush1.msra.mxu0 %v1580
  %1654 = vmatprep.subr.mxu0 0.0
  %1655 = vmatpush1.msra.mxu0 %v1581
  %1656 = vmatprep.subr.mxu0 0.0
  %1657 = vmatpush1.msra.mxu0 %v1582
  %1658 = vmatprep.subr.mxu0 0.0
  %1659 = vmatpush1.msra.mxu0 %v1583
  %1660 = vmatprep.subr.mxu0 0.0
  %1661 = vmatpush1.msra.mxu0 %v1584
  %1662 = vmatprep.subr.mxu0 0.0
  %1663 = vmatpush1.msra.mxu0 %v1585
  %1664 = vmatprep.subr.mxu0 0.0
  %1665 = vmatpush1.msra.mxu0 %v1586
  %1666 = vmatprep.subr.mxu0 0.0
  %1667 = vmatpush1.msra.mxu0 %v1587
  %1668 = vmatprep.subr.mxu0 0.0
  %1669 = vmatpush1.msra.mxu0 0.0
  %1670 = vmatprep.subr.mxu0 0.0
  %1671 = vmatpush1.msra.mxu0 0.0
  %1672 = vmatprep.subr.mxu0 0.0
  %1673 = vmatpush1.msra.mxu0 0.0
  %1674 = vmatprep.subr.mxu0 0.0
  %1675 = vmatpush1.msra.mxu0 0.0
  %1676 = vmatprep.subr.mxu0 0.0
  %1677 = vmatpush1.msra.mxu0 0.0
  %1678 = vmatprep.subr.mxu0 0.0
  %1679 = vmatpush1.msra.mxu0 0.0
  %1680 = vmatprep.subr.mxu0 0.0
  %1681 = vmatpush1.msra.mxu0 0.0
  %1682 = vmatprep.subr.mxu0 0.0
  %1683 = vmatpush1.msra.mxu0 0.0
  %1684 = vmatprep.subr.mxu0 0.0
  %1685 = vmatpush1.msra.mxu0 0.0
  %1686 = vmatprep.subr.mxu0 0.0
  %1687 = vmatpush1.msra.mxu0 0.0
  %1688 = vmatprep.subr.mxu0 0.0
  %1689 = vmatpush1.msra.mxu0 0.0
  %1690 = vmatprep.subr.mxu0 0.0
  %1691 = vmatpush1.msra.mxu0 0.0
  %1692 = vmatprep.subr.mxu0 0.0
  %1693 = vmatpush1.msra.mxu0 0.0
  %1694 = vmatprep.subr.mxu0 0.0
  %1695 = vmatpush1.msra.mxu0 0.0
  %1696 = vmatprep.subr.mxu0 0.0
  %1697 = vmatpush1.msra.mxu0 0.0
  %1698 = vmatprep.subr.mxu0 0.0
  %1699 = vmatpush1.msra.mxu0 0.0
  %1700 = vmatprep.mubr.f32.mxu0 0.0
  %1701 = vmatmul.mubr.f32.gmra.mrb[0].mxu0 %v1588
  %v1702 = vpop.f32.mrb[0].mxu0
  %v1703 = vadd.f32 0.0, %v1702
  %v1704 = vpop.f32.mrb[0].mxu0
  %1705 = vmatprep.mubr.f32.mxu0 0.0
  %1706 = vmatmul.mubr.f32.gmra.mrb[0].mxu0 %v1589
  %v1707 = vpop.f32.mrb[0].mxu0
  %v1708 = vadd.f32 0.0, %v1707
  %v1709 = vpop.f32.mrb[0].mxu0
  %1710 = vmatprep.mubr.f32.mxu0 0.0
  %1711 = vmatmul.mubr.f32.gmra.mrb[0].mxu0 %v1590
  %v1712 = vpop.f32.mrb[0].mxu0
  %v1713 = vadd.f32 0.0, %v1712
  %v1714 = vpop.f32.mrb[0].mxu0
  %1715 = vmatprep.mubr.f32.mxu0 0.0
  %1716 = vmatmul.mubr.f32.gmra.mrb[0].mxu0 %v1591
  %v1717 = vpop.f32.mrb[0].mxu0
  %v1718 = vadd.f32 0.0, %v1717
  %v1719 = vpop.f32.mrb[0].mxu0
  %1720 = vmatprep.mubr.f32.mxu0 0.0
  %1721 = vmatmul.mubr.f32.gmra.mrb[0].mxu0 %v1592
  %v1722 = vpop.f32.mrb[0].mxu0
  %v1723 = vadd.f32 0.0, %v1722
  %v1724 = vpop.f32.mrb[0].mxu0
  %1725 = vmatprep.mubr.f32.mxu0 0.0
  %1726 = vmatmul.mubr.f32.gmra.mrb[0].mxu0 %v1593
  %v1727 = vpop.f32.mrb[0].mxu0
  %v1728 = vadd.f32 0.0, %v1727
  %v1729 = vpop.f32.mrb[0].mxu0
  %1730 = vmatprep.mubr.f32.mxu0 0.0
  %1731 = vmatmul.mubr.f32.gmra.mrb[0].mxu0 %v1594
  %v1732 = vpop.f32.mrb[0].mxu0
  %v1733 = vadd.f32 0.0, %v1732
  %v1734 = vpop.f32.mrb[0].mxu0
  %1735 = vmatprep.mubr.f32.mxu0 0.0
  %1736 = vmatmul.mubr.f32.gmra.mrb[0].mxu0 %v1595
  %v1737 = vpop.f32.mrb[0].mxu0
  %v1738 = vadd.f32 0.0, %v1737
  %v1739 = vpop.f32.mrb[0].mxu0
  %1740 = vmatprep.mubr.f32.mxu0 0.0
  %1741 = vmatmul.mubr.f32.gmra.mrb[0].mxu0 %v1596
  %v1742 = vpop.f32.mrb[0].mxu0
  %v1743 = vadd.f32 0.0, %v1742
  %v1744 = vpop.f32.mrb[0].mxu0
  %1745 = vmatprep.mubr.f32.mxu0 0.0
  %1746 = vmatmul.mubr.f32.gmra.mrb[0].mxu0 %v1597
  %v1747 = vpop.f32.mrb[0].mxu0
  %v1748 = vadd.f32 0.0, %v1747
  %v1749 = vpop.f32.mrb[0].mxu0
  %1750 = vmatprep.mubr.f32.mxu0 0.0
  %1751 = vmatmul.mubr.f32.gmra.mrb[0].mxu0 %v1598
  %v1752 = vpop.f32.mrb[0].mxu0
  %v1753 = vadd.f32 0.0, %v1752
  %v1754 = vpop.f32.mrb[0].mxu0
  %1755 = vmatprep.mubr.f32.mxu0 0.0
  %1756 = vmatmul.mubr.f32.gmra.mrb[0].mxu0 %v1599
  %v1757 = vpop.f32.mrb[0].mxu0
  %v1758 = vadd.f32 0.0, %v1757
  %v1759 = vpop.f32.mrb[0].mxu0
  %1760 = vmatprep.mubr.f32.mxu0 0.0
  %1761 = vmatmul.mubr.f32.gmra.mrb[0].mxu0 %v1600
  %v1762 = vpop.f32.mrb[0].mxu0
  %v1763 = vadd.f32 0.0, %v1762
  %v1764 = vpop.f32.mrb[0].mxu0
  %1765 = vmatprep.mubr.f32.mxu0 0.0
  %1766 = vmatmul.mubr.f32.gmra.mrb[0].mxu0 %v1601
  %v1767 = vpop.f32.mrb[0].mxu0
  %v1768 = vadd.f32 0.0, %v1767
  %v1769 = vpop.f32.mrb[0].mxu0
  %1770 = vmatprep.mubr.f32.mxu0 0.0
  %1771 = vmatmul.mubr.f32.gmra.mrb[0].mxu0 %v1602
  %v1772 = vpop.f32.mrb[0].mxu0
  %v1773 = vadd.f32 0.0, %v1772
  %v1774 = vpop.f32.mrb[0].mxu0
  %1775 = vmatprep.mubr.f32.mxu0 0.0
  %1776 = vmatmul.mubr.f32.gmra.mrb[0].mxu0 %v1603
  %v1777 = vpop.f32.mrb[0].mxu0
  %v1778 = vadd.f32 0.0, %v1777
  %v1779 = vpop.f32.mrb[0].mxu0
  %1780 = vmatprep.mubr.f32.mxu0 0.0
  %1781 = vmatmul.mubr.f32.gmra.mrb[0].mxu0 %v1604
  %v1782 = vpop.f32.mrb[0].mxu0
  %v1783 = vadd.f32 0.0, %v1782
  %v1784 = vpop.f32.mrb[0].mxu0
  %1785 = vmatprep.mubr.f32.mxu0 0.0
  %1786 = vmatmul.mubr.f32.gmra.mrb[0].mxu0 %v1605
  %v1787 = vpop.f32.mrb[0].mxu0
  %v1788 = vadd.f32 0.0, %v1787
  %v1789 = vpop.f32.mrb[0].mxu0
  %1790 = vmatprep.mubr.f32.mxu0 0.0
  %1791 = vmatmul.mubr.f32.gmra.mrb[0].mxu0 %v1606
  %v1792 = vpop.f32.mrb[0].mxu0
  %v1793 = vadd.f32 0.0, %v1792
  %v1794 = vpop.f32.mrb[0].mxu0
  %1795 = vmatprep.mubr.f32.mxu0 0.0
  %1796 = vmatmul.mubr.f32.gmra.mrb[0].mxu0 %v1607
  %v1797 = vpop.f32.mrb[0].mxu0
  %v1798 = vadd.f32 0.0, %v1797
  %v1799 = vpop.f32.mrb[0].mxu0
  %1800 = vmatprep.mubr.f32.mxu0 0.0
  %1801 = vmatmul.mubr.f32.gmra.mrb[0].mxu0 %v1608
  %v1802 = vpop.f32.mrb[0].mxu0
  %v1803 = vadd.f32 0.0, %v1802
  %v1804 = vpop.f32.mrb[0].mxu0
  %1805 = vmatprep.mubr.f32.mxu0 0.0
  %1806 = vmatmul.mubr.f32.gmra.mrb[0].mxu0 %v1609
  %v1807 = vpop.f32.mrb[0].mxu0
  %v1808 = vadd.f32 0.0, %v1807
  %v1809 = vpop.f32.mrb[0].mxu0
  %1810 = vmatprep.mubr.f32.mxu0 0.0
  %1811 = vmatmul.mubr.f32.gmra.mrb[0].mxu0 %v1610
  %v1812 = vpop.f32.mrb[0].mxu0
  %v1813 = vadd.f32 0.0, %v1812
  %v1814 = vpop.f32.mrb[0].mxu0
  %1815 = vmatprep.mubr.f32.mxu0 0.0
  %1816 = vmatmul.mubr.f32.gmra.mrb[0].mxu0 %v1611
  %v1817 = vpop.f32.mrb[0].mxu0
  %v1818 = vadd.f32 0.0, %v1817
  %v1819 = vpop.f32.mrb[0].mxu0
  %1820 = vmatprep.mubr.f32.mxu0 0.0
  %1821 = vmatmul.mubr.f32.gmra.mrb[0].mxu0 %v1612
  %v1822 = vpop.f32.mrb[0].mxu0
  %v1823 = vadd.f32 0.0, %v1822
  %v1824 = vpop.f32.mrb[0].mxu0
  %1825 = vmatprep.mubr.f32.mxu0 0.0
  %1826 = vmatmul.mubr.f32.gmra.mrb[0].mxu0 %v1613
  %v1827 = vpop.f32.mrb[0].mxu0
  %v1828 = vadd.f32 0.0, %v1827
  %v1829 = vpop.f32.mrb[0].mxu0
  %1830 = vmatprep.mubr.f32.mxu0 0.0
  %1831 = vmatmul.mubr.f32.gmra.mrb[0].mxu0 %v1614
  %v1832 = vpop.f32.mrb[0].mxu0
  %v1833 = vadd.f32 0.0, %v1832
  %v1834 = vpop.f32.mrb[0].mxu0
  %1835 = vmatprep.mubr.f32.mxu0 0.0
  %1836 = vmatmul.mubr.f32.gmra.mrb[0].mxu0 %v1615
  %v1837 = vpop.f32.mrb[0].mxu0
  %v1838 = vadd.f32 0.0, %v1837
  %v1839 = vpop.f32.mrb[0].mxu0
  %1840 = vmatprep.mubr.f32.mxu0 0.0
  %1841 = vmatmul.mubr.f32.gmra.mrb[0].mxu0 %v1616
  %v1842 = vpop.f32.mrb[0].mxu0
  %v1843 = vadd.f32 0.0, %v1842
  %v1844 = vpop.f32.mrb[0].mxu0
  %1845 = vmatprep.mubr.f32.mxu0 0.0
  %1846 = vmatmul.mubr.f32.gmra.mrb[0].mxu0 %v1617
  %v1847 = vpop.f32.mrb[0].mxu0
  %v1848 = vadd.f32 0.0, %v1847
  %v1849 = vpop.f32.mrb[0].mxu0
  %1850 = vmatprep.mubr.f32.mxu0 0.0
  %1851 = vmatmul.mubr.f32.gmra.mrb[0].mxu0 %v1618
  %v1852 = vpop.f32.mrb[0].mxu0
  %v1853 = vadd.f32 0.0, %v1852
  %v1854 = vpop.f32.mrb[0].mxu0
  %1855 = vmatprep.mubr.f32.mxu0 0.0
  %1856 = vmatmul.mubr.f32.gmra.mrb[0].mxu0 %v1619
  %v1857 = vpop.f32.mrb[0].mxu0
  %v1858 = vadd.f32 0.0, %v1857
  %v1859 = vpop.f32.mrb[0].mxu0
  %1860 = vmatprep.mubr.f32.mxu0 0.0
  %1861 = vmatmul.mubr.f32.gmra.mrb[0].mxu0 %v1620
  %v1862 = vpop.f32.mrb[0].mxu0
  %v1863 = vadd.f32 0.0, %v1862
  %v1864 = vpop.f32.mrb[0].mxu0
  %1865 = vmatprep.mubr.f32.mxu0 0.0
  %1866 = vmatmul.mubr.f32.gmra.mrb[0].mxu0 %v1621
  %v1867 = vpop.f32.mrb[0].mxu0
  %v1868 = vadd.f32 0.0, %v1867
  %v1869 = vpop.f32.mrb[0].mxu0
  %1870 = vmatprep.mubr.f32.mxu0 0.0
  %1871 = vmatmul.mubr.f32.gmra.mrb[0].mxu0 %v1622
  %v1872 = vpop.f32.mrb[0].mxu0
  %v1873 = vadd.f32 0.0, %v1872
  %v1874 = vpop.f32.mrb[0].mxu0
  %1875 = vmatprep.mubr.f32.mxu0 0.0
  %1876 = vmatmul.mubr.f32.gmra.mrb[0].mxu0 %v1623
  %v1877 = vpop.f32.mrb[0].mxu0
  %v1878 = vadd.f32 0.0, %v1877
  %v1879 = vpop.f32.mrb[0].mxu0
  %1880 = vmatprep.mubr.f32.mxu0 0.0
  %1881 = vmatmul.mubr.f32.gmra.mrb[0].mxu0 %v1624
  %v1882 = vpop.f32.mrb[0].mxu0
  %v1883 = vadd.f32 0.0, %v1882
  %v1884 = vpop.f32.mrb[0].mxu0
  %1885 = vmatprep.mubr.f32.mxu0 0.0
  %1886 = vmatmul.mubr.f32.gmra.mrb[0].mxu0 %v1625
  %v1887 = vpop.f32.mrb[0].mxu0
  %v1888 = vadd.f32 0.0, %v1887
  %v1889 = vpop.f32.mrb[0].mxu0
  %1890 = vmatprep.mubr.f32.mxu0 0.0
  %1891 = vmatmul.mubr.f32.gmra.mrb[0].mxu0 %v1626
  %v1892 = vpop.f32.mrb[0].mxu0
  %v1893 = vadd.f32 0.0, %v1892
  %v1894 = vpop.f32.mrb[0].mxu0
  %1895 = vmatprep.mubr.f32.mxu0 0.0
  %1896 = vmatmul.mubr.f32.gmra.mrb[0].mxu0 %v1627
  %v1897 = vpop.f32.mrb[0].mxu0
  %v1898 = vadd.f32 0.0, %v1897
  %v1899 = vpop.f32.mrb[0].mxu0
  %1900 = vmatprep.mubr.f32.mxu0 0.0
  %1901 = vmatmul.mubr.f32.gmra.mrb[0].mxu0 %v1628
  %v1902 = vpop.f32.mrb[0].mxu0
  %v1903 = vadd.f32 0.0, %v1902
  %v1904 = vpop.f32.mrb[0].mxu0
  %1905 = vmatprep.mubr.f32.mxu0 0.0
  %1906 = vmatmul.mubr.f32.gmra.mrb[0].mxu0 %v1629
  %v1907 = vpop.f32.mrb[0].mxu0
  %v1908 = vadd.f32 0.0, %v1907
  %v1909 = vpop.f32.mrb[0].mxu0
  %1910 = vmatprep.mubr.f32.mxu0 0.0
  %1911 = vmatmul.mubr.f32.gmra.mrb[0].mxu0 %v1630
  %v1912 = vpop.f32.mrb[0].mxu0
  %v1913 = vadd.f32 0.0, %v1912
  %v1914 = vpop.f32.mrb[0].mxu0
  %1915 = vmatprep.mubr.f32.mxu0 0.0
  %1916 = vmatmul.mubr.f32.gmra.mrb[0].mxu0 %v1631
  %v1917 = vpop.f32.mrb[0].mxu0
  %v1918 = vadd.f32 0.0, %v1917
  %v1919 = vpop.f32.mrb[0].mxu0
  %1920 = vmatprep.mubr.f32.mxu0 0.0
  %1921 = vmatmul.mubr.f32.gmra.mrb[0].mxu0 %v1632
  %v1922 = vpop.f32.mrb[0].mxu0
  %v1923 = vadd.f32 0.0, %v1922
  %v1924 = vpop.f32.mrb[0].mxu0
  %1925 = vmatprep.mubr.f32.mxu0 0.0
  %1926 = vmatmul.mubr.f32.gmra.mrb[0].mxu0 %v1633
  %v1927 = vpop.f32.mrb[0].mxu0
  %v1928 = vadd.f32 0.0, %v1927
  %v1929 = vpop.f32.mrb[0].mxu0
  %1930 = vmatprep.mubr.f32.mxu0 0.0
  %1931 = vmatmul.mubr.f32.gmra.mrb[0].mxu0 %v1634
  %v1932 = vpop.f32.mrb[0].mxu0
  %v1933 = vadd.f32 0.0, %v1932
  %v1934 = vpop.f32.mrb[0].mxu0
  %1935 = vmatprep.mubr.f32.mxu0 0.0
  %1936 = vmatmul.mubr.f32.gmra.mrb[0].mxu0 %v1635
  %v1937 = vpop.f32.mrb[0].mxu0
  %v1938 = vadd.f32 0.0, %v1937
  %v1939 = vpop.f32.mrb[0].mxu0
  %1940 = vdwg.mxu0
  %v1941 = vld [vmem:[%s5] sm:$0xff]
  %v1942 = vld [vmem:[%s5 + $0x8] sm:$0xff]
  %v1943 = vld [vmem:[%s5 + $0x10] sm:$0xff]
  %v1944 = vld [vmem:[%s5 + $0x18] sm:$0xff]
  %v1945 = vld [vmem:[%s5 + $0x20] sm:$0xff]
  %v1946 = vld [vmem:[%s5 + $0x28] sm:$0xff]
  %v1947 = vld [vmem:[%s5 + $0x30] sm:$0xff]
  %v1948 = vld [vmem:[%s5 + $0x38] sm:$0xff]
  %v1949 = vld [vmem:[%s5 + $0x40] sm:$0xff]
  %v1950 = vld [vmem:[%s5 + $0x48] sm:$0xff]
  %v1951 = vld [vmem:[%s5 + $0x50] sm:$0xff]
  %v1952 = vld [vmem:[%s5 + $0x58] sm:$0xff]
  %v1953 = vld [vmem:[%s5 + $0x60] sm:$0xff]
  %v1954 = vld [vmem:[%s5 + $0x68] sm:$0xff]
  %v1955 = vld [vmem:[%s5 + $0x70] sm:$0xff]
  %v1956 = vld [vmem:[%s5 + $0x78] sm:$0xff]
  %s1957 = scalar_lea.vmem %s5, 128
  %v1958 = vld [vmem:[%s1957] sm:$0xff]
  %v1959 = vld [vmem:[%s1957 + $0x8] sm:$0xff]
  %v1960 = vld [vmem:[%s1957 + $0x10] sm:$0xff]
  %v1961 = vld [vmem:[%s1957 + $0x18] sm:$0xff]
  %v1962 = vld [vmem:[%s1957 + $0x20] sm:$0xff]
  %v1963 = vld [vmem:[%s1957 + $0x28] sm:$0xff]
  %v1964 = vld [vmem:[%s1957 + $0x30] sm:$0xff]
  %v1965 = vld [vmem:[%s1957 + $0x38] sm:$0xff]
  %v1966 = vld [vmem:[%s1957 + $0x40] sm:$0xff]
  %v1967 = vld [vmem:[%s1957 + $0x48] sm:$0xff]
  %v1968 = vld [vmem:[%s1957 + $0x50] sm:$0xff]
  %v1969 = vld [vmem:[%s1957 + $0x58] sm:$0xff]
  %v1970 = vld [vmem:[%s1957 + $0x60] sm:$0xff]
  %v1971 = vld [vmem:[%s1957 + $0x68] sm:$0xff]
  %v1972 = vld [vmem:[%s1957 + $0x70] sm:$0xff]
  %v1973 = vld [vmem:[%s1957 + $0x78] sm:$0xff]
  %1974 = vmatprep.subr.mxu0 0.0
  %1975 = vmatpush1.msra.mxu0 %v1958
  %1976 = vmatprep.subr.mxu0 0.0
  %1977 = vmatpush1.msra.mxu0 %v1959
  %1978 = vmatprep.subr.mxu0 0.0
  %1979 = vmatpush1.msra.mxu0 %v1960
  %1980 = vmatprep.subr.mxu0 0.0
  %1981 = vmatpush1.msra.mxu0 %v1961
  %1982 = vmatprep.subr.mxu0 0.0
  %1983 = vmatpush1.msra.mxu0 %v1962
  %1984 = vmatprep.subr.mxu0 0.0
  %1985 = vmatpush1.msra.mxu0 %v1963
  %1986 = vmatprep.subr.mxu0 0.0
  %1987 = vmatpush1.msra.mxu0 %v1964
  %1988 = vmatprep.subr.mxu0 0.0
  %1989 = vmatpush1.msra.mxu0 %v1965
  %1990 = vmatprep.subr.mxu0 0.0
  %1991 = vmatpush1.msra.mxu0 %v1966
  %1992 = vmatprep.subr.mxu0 0.0
  %1993 = vmatpush1.msra.mxu0 %v1967
  %1994 = vmatprep.subr.mxu0 0.0
  %1995 = vmatpush1.msra.mxu0 %v1968
  %1996 = vmatprep.subr.mxu0 0.0
  %1997 = vmatpush1.msra.mxu0 %v1969
  %1998 = vmatprep.subr.mxu0 0.0
  %1999 = vmatpush1.msra.mxu0 %v1970
  %2000 = vmatprep.subr.mxu0 0.0
  %2001 = vmatpush1.msra.mxu0 %v1971
  %2002 = vmatprep.subr.mxu0 0.0
  %2003 = vmatpush1.msra.mxu0 %v1972
  %2004 = vmatprep.subr.mxu0 0.0
  %2005 = vmatpush1.msra.mxu0 %v1973
  %2006 = vmatprep.subr.mxu0 0.0
  %2007 = vmatpush1.msra.mxu0 0.0
  %2008 = vmatprep.subr.mxu0 0.0
  %2009 = vmatpush1.msra.mxu0 0.0
  %2010 = vmatprep.subr.mxu0 0.0
  %2011 = vmatpush1.msra.mxu0 0.0
  %2012 = vmatprep.subr.mxu0 0.0
  %2013 = vmatpush1.msra.mxu0 0.0
  %2014 = vmatprep.subr.mxu0 0.0
  %2015 = vmatpush1.msra.mxu0 0.0
  %2016 = vmatprep.subr.mxu0 0.0
  %2017 = vmatpush1.msra.mxu0 0.0
  %2018 = vmatprep.subr.mxu0 0.0
  %2019 = vmatpush1.msra.mxu0 0.0
  %2020 = vmatprep.subr.mxu0 0.0
  %2021 = vmatpush1.msra.mxu0 0.0
  %2022 = vmatprep.subr.mxu0 0.0
  %2023 = vmatpush1.msra.mxu0 0.0
  %2024 = vmatprep.subr.mxu0 0.0
  %2025 = vmatpush1.msra.mxu0 0.0
  %2026 = vmatprep.subr.mxu0 0.0
  %2027 = vmatpush1.msra.mxu0 0.0
  %2028 = vmatprep.subr.mxu0 0.0
  %2029 = vmatpush1.msra.mxu0 0.0
  %2030 = vmatprep.subr.mxu0 0.0
  %2031 = vmatpush1.msra.mxu0 0.0
  %2032 = vmatprep.subr.mxu0 0.0
  %2033 = vmatpush1.msra.mxu0 0.0
  %2034 = vmatprep.subr.mxu0 0.0
  %2035 = vmatpush1.msra.mxu0 0.0
  %2036 = vmatprep.subr.mxu0 0.0
  %2037 = vmatpush1.msra.mxu0 0.0
  %2038 = vmatprep.mubr.f32.mxu0 0.0
  %2039 = vmatmul.mubr.f32.gmra.mrb[0].mxu0 %v1718
  %v2040 = vpop.f32.mrb[0].mxu0
  %v2041 = vadd.f32 0.0, %v2040
  %v2042 = vpop.f32.mrb[0].mxu0
  %2043 = vmatprep.mubr.f32.mxu0 0.0
  %2044 = vmatmul.mubr.f32.gmra.mrb[0].mxu0 %v1723
  %v2045 = vpop.f32.mrb[0].mxu0
  %v2046 = vadd.f32 0.0, %v2045
  %v2047 = vpop.f32.mrb[0].mxu0
  %2048 = vmatprep.mubr.f32.mxu0 0.0
  %2049 = vmatmul.mubr.f32.gmra.mrb[0].mxu0 %v1728
  %v2050 = vpop.f32.mrb[0].mxu0
  %v2051 = vadd.f32 0.0, %v2050
  %v2052 = vpop.f32.mrb[0].mxu0
  %2053 = vdwg.mxu0
  %2054 = vmatprep.subr.mxu0 0.0
  %2055 = vmatpush1.msra.mxu0 %v1941
  %2056 = vmatprep.subr.mxu0 0.0
  %2057 = vmatpush1.msra.mxu0 %v1942
  %2058 = vmatprep.subr.mxu0 0.0
  %2059 = vmatpush1.msra.mxu0 %v1943
  %2060 = vmatprep.subr.mxu0 0.0
  %2061 = vmatpush1.msra.mxu0 %v1944
  %2062 = vmatprep.subr.mxu0 0.0
  %2063 = vmatpush1.msra.mxu0 %v1945
  %2064 = vmatprep.subr.mxu0 0.0
  %2065 = vmatpush1.msra.mxu0 %v1946
  %2066 = vmatprep.subr.mxu0 0.0
  %2067 = vmatpush1.msra.mxu0 %v1947
  %2068 = vmatprep.subr.mxu0 0.0
  %2069 = vmatpush1.msra.mxu0 %v1948
  %2070 = vmatprep.subr.mxu0 0.0
  %2071 = vmatpush1.msra.mxu0 %v1949
  %2072 = vmatprep.subr.mxu0 0.0
  %2073 = vmatpush1.msra.mxu0 %v1950
  %2074 = vmatprep.subr.mxu0 0.0
  %2075 = vmatpush1.msra.mxu0 %v1951
  %2076 = vmatprep.subr.mxu0 0.0
  %2077 = vmatpush1.msra.mxu0 %v1952
  %2078 = vmatprep.subr.mxu0 0.0
  %2079 = vmatpush1.msra.mxu0 %v1953
  %2080 = vmatprep.subr.mxu0 0.0
  %2081 = vmatpush1.msra.mxu0 %v1954
  %2082 = vmatprep.subr.mxu0 0.0
  %2083 = vmatpush1.msra.mxu0 %v1955
  %2084 = vmatprep.subr.mxu0 0.0
  %2085 = vmatpush1.msra.mxu0 %v1956
  %2086 = vmatprep.subr.mxu0 0.0
  %2087 = vmatpush1.msra.mxu0 0.0
  %2088 = vmatprep.subr.mxu0 0.0
  %2089 = vmatpush1.msra.mxu0 0.0
  %2090 = vmatprep.subr.mxu0 0.0
  %2091 = vmatpush1.msra.mxu0 0.0
  %2092 = vmatprep.subr.mxu0 0.0
  %2093 = vmatpush1.msra.mxu0 0.0
  %2094 = vmatprep.subr.mxu0 0.0
  %2095 = vmatpush1.msra.mxu0 0.0
  %2096 = vmatprep.subr.mxu0 0.0
  %2097 = vmatpush1.msra.mxu0 0.0
  %2098 = vmatprep.subr.mxu0 0.0
  %2099 = vmatpush1.msra.mxu0 0.0
  %2100 = vmatprep.subr.mxu0 0.0
  %2101 = vmatpush1.msra.mxu0 0.0
  %2102 = vmatprep.subr.mxu0 0.0
  %2103 = vmatpush1.msra.mxu0 0.0
  %2104 = vmatprep.subr.mxu0 0.0
  %2105 = vmatpush1.msra.mxu0 0.0
  %2106 = vmatprep.subr.mxu0 0.0
  %2107 = vmatpush1.msra.mxu0 0.0
  %2108 = vmatprep.subr.mxu0 0.0
  %2109 = vmatpush1.msra.mxu0 0.0
  %2110 = vmatprep.subr.mxu0 0.0
  %2111 = vmatpush1.msra.mxu0 0.0
  %2112 = vmatprep.subr.mxu0 0.0
  %2113 = vmatpush1.msra.mxu0 0.0
  %2114 = vmatprep.subr.mxu0 0.0
  %2115 = vmatpush1.msra.mxu0 0.0
  %2116 = vmatprep.subr.mxu0 0.0
  %2117 = vmatpush1.msra.mxu0 0.0
  %2118 = vmatprep.mubr.f32.mxu0 0.0
  %2119 = vmatmul.mubr.f32.gmra.mrb[0].mxu0 %v1703
  %v2120 = vpop.f32.mrb[0].mxu0
  %v2121 = vadd.f32 %v2041, %v2120
  %v2122 = vpop.f32.mrb[0].mxu0
  %2123 = vmatprep.mubr.f32.mxu0 0.0
  %2124 = vmatmul.mubr.f32.gmra.mrb[0].mxu0 %v1708
  %v2125 = vpop.f32.mrb[0].mxu0
  %v2126 = vadd.f32 %v2046, %v2125
  %v2127 = vpop.f32.mrb[0].mxu0
  %2128 = vmatprep.mubr.f32.mxu0 0.0
  %2129 = vmatmul.mubr.f32.gmra.mrb[0].mxu0 %v1713
  %v2130 = vpop.f32.mrb[0].mxu0
  %v2131 = vadd.f32 %v2051, %v2130
  %v2132 = vpop.f32.mrb[0].mxu0
  %2133 = vdwg.mxu0
  %s2134 = scalar_lea.vmem %s5, 256
  %v2135 = vld [vmem:[%s2134] sm:$0xff]
  %v2136 = vld [vmem:[%s2134 + $0x8] sm:$0xff]
  %v2137 = vld [vmem:[%s2134 + $0x10] sm:$0xff]
  %v2138 = vld [vmem:[%s2134 + $0x18] sm:$0xff]
  %v2139 = vld [vmem:[%s2134 + $0x20] sm:$0xff]
  %v2140 = vld [vmem:[%s2134 + $0x28] sm:$0xff]
  %v2141 = vld [vmem:[%s2134 + $0x30] sm:$0xff]
  %v2142 = vld [vmem:[%s2134 + $0x38] sm:$0xff]
  %v2143 = vld [vmem:[%s2134 + $0x40] sm:$0xff]
  %v2144 = vld [vmem:[%s2134 + $0x48] sm:$0xff]
  %v2145 = vld [vmem:[%s2134 + $0x50] sm:$0xff]
  %v2146 = vld [vmem:[%s2134 + $0x58] sm:$0xff]
  %v2147 = vld [vmem:[%s2134 + $0x60] sm:$0xff]
  %v2148 = vld [vmem:[%s2134 + $0x68] sm:$0xff]
  %v2149 = vld [vmem:[%s2134 + $0x70] sm:$0xff]
  %v2150 = vld [vmem:[%s2134 + $0x78] sm:$0xff]
  %2151 = vmatprep.subr.mxu0 0.0
  %2152 = vmatpush1.msra.mxu0 %v2135
  %2153 = vmatprep.subr.mxu0 0.0
  %2154 = vmatpush1.msra.mxu0 %v2136
  %2155 = vmatprep.subr.mxu0 0.0
  %2156 = vmatpush1.msra.mxu0 %v2137
  %2157 = vmatprep.subr.mxu0 0.0
  %2158 = vmatpush1.msra.mxu0 %v2138
  %2159 = vmatprep.subr.mxu0 0.0
  %2160 = vmatpush1.msra.mxu0 %v2139
  %2161 = vmatprep.subr.mxu0 0.0
  %2162 = vmatpush1.msra.mxu0 %v2140
  %2163 = vmatprep.subr.mxu0 0.0
  %2164 = vmatpush1.msra.mxu0 %v2141
  %2165 = vmatprep.subr.mxu0 0.0
  %2166 = vmatpush1.msra.mxu0 %v2142
  %2167 = vmatprep.subr.mxu0 0.0
  %2168 = vmatpush1.msra.mxu0 %v2143
  %2169 = vmatprep.subr.mxu0 0.0
  %2170 = vmatpush1.msra.mxu0 %v2144
  %2171 = vmatprep.subr.mxu0 0.0
  %2172 = vmatpush1.msra.mxu0 %v2145
  %2173 = vmatprep.subr.mxu0 0.0
  %2174 = vmatpush1.msra.mxu0 %v2146
  %2175 = vmatprep.subr.mxu0 0.0
  %2176 = vmatpush1.msra.mxu0 %v2147
  %2177 = vmatprep.subr.mxu0 0.0
  %2178 = vmatpush1.msra.mxu0 %v2148
  %2179 = vmatprep.subr.mxu0 0.0
  %2180 = vmatpush1.msra.mxu0 %v2149
  %2181 = vmatprep.subr.mxu0 0.0
  %2182 = vmatpush1.msra.mxu0 %v2150
  %2183 = vmatprep.subr.mxu0 0.0
  %2184 = vmatpush1.msra.mxu0 0.0
  %2185 = vmatprep.subr.mxu0 0.0
  %2186 = vmatpush1.msra.mxu0 0.0
  %2187 = vmatprep.subr.mxu0 0.0
  %2188 = vmatpush1.msra.mxu0 0.0
  %2189 = vmatprep.subr.mxu0 0.0
  %2190 = vmatpush1.msra.mxu0 0.0
  %2191 = vmatprep.subr.mxu0 0.0
  %2192 = vmatpush1.msra.mxu0 0.0
  %2193 = vmatprep.subr.mxu0 0.0
  %2194 = vmatpush1.msra.mxu0 0.0
  %2195 = vmatprep.subr.mxu0 0.0
  %2196 = vmatpush1.msra.mxu0 0.0
  %2197 = vmatprep.subr.mxu0 0.0
  %2198 = vmatpush1.msra.mxu0 0.0
  %2199 = vmatprep.subr.mxu0 0.0
  %2200 = vmatpush1.msra.mxu0 0.0
  %2201 = vmatprep.subr.mxu0 0.0
  %2202 = vmatpush1.msra.mxu0 0.0
  %2203 = vmatprep.subr.mxu0 0.0
  %2204 = vmatpush1.msra.mxu0 0.0
  %2205 = vmatprep.subr.mxu0 0.0
  %2206 = vmatpush1.msra.mxu0 0.0
  %2207 = vmatprep.subr.mxu0 0.0
  %2208 = vmatpush1.msra.mxu0 0.0
  %2209 = vmatprep.subr.mxu0 0.0
  %2210 = vmatpush1.msra.mxu0 0.0
  %2211 = vmatprep.subr.mxu0 0.0
  %2212 = vmatpush1.msra.mxu0 0.0
  %2213 = vmatprep.subr.mxu0 0.0
  %2214 = vmatpush1.msra.mxu0 0.0
  %2215 = vmatprep.mubr.f32.mxu0 0.0
  %2216 = vmatmul.mubr.f32.gmra.mrb[0].mxu0 %v1733
  %v2217 = vpop.f32.mrb[0].mxu0
  %v2218 = vadd.f32 0.0, %v2217
  %v2219 = vpop.f32.mrb[0].mxu0
  %2220 = vmatprep.mubr.f32.mxu0 0.0
  %2221 = vmatmul.mubr.f32.gmra.mrb[0].mxu0 %v1738
  %v2222 = vpop.f32.mrb[0].mxu0
  %v2223 = vadd.f32 0.0, %v2222
  %v2224 = vpop.f32.mrb[0].mxu0
  %2225 = vmatprep.mubr.f32.mxu0 0.0
  %2226 = vmatmul.mubr.f32.gmra.mrb[0].mxu0 %v1743
  %v2227 = vpop.f32.mrb[0].mxu0
  %v2228 = vadd.f32 0.0, %v2227
  %v2229 = vpop.f32.mrb[0].mxu0
  %2230 = vdwg.mxu0
  %v2231 = vadd.f32 %v2121, %v2218
  %v2232 = vadd.f32 %v2126, %v2223
  %v2233 = vadd.f32 %v2131, %v2228
  %s2234 = scalar_lea.vmem %s5, 384
  %v2235 = vld [vmem:[%s2234] sm:$0xff]
  %v2236 = vld [vmem:[%s2234 + $0x8] sm:$0xff]
  %v2237 = vld [vmem:[%s2234 + $0x10] sm:$0xff]
  %v2238 = vld [vmem:[%s2234 + $0x18] sm:$0xff]
  %v2239 = vld [vmem:[%s2234 + $0x20] sm:$0xff]
  %v2240 = vld [vmem:[%s2234 + $0x28] sm:$0xff]
  %v2241 = vld [vmem:[%s2234 + $0x30] sm:$0xff]
  %v2242 = vld [vmem:[%s2234 + $0x38] sm:$0xff]
  %v2243 = vld [vmem:[%s2234 + $0x40] sm:$0xff]
  %v2244 = vld [vmem:[%s2234 + $0x48] sm:$0xff]
  %v2245 = vld [vmem:[%s2234 + $0x50] sm:$0xff]
  %v2246 = vld [vmem:[%s2234 + $0x58] sm:$0xff]
  %v2247 = vld [vmem:[%s2234 + $0x60] sm:$0xff]
  %v2248 = vld [vmem:[%s2234 + $0x68] sm:$0xff]
  %v2249 = vld [vmem:[%s2234 + $0x70] sm:$0xff]
  %v2250 = vld [vmem:[%s2234 + $0x78] sm:$0xff]
  %2251 = vmatprep.subr.mxu0 0.0
  %2252 = vmatpush1.msra.mxu0 %v2235
  %2253 = vmatprep.subr.mxu0 0.0
  %2254 = vmatpush1.msra.mxu0 %v2236
  %2255 = vmatprep.subr.mxu0 0.0
  %2256 = vmatpush1.msra.mxu0 %v2237
  %2257 = vmatprep.subr.mxu0 0.0
  %2258 = vmatpush1.msra.mxu0 %v2238
  %2259 = vmatprep.subr.mxu0 0.0
  %2260 = vmatpush1.msra.mxu0 %v2239
  %2261 = vmatprep.subr.mxu0 0.0
  %2262 = vmatpush1.msra.mxu0 %v2240
  %2263 = vmatprep.subr.mxu0 0.0
  %2264 = vmatpush1.msra.mxu0 %v2241
  %2265 = vmatprep.subr.mxu0 0.0
  %2266 = vmatpush1.msra.mxu0 %v2242
  %2267 = vmatprep.subr.mxu0 0.0
  %2268 = vmatpush1.msra.mxu0 %v2243
  %2269 = vmatprep.subr.mxu0 0.0
  %2270 = vmatpush1.msra.mxu0 %v2244
  %2271 = vmatprep.subr.mxu0 0.0
  %2272 = vmatpush1.msra.mxu0 %v2245
  %2273 = vmatprep.subr.mxu0 0.0
  %2274 = vmatpush1.msra.mxu0 %v2246
  %2275 = vmatprep.subr.mxu0 0.0
  %2276 = vmatpush1.msra.mxu0 %v2247
  %2277 = vmatprep.subr.mxu0 0.0
  %2278 = vmatpush1.msra.mxu0 %v2248
  %2279 = vmatprep.subr.mxu0 0.0
  %2280 = vmatpush1.msra.mxu0 %v2249
  %2281 = vmatprep.subr.mxu0 0.0
  %2282 = vmatpush1.msra.mxu0 %v2250
  %2283 = vmatprep.subr.mxu0 0.0
  %2284 = vmatpush1.msra.mxu0 0.0
  %2285 = vmatprep.subr.mxu0 0.0
  %2286 = vmatpush1.msra.mxu0 0.0
  %2287 = vmatprep.subr.mxu0 0.0
  %2288 = vmatpush1.msra.mxu0 0.0
  %2289 = vmatprep.subr.mxu0 0.0
  %2290 = vmatpush1.msra.mxu0 0.0
  %2291 = vmatprep.subr.mxu0 0.0
  %2292 = vmatpush1.msra.mxu0 0.0
  %2293 = vmatprep.subr.mxu0 0.0
  %2294 = vmatpush1.msra.mxu0 0.0
  %2295 = vmatprep.subr.mxu0 0.0
  %2296 = vmatpush1.msra.mxu0 0.0
  %2297 = vmatprep.subr.mxu0 0.0
  %2298 = vmatpush1.msra.mxu0 0.0
  %2299 = vmatprep.subr.mxu0 0.0
  %2300 = vmatpush1.msra.mxu0 0.0
  %2301 = vmatprep.subr.mxu0 0.0
  %2302 = vmatpush1.msra.mxu0 0.0
  %2303 = vmatprep.subr.mxu0 0.0
  %2304 = vmatpush1.msra.mxu0 0.0
  %2305 = vmatprep.subr.mxu0 0.0
  %2306 = vmatpush1.msra.mxu0 0.0
  %2307 = vmatprep.subr.mxu0 0.0
  %2308 = vmatpush1.msra.mxu0 0.0
  %2309 = vmatprep.subr.mxu0 0.0
  %2310 = vmatpush1.msra.mxu0 0.0
  %2311 = vmatprep.subr.mxu0 0.0
  %2312 = vmatpush1.msra.mxu0 0.0
  %2313 = vmatprep.subr.mxu0 0.0
  %2314 = vmatpush1.msra.mxu0 0.0
  %2315 = vmatprep.mubr.f32.mxu0 0.0
  %2316 = vmatmul.mubr.f32.gmra.mrb[0].mxu0 %v1748
  %v2317 = vpop.f32.mrb[0].mxu0
  %v2318 = vadd.f32 0.0, %v2317
  %v2319 = vpop.f32.mrb[0].mxu0
  %2320 = vmatprep.mubr.f32.mxu0 0.0
  %2321 = vmatmul.mubr.f32.gmra.mrb[0].mxu0 %v1753
  %v2322 = vpop.f32.mrb[0].mxu0
  %v2323 = vadd.f32 0.0, %v2322
  %v2324 = vpop.f32.mrb[0].mxu0
  %2325 = vmatprep.mubr.f32.mxu0 0.0
  %2326 = vmatmul.mubr.f32.gmra.mrb[0].mxu0 %v1758
  %v2327 = vpop.f32.mrb[0].mxu0
  %v2328 = vadd.f32 0.0, %v2327
  %v2329 = vpop.f32.mrb[0].mxu0
  %2330 = vdwg.mxu0
  %v2331 = vadd.f32 %v2231, %v2318
  %v2332 = vadd.f32 %v2232, %v2323
  %v2333 = vadd.f32 %v2233, %v2328
  %s2334 = scalar_lea.vmem %s5, 512
  %v2335 = vld [vmem:[%s2334] sm:$0xff]
  %v2336 = vld [vmem:[%s2334 + $0x8] sm:$0xff]
  %v2337 = vld [vmem:[%s2334 + $0x10] sm:$0xff]
  %v2338 = vld [vmem:[%s2334 + $0x18] sm:$0xff]
  %v2339 = vld [vmem:[%s2334 + $0x20] sm:$0xff]
  %v2340 = vld [vmem:[%s2334 + $0x28] sm:$0xff]
  %v2341 = vld [vmem:[%s2334 + $0x30] sm:$0xff]
  %v2342 = vld [vmem:[%s2334 + $0x38] sm:$0xff]
  %v2343 = vld [vmem:[%s2334 + $0x40] sm:$0xff]
  %v2344 = vld [vmem:[%s2334 + $0x48] sm:$0xff]
  %v2345 = vld [vmem:[%s2334 + $0x50] sm:$0xff]
  %v2346 = vld [vmem:[%s2334 + $0x58] sm:$0xff]
  %v2347 = vld [vmem:[%s2334 + $0x60] sm:$0xff]
  %v2348 = vld [vmem:[%s2334 + $0x68] sm:$0xff]
  %v2349 = vld [vmem:[%s2334 + $0x70] sm:$0xff]
  %v2350 = vld [vmem:[%s2334 + $0x78] sm:$0xff]
  %2351 = vmatprep.subr.mxu0 0.0
  %2352 = vmatpush1.msra.mxu0 %v2335
  %2353 = vmatprep.subr.mxu0 0.0
  %2354 = vmatpush1.msra.mxu0 %v2336
  %2355 = vmatprep.subr.mxu0 0.0
  %2356 = vmatpush1.msra.mxu0 %v2337
  %2357 = vmatprep.subr.mxu0 0.0
  %2358 = vmatpush1.msra.mxu0 %v2338
  %2359 = vmatprep.subr.mxu0 0.0
  %2360 = vmatpush1.msra.mxu0 %v2339
  %2361 = vmatprep.subr.mxu0 0.0
  %2362 = vmatpush1.msra.mxu0 %v2340
  %2363 = vmatprep.subr.mxu0 0.0
  %2364 = vmatpush1.msra.mxu0 %v2341
  %2365 = vmatprep.subr.mxu0 0.0
  %2366 = vmatpush1.msra.mxu0 %v2342
  %2367 = vmatprep.subr.mxu0 0.0
  %2368 = vmatpush1.msra.mxu0 %v2343
  %2369 = vmatprep.subr.mxu0 0.0
  %2370 = vmatpush1.msra.mxu0 %v2344
  %2371 = vmatprep.subr.mxu0 0.0
  %2372 = vmatpush1.msra.mxu0 %v2345
  %2373 = vmatprep.subr.mxu0 0.0
  %2374 = vmatpush1.msra.mxu0 %v2346
  %2375 = vmatprep.subr.mxu0 0.0
  %2376 = vmatpush1.msra.mxu0 %v2347
  %2377 = vmatprep.subr.mxu0 0.0
  %2378 = vmatpush1.msra.mxu0 %v2348
  %2379 = vmatprep.subr.mxu0 0.0
  %2380 = vmatpush1.msra.mxu0 %v2349
  %2381 = vmatprep.subr.mxu0 0.0
  %2382 = vmatpush1.msra.mxu0 %v2350
  %2383 = vmatprep.subr.mxu0 0.0
  %2384 = vmatpush1.msra.mxu0 0.0
  %2385 = vmatprep.subr.mxu0 0.0
  %2386 = vmatpush1.msra.mxu0 0.0
  %2387 = vmatprep.subr.mxu0 0.0
  %2388 = vmatpush1.msra.mxu0 0.0
  %2389 = vmatprep.subr.mxu0 0.0
  %2390 = vmatpush1.msra.mxu0 0.0
  %2391 = vmatprep.subr.mxu0 0.0
  %2392 = vmatpush1.msra.mxu0 0.0
  %2393 = vmatprep.subr.mxu0 0.0
  %2394 = vmatpush1.msra.mxu0 0.0
  %2395 = vmatprep.subr.mxu0 0.0
  %2396 = vmatpush1.msra.mxu0 0.0
  %2397 = vmatprep.subr.mxu0 0.0
  %2398 = vmatpush1.msra.mxu0 0.0
  %2399 = vmatprep.subr.mxu0 0.0
  %2400 = vmatpush1.msra.mxu0 0.0
  %2401 = vmatprep.subr.mxu0 0.0
  %2402 = vmatpush1.msra.mxu0 0.0
  %2403 = vmatprep.subr.mxu0 0.0
  %2404 = vmatpush1.msra.mxu0 0.0
  %2405 = vmatprep.subr.mxu0 0.0
  %2406 = vmatpush1.msra.mxu0 0.0
  %2407 = vmatprep.subr.mxu0 0.0
  %2408 = vmatpush1.msra.mxu0 0.0
  %2409 = vmatprep.subr.mxu0 0.0
  %2410 = vmatpush1.msra.mxu0 0.0
  %2411 = vmatprep.subr.mxu0 0.0
  %2412 = vmatpush1.msra.mxu0 0.0
  %2413 = vmatprep.subr.mxu0 0.0
  %2414 = vmatpush1.msra.mxu0 0.0
  %2415 = vmatprep.mubr.f32.mxu0 0.0
  %2416 = vmatmul.mubr.f32.gmra.mrb[0].mxu0 %v1763
  %v2417 = vpop.f32.mrb[0].mxu0
  %v2418 = vadd.f32 0.0, %v2417
  %v2419 = vpop.f32.mrb[0].mxu0
  %2420 = vmatprep.mubr.f32.mxu0 0.0
  %2421 = vmatmul.mubr.f32.gmra.mrb[0].mxu0 %v1768
  %v2422 = vpop.f32.mrb[0].mxu0
  %v2423 = vadd.f32 0.0, %v2422
  %v2424 = vpop.f32.mrb[0].mxu0
  %2425 = vmatprep.mubr.f32.mxu0 0.0
  %2426 = vmatmul.mubr.f32.gmra.mrb[0].mxu0 %v1773
  %v2427 = vpop.f32.mrb[0].mxu0
  %v2428 = vadd.f32 0.0, %v2427
  %v2429 = vpop.f32.mrb[0].mxu0
  %2430 = vdwg.mxu0
  %v2431 = vadd.f32 %v2331, %v2418
  %v2432 = vadd.f32 %v2332, %v2423
  %v2433 = vadd.f32 %v2333, %v2428
  %s2434 = scalar_lea.vmem %s5, 640
  %v2435 = vld [vmem:[%s2434] sm:$0xff]
  %v2436 = vld [vmem:[%s2434 + $0x8] sm:$0xff]
  %v2437 = vld [vmem:[%s2434 + $0x10] sm:$0xff]
  %v2438 = vld [vmem:[%s2434 + $0x18] sm:$0xff]
  %v2439 = vld [vmem:[%s2434 + $0x20] sm:$0xff]
  %v2440 = vld [vmem:[%s2434 + $0x28] sm:$0xff]
  %v2441 = vld [vmem:[%s2434 + $0x30] sm:$0xff]
  %v2442 = vld [vmem:[%s2434 + $0x38] sm:$0xff]
  %v2443 = vld [vmem:[%s2434 + $0x40] sm:$0xff]
  %v2444 = vld [vmem:[%s2434 + $0x48] sm:$0xff]
  %v2445 = vld [vmem:[%s2434 + $0x50] sm:$0xff]
  %v2446 = vld [vmem:[%s2434 + $0x58] sm:$0xff]
  %v2447 = vld [vmem:[%s2434 + $0x60] sm:$0xff]
  %v2448 = vld [vmem:[%s2434 + $0x68] sm:$0xff]
  %v2449 = vld [vmem:[%s2434 + $0x70] sm:$0xff]
  %v2450 = vld [vmem:[%s2434 + $0x78] sm:$0xff]
  %2451 = vmatprep.subr.mxu0 0.0
  %2452 = vmatpush1.msra.mxu0 %v2435
  %2453 = vmatprep.subr.mxu0 0.0
  %2454 = vmatpush1.msra.mxu0 %v2436
  %2455 = vmatprep.subr.mxu0 0.0
  %2456 = vmatpush1.msra.mxu0 %v2437
  %2457 = vmatprep.subr.mxu0 0.0
  %2458 = vmatpush1.msra.mxu0 %v2438
  %2459 = vmatprep.subr.mxu0 0.0
  %2460 = vmatpush1.msra.mxu0 %v2439
  %2461 = vmatprep.subr.mxu0 0.0
  %2462 = vmatpush1.msra.mxu0 %v2440
  %2463 = vmatprep.subr.mxu0 0.0
  %2464 = vmatpush1.msra.mxu0 %v2441
  %2465 = vmatprep.subr.mxu0 0.0
  %2466 = vmatpush1.msra.mxu0 %v2442
  %2467 = vmatprep.subr.mxu0 0.0
  %2468 = vmatpush1.msra.mxu0 %v2443
  %2469 = vmatprep.subr.mxu0 0.0
  %2470 = vmatpush1.msra.mxu0 %v2444
  %2471 = vmatprep.subr.mxu0 0.0
  %2472 = vmatpush1.msra.mxu0 %v2445
  %2473 = vmatprep.subr.mxu0 0.0
  %2474 = vmatpush1.msra.mxu0 %v2446
  %2475 = vmatprep.subr.mxu0 0.0
  %2476 = vmatpush1.msra.mxu0 %v2447
  %2477 = vmatprep.subr.mxu0 0.0
  %2478 = vmatpush1.msra.mxu0 %v2448
  %2479 = vmatprep.subr.mxu0 0.0
  %2480 = vmatpush1.msra.mxu0 %v2449
  %2481 = vmatprep.subr.mxu0 0.0
  %2482 = vmatpush1.msra.mxu0 %v2450
  %2483 = vmatprep.subr.mxu0 0.0
  %2484 = vmatpush1.msra.mxu0 0.0
  %2485 = vmatprep.subr.mxu0 0.0
  %2486 = vmatpush1.msra.mxu0 0.0
  %2487 = vmatprep.subr.mxu0 0.0
  %2488 = vmatpush1.msra.mxu0 0.0
  %2489 = vmatprep.subr.mxu0 0.0
  %2490 = vmatpush1.msra.mxu0 0.0
  %2491 = vmatprep.subr.mxu0 0.0
  %2492 = vmatpush1.msra.mxu0 0.0
  %2493 = vmatprep.subr.mxu0 0.0
  %2494 = vmatpush1.msra.mxu0 0.0
  %2495 = vmatprep.subr.mxu0 0.0
  %2496 = vmatpush1.msra.mxu0 0.0
  %2497 = vmatprep.subr.mxu0 0.0
  %2498 = vmatpush1.msra.mxu0 0.0
  %2499 = vmatprep.subr.mxu0 0.0
  %2500 = vmatpush1.msra.mxu0 0.0
  %2501 = vmatprep.subr.mxu0 0.0
  %2502 = vmatpush1.msra.mxu0 0.0
  %2503 = vmatprep.subr.mxu0 0.0
  %2504 = vmatpush1.msra.mxu0 0.0
  %2505 = vmatprep.subr.mxu0 0.0
  %2506 = vmatpush1.msra.mxu0 0.0
  %2507 = vmatprep.subr.mxu0 0.0
  %2508 = vmatpush1.msra.mxu0 0.0
  %2509 = vmatprep.subr.mxu0 0.0
  %2510 = vmatpush1.msra.mxu0 0.0
  %2511 = vmatprep.subr.mxu0 0.0
  %2512 = vmatpush1.msra.mxu0 0.0
  %2513 = vmatprep.subr.mxu0 0.0
  %2514 = vmatpush1.msra.mxu0 0.0
  %2515 = vmatprep.mubr.f32.mxu0 0.0
  %2516 = vmatmul.mubr.f32.gmra.mrb[0].mxu0 %v1778
  %v2517 = vpop.f32.mrb[0].mxu0
  %v2518 = vadd.f32 0.0, %v2517
  %v2519 = vpop.f32.mrb[0].mxu0
  %2520 = vmatprep.mubr.f32.mxu0 0.0
  %2521 = vmatmul.mubr.f32.gmra.mrb[0].mxu0 %v1783
  %v2522 = vpop.f32.mrb[0].mxu0
  %v2523 = vadd.f32 0.0, %v2522
  %v2524 = vpop.f32.mrb[0].mxu0
  %2525 = vmatprep.mubr.f32.mxu0 0.0
  %2526 = vmatmul.mubr.f32.gmra.mrb[0].mxu0 %v1788
  %v2527 = vpop.f32.mrb[0].mxu0
  %v2528 = vadd.f32 0.0, %v2527
  %v2529 = vpop.f32.mrb[0].mxu0
  %2530 = vdwg.mxu0
  %v2531 = vadd.f32 %v2431, %v2518
  %v2532 = vadd.f32 %v2432, %v2523
  %v2533 = vadd.f32 %v2433, %v2528
  %s2534 = scalar_lea.vmem %s5, 768
  %v2535 = vld [vmem:[%s2534] sm:$0xff]
  %v2536 = vld [vmem:[%s2534 + $0x8] sm:$0xff]
  %v2537 = vld [vmem:[%s2534 + $0x10] sm:$0xff]
  %v2538 = vld [vmem:[%s2534 + $0x18] sm:$0xff]
  %v2539 = vld [vmem:[%s2534 + $0x20] sm:$0xff]
  %v2540 = vld [vmem:[%s2534 + $0x28] sm:$0xff]
  %v2541 = vld [vmem:[%s2534 + $0x30] sm:$0xff]
  %v2542 = vld [vmem:[%s2534 + $0x38] sm:$0xff]
  %v2543 = vld [vmem:[%s2534 + $0x40] sm:$0xff]
  %v2544 = vld [vmem:[%s2534 + $0x48] sm:$0xff]
  %v2545 = vld [vmem:[%s2534 + $0x50] sm:$0xff]
  %v2546 = vld [vmem:[%s2534 + $0x58] sm:$0xff]
  %v2547 = vld [vmem:[%s2534 + $0x60] sm:$0xff]
  %v2548 = vld [vmem:[%s2534 + $0x68] sm:$0xff]
  %v2549 = vld [vmem:[%s2534 + $0x70] sm:$0xff]
  %v2550 = vld [vmem:[%s2534 + $0x78] sm:$0xff]
  %2551 = vmatprep.subr.mxu0 0.0
  %2552 = vmatpush1.msra.mxu0 %v2535
  %2553 = vmatprep.subr.mxu0 0.0
  %2554 = vmatpush1.msra.mxu0 %v2536
  %2555 = vmatprep.subr.mxu0 0.0
  %2556 = vmatpush1.msra.mxu0 %v2537
  %2557 = vmatprep.subr.mxu0 0.0
  %2558 = vmatpush1.msra.mxu0 %v2538
  %2559 = vmatprep.subr.mxu0 0.0
  %2560 = vmatpush1.msra.mxu0 %v2539
  %2561 = vmatprep.subr.mxu0 0.0
  %2562 = vmatpush1.msra.mxu0 %v2540
  %2563 = vmatprep.subr.mxu0 0.0
  %2564 = vmatpush1.msra.mxu0 %v2541
  %2565 = vmatprep.subr.mxu0 0.0
  %2566 = vmatpush1.msra.mxu0 %v2542
  %2567 = vmatprep.subr.mxu0 0.0
  %2568 = vmatpush1.msra.mxu0 %v2543
  %2569 = vmatprep.subr.mxu0 0.0
  %2570 = vmatpush1.msra.mxu0 %v2544
  %2571 = vmatprep.subr.mxu0 0.0
  %2572 = vmatpush1.msra.mxu0 %v2545
  %2573 = vmatprep.subr.mxu0 0.0
  %2574 = vmatpush1.msra.mxu0 %v2546
  %2575 = vmatprep.subr.mxu0 0.0
  %2576 = vmatpush1.msra.mxu0 %v2547
  %2577 = vmatprep.subr.mxu0 0.0
  %2578 = vmatpush1.msra.mxu0 %v2548
  %2579 = vmatprep.subr.mxu0 0.0
  %2580 = vmatpush1.msra.mxu0 %v2549
  %2581 = vmatprep.subr.mxu0 0.0
  %2582 = vmatpush1.msra.mxu0 %v2550
  %2583 = vmatprep.subr.mxu0 0.0
  %2584 = vmatpush1.msra.mxu0 0.0
  %2585 = vmatprep.subr.mxu0 0.0
  %2586 = vmatpush1.msra.mxu0 0.0
  %2587 = vmatprep.subr.mxu0 0.0
  %2588 = vmatpush1.msra.mxu0 0.0
  %2589 = vmatprep.subr.mxu0 0.0
  %2590 = vmatpush1.msra.mxu0 0.0
  %2591 = vmatprep.subr.mxu0 0.0
  %2592 = vmatpush1.msra.mxu0 0.0
  %2593 = vmatprep.subr.mxu0 0.0
  %2594 = vmatpush1.msra.mxu0 0.0
  %2595 = vmatprep.subr.mxu0 0.0
  %2596 = vmatpush1.msra.mxu0 0.0
  %2597 = vmatprep.subr.mxu0 0.0
  %2598 = vmatpush1.msra.mxu0 0.0
  %2599 = vmatprep.subr.mxu0 0.0
  %2600 = vmatpush1.msra.mxu0 0.0
  %2601 = vmatprep.subr.mxu0 0.0
  %2602 = vmatpush1.msra.mxu0 0.0
  %2603 = vmatprep.subr.mxu0 0.0
  %2604 = vmatpush1.msra.mxu0 0.0
  %2605 = vmatprep.subr.mxu0 0.0
  %2606 = vmatpush1.msra.mxu0 0.0
  %2607 = vmatprep.subr.mxu0 0.0
  %2608 = vmatpush1.msra.mxu0 0.0
  %2609 = vmatprep.subr.mxu0 0.0
  %2610 = vmatpush1.msra.mxu0 0.0
  %2611 = vmatprep.subr.mxu0 0.0
  %2612 = vmatpush1.msra.mxu0 0.0
  %2613 = vmatprep.subr.mxu0 0.0
  %2614 = vmatpush1.msra.mxu0 0.0
  %2615 = vmatprep.mubr.f32.mxu0 0.0
  %2616 = vmatmul.mubr.f32.gmra.mrb[0].mxu0 %v1793
  %v2617 = vpop.f32.mrb[0].mxu0
  %v2618 = vadd.f32 0.0, %v2617
  %v2619 = vpop.f32.mrb[0].mxu0
  %2620 = vmatprep.mubr.f32.mxu0 0.0
  %2621 = vmatmul.mubr.f32.gmra.mrb[0].mxu0 %v1798
  %v2622 = vpop.f32.mrb[0].mxu0
  %v2623 = vadd.f32 0.0, %v2622
  %v2624 = vpop.f32.mrb[0].mxu0
  %2625 = vmatprep.mubr.f32.mxu0 0.0
  %2626 = vmatmul.mubr.f32.gmra.mrb[0].mxu0 %v1803
  %v2627 = vpop.f32.mrb[0].mxu0
  %v2628 = vadd.f32 0.0, %v2627
  %v2629 = vpop.f32.mrb[0].mxu0
  %2630 = vdwg.mxu0
  %v2631 = vadd.f32 %v2531, %v2618
  %v2632 = vadd.f32 %v2532, %v2623
  %v2633 = vadd.f32 %v2533, %v2628
  %s2634 = scalar_lea.vmem %s5, 896
  %v2635 = vld [vmem:[%s2634] sm:$0xff]
  %v2636 = vld [vmem:[%s2634 + $0x8] sm:$0xff]
  %v2637 = vld [vmem:[%s2634 + $0x10] sm:$0xff]
  %v2638 = vld [vmem:[%s2634 + $0x18] sm:$0xff]
  %v2639 = vld [vmem:[%s2634 + $0x20] sm:$0xff]
  %v2640 = vld [vmem:[%s2634 + $0x28] sm:$0xff]
  %v2641 = vld [vmem:[%s2634 + $0x30] sm:$0xff]
  %v2642 = vld [vmem:[%s2634 + $0x38] sm:$0xff]
  %v2643 = vld [vmem:[%s2634 + $0x40] sm:$0xff]
  %v2644 = vld [vmem:[%s2634 + $0x48] sm:$0xff]
  %v2645 = vld [vmem:[%s2634 + $0x50] sm:$0xff]
  %v2646 = vld [vmem:[%s2634 + $0x58] sm:$0xff]
  %v2647 = vld [vmem:[%s2634 + $0x60] sm:$0xff]
  %v2648 = vld [vmem:[%s2634 + $0x68] sm:$0xff]
  %v2649 = vld [vmem:[%s2634 + $0x70] sm:$0xff]
  %v2650 = vld [vmem:[%s2634 + $0x78] sm:$0xff]
  %2651 = vmatprep.subr.mxu0 0.0
  %2652 = vmatpush1.msra.mxu0 %v2635
  %2653 = vmatprep.subr.mxu0 0.0
  %2654 = vmatpush1.msra.mxu0 %v2636
  %2655 = vmatprep.subr.mxu0 0.0
  %2656 = vmatpush1.msra.mxu0 %v2637
  %2657 = vmatprep.subr.mxu0 0.0
  %2658 = vmatpush1.msra.mxu0 %v2638
  %2659 = vmatprep.subr.mxu0 0.0
  %2660 = vmatpush1.msra.mxu0 %v2639
  %2661 = vmatprep.subr.mxu0 0.0
  %2662 = vmatpush1.msra.mxu0 %v2640
  %2663 = vmatprep.subr.mxu0 0.0
  %2664 = vmatpush1.msra.mxu0 %v2641
  %2665 = vmatprep.subr.mxu0 0.0
  %2666 = vmatpush1.msra.mxu0 %v2642
  %2667 = vmatprep.subr.mxu0 0.0
  %2668 = vmatpush1.msra.mxu0 %v2643
  %2669 = vmatprep.subr.mxu0 0.0
  %2670 = vmatpush1.msra.mxu0 %v2644
  %2671 = vmatprep.subr.mxu0 0.0
  %2672 = vmatpush1.msra.mxu0 %v2645
  %2673 = vmatprep.subr.mxu0 0.0
  %2674 = vmatpush1.msra.mxu0 %v2646
  %2675 = vmatprep.subr.mxu0 0.0
  %2676 = vmatpush1.msra.mxu0 %v2647
  %2677 = vmatprep.subr.mxu0 0.0
  %2678 = vmatpush1.msra.mxu0 %v2648
  %2679 = vmatprep.subr.mxu0 0.0
  %2680 = vmatpush1.msra.mxu0 %v2649
  %2681 = vmatprep.subr.mxu0 0.0
  %2682 = vmatpush1.msra.mxu0 %v2650
  %2683 = vmatprep.subr.mxu0 0.0
  %2684 = vmatpush1.msra.mxu0 0.0
  %2685 = vmatprep.subr.mxu0 0.0
  %2686 = vmatpush1.msra.mxu0 0.0
  %2687 = vmatprep.subr.mxu0 0.0
  %2688 = vmatpush1.msra.mxu0 0.0
  %2689 = vmatprep.subr.mxu0 0.0
  %2690 = vmatpush1.msra.mxu0 0.0
  %2691 = vmatprep.subr.mxu0 0.0
  %2692 = vmatpush1.msra.mxu0 0.0
  %2693 = vmatprep.subr.mxu0 0.0
  %2694 = vmatpush1.msra.mxu0 0.0
  %2695 = vmatprep.subr.mxu0 0.0
  %2696 = vmatpush1.msra.mxu0 0.0
  %2697 = vmatprep.subr.mxu0 0.0
  %2698 = vmatpush1.msra.mxu0 0.0
  %2699 = vmatprep.subr.mxu0 0.0
  %2700 = vmatpush1.msra.mxu0 0.0
  %2701 = vmatprep.subr.mxu0 0.0
  %2702 = vmatpush1.msra.mxu0 0.0
  %2703 = vmatprep.subr.mxu0 0.0
  %2704 = vmatpush1.msra.mxu0 0.0
  %2705 = vmatprep.subr.mxu0 0.0
  %2706 = vmatpush1.msra.mxu0 0.0
  %2707 = vmatprep.subr.mxu0 0.0
  %2708 = vmatpush1.msra.mxu0 0.0
  %2709 = vmatprep.subr.mxu0 0.0
  %2710 = vmatpush1.msra.mxu0 0.0
  %2711 = vmatprep.subr.mxu0 0.0
  %2712 = vmatpush1.msra.mxu0 0.0
  %2713 = vmatprep.subr.mxu0 0.0
  %2714 = vmatpush1.msra.mxu0 0.0
  %2715 = vmatprep.mubr.f32.mxu0 0.0
  %2716 = vmatmul.mubr.f32.gmra.mrb[0].mxu0 %v1808
  %v2717 = vpop.f32.mrb[0].mxu0
  %v2718 = vadd.f32 0.0, %v2717
  %v2719 = vpop.f32.mrb[0].mxu0
  %2720 = vmatprep.mubr.f32.mxu0 0.0
  %2721 = vmatmul.mubr.f32.gmra.mrb[0].mxu0 %v1813
  %v2722 = vpop.f32.mrb[0].mxu0
  %v2723 = vadd.f32 0.0, %v2722
  %v2724 = vpop.f32.mrb[0].mxu0
  %2725 = vmatprep.mubr.f32.mxu0 0.0
  %2726 = vmatmul.mubr.f32.gmra.mrb[0].mxu0 %v1818
  %v2727 = vpop.f32.mrb[0].mxu0
  %v2728 = vadd.f32 0.0, %v2727
  %v2729 = vpop.f32.mrb[0].mxu0
  %2730 = vdwg.mxu0
  %v2731 = vadd.f32 %v2631, %v2718
  %v2732 = vadd.f32 %v2632, %v2723
  %v2733 = vadd.f32 %v2633, %v2728
  %s2734 = scalar_lea.vmem %s5, 1024
  %v2735 = vld [vmem:[%s2734] sm:$0xff]
  %v2736 = vld [vmem:[%s2734 + $0x8] sm:$0xff]
  %v2737 = vld [vmem:[%s2734 + $0x10] sm:$0xff]
  %v2738 = vld [vmem:[%s2734 + $0x18] sm:$0xff]
  %v2739 = vld [vmem:[%s2734 + $0x20] sm:$0xff]
  %v2740 = vld [vmem:[%s2734 + $0x28] sm:$0xff]
  %v2741 = vld [vmem:[%s2734 + $0x30] sm:$0xff]
  %v2742 = vld [vmem:[%s2734 + $0x38] sm:$0xff]
  %v2743 = vld [vmem:[%s2734 + $0x40] sm:$0xff]
  %v2744 = vld [vmem:[%s2734 + $0x48] sm:$0xff]
  %v2745 = vld [vmem:[%s2734 + $0x50] sm:$0xff]
  %v2746 = vld [vmem:[%s2734 + $0x58] sm:$0xff]
  %v2747 = vld [vmem:[%s2734 + $0x60] sm:$0xff]
  %v2748 = vld [vmem:[%s2734 + $0x68] sm:$0xff]
  %v2749 = vld [vmem:[%s2734 + $0x70] sm:$0xff]
  %v2750 = vld [vmem:[%s2734 + $0x78] sm:$0xff]
  %2751 = vmatprep.subr.mxu0 0.0
  %2752 = vmatpush1.msra.mxu0 %v2735
  %2753 = vmatprep.subr.mxu0 0.0
  %2754 = vmatpush1.msra.mxu0 %v2736
  %2755 = vmatprep.subr.mxu0 0.0
  %2756 = vmatpush1.msra.mxu0 %v2737
  %2757 = vmatprep.subr.mxu0 0.0
  %2758 = vmatpush1.msra.mxu0 %v2738
  %2759 = vmatprep.subr.mxu0 0.0
  %2760 = vmatpush1.msra.mxu0 %v2739
  %2761 = vmatprep.subr.mxu0 0.0
  %2762 = vmatpush1.msra.mxu0 %v2740
  %2763 = vmatprep.subr.mxu0 0.0
  %2764 = vmatpush1.msra.mxu0 %v2741
  %2765 = vmatprep.subr.mxu0 0.0
  %2766 = vmatpush1.msra.mxu0 %v2742
  %2767 = vmatprep.subr.mxu0 0.0
  %2768 = vmatpush1.msra.mxu0 %v2743
  %2769 = vmatprep.subr.mxu0 0.0
  %2770 = vmatpush1.msra.mxu0 %v2744
  %2771 = vmatprep.subr.mxu0 0.0
  %2772 = vmatpush1.msra.mxu0 %v2745
  %2773 = vmatprep.subr.mxu0 0.0
  %2774 = vmatpush1.msra.mxu0 %v2746
  %2775 = vmatprep.subr.mxu0 0.0
  %2776 = vmatpush1.msra.mxu0 %v2747
  %2777 = vmatprep.subr.mxu0 0.0
  %2778 = vmatpush1.msra.mxu0 %v2748
  %2779 = vmatprep.subr.mxu0 0.0
  %2780 = vmatpush1.msra.mxu0 %v2749
  %2781 = vmatprep.subr.mxu0 0.0
  %2782 = vmatpush1.msra.mxu0 %v2750
  %2783 = vmatprep.subr.mxu0 0.0
  %2784 = vmatpush1.msra.mxu0 0.0
  %2785 = vmatprep.subr.mxu0 0.0
  %2786 = vmatpush1.msra.mxu0 0.0
  %2787 = vmatprep.subr.mxu0 0.0
  %2788 = vmatpush1.msra.mxu0 0.0
  %2789 = vmatprep.subr.mxu0 0.0
  %2790 = vmatpush1.msra.mxu0 0.0
  %2791 = vmatprep.subr.mxu0 0.0
  %2792 = vmatpush1.msra.mxu0 0.0
  %2793 = vmatprep.subr.mxu0 0.0
  %2794 = vmatpush1.msra.mxu0 0.0
  %2795 = vmatprep.subr.mxu0 0.0
  %2796 = vmatpush1.msra.mxu0 0.0
  %2797 = vmatprep.subr.mxu0 0.0
  %2798 = vmatpush1.msra.mxu0 0.0
  %2799 = vmatprep.subr.mxu0 0.0
  %2800 = vmatpush1.msra.mxu0 0.0
  %2801 = vmatprep.subr.mxu0 0.0
  %2802 = vmatpush1.msra.mxu0 0.0
  %2803 = vmatprep.subr.mxu0 0.0
  %2804 = vmatpush1.msra.mxu0 0.0
  %2805 = vmatprep.subr.mxu0 0.0
  %2806 = vmatpush1.msra.mxu0 0.0
  %2807 = vmatprep.subr.mxu0 0.0
  %2808 = vmatpush1.msra.mxu0 0.0
  %2809 = vmatprep.subr.mxu0 0.0
  %2810 = vmatpush1.msra.mxu0 0.0
  %2811 = vmatprep.subr.mxu0 0.0
  %2812 = vmatpush1.msra.mxu0 0.0
  %2813 = vmatprep.subr.mxu0 0.0
  %2814 = vmatpush1.msra.mxu0 0.0
  %2815 = vmatprep.mubr.f32.mxu0 0.0
  %2816 = vmatmul.mubr.f32.gmra.mrb[0].mxu0 %v1823
  %v2817 = vpop.f32.mrb[0].mxu0
  %v2818 = vadd.f32 0.0, %v2817
  %v2819 = vpop.f32.mrb[0].mxu0
  %2820 = vmatprep.mubr.f32.mxu0 0.0
  %2821 = vmatmul.mubr.f32.gmra.mrb[0].mxu0 %v1828
  %v2822 = vpop.f32.mrb[0].mxu0
  %v2823 = vadd.f32 0.0, %v2822
  %v2824 = vpop.f32.mrb[0].mxu0
  %2825 = vmatprep.mubr.f32.mxu0 0.0
  %2826 = vmatmul.mubr.f32.gmra.mrb[0].mxu0 %v1833
  %v2827 = vpop.f32.mrb[0].mxu0
  %v2828 = vadd.f32 0.0, %v2827
  %v2829 = vpop.f32.mrb[0].mxu0
  %2830 = vdwg.mxu0
  %v2831 = vadd.f32 %v2731, %v2818
  %v2832 = vadd.f32 %v2732, %v2823
  %v2833 = vadd.f32 %v2733, %v2828
  %s2834 = scalar_lea.vmem %s5, 1152
  %v2835 = vld [vmem:[%s2834] sm:$0xff]
  %v2836 = vld [vmem:[%s2834 + $0x8] sm:$0xff]
  %v2837 = vld [vmem:[%s2834 + $0x10] sm:$0xff]
  %v2838 = vld [vmem:[%s2834 + $0x18] sm:$0xff]
  %v2839 = vld [vmem:[%s2834 + $0x20] sm:$0xff]
  %v2840 = vld [vmem:[%s2834 + $0x28] sm:$0xff]
  %v2841 = vld [vmem:[%s2834 + $0x30] sm:$0xff]
  %v2842 = vld [vmem:[%s2834 + $0x38] sm:$0xff]
  %v2843 = vld [vmem:[%s2834 + $0x40] sm:$0xff]
  %v2844 = vld [vmem:[%s2834 + $0x48] sm:$0xff]
  %v2845 = vld [vmem:[%s2834 + $0x50] sm:$0xff]
  %v2846 = vld [vmem:[%s2834 + $0x58] sm:$0xff]
  %v2847 = vld [vmem:[%s2834 + $0x60] sm:$0xff]
  %v2848 = vld [vmem:[%s2834 + $0x68] sm:$0xff]
  %v2849 = vld [vmem:[%s2834 + $0x70] sm:$0xff]
  %v2850 = vld [vmem:[%s2834 + $0x78] sm:$0xff]
  %2851 = vmatprep.subr.mxu0 0.0
  %2852 = vmatpush1.msra.mxu0 %v2835
  %2853 = vmatprep.subr.mxu0 0.0
  %2854 = vmatpush1.msra.mxu0 %v2836
  %2855 = vmatprep.subr.mxu0 0.0
  %2856 = vmatpush1.msra.mxu0 %v2837
  %2857 = vmatprep.subr.mxu0 0.0
  %2858 = vmatpush1.msra.mxu0 %v2838
  %2859 = vmatprep.subr.mxu0 0.0
  %2860 = vmatpush1.msra.mxu0 %v2839
  %2861 = vmatprep.subr.mxu0 0.0
  %2862 = vmatpush1.msra.mxu0 %v2840
  %2863 = vmatprep.subr.mxu0 0.0
  %2864 = vmatpush1.msra.mxu0 %v2841
  %2865 = vmatprep.subr.mxu0 0.0
  %2866 = vmatpush1.msra.mxu0 %v2842
  %2867 = vmatprep.subr.mxu0 0.0
  %2868 = vmatpush1.msra.mxu0 %v2843
  %2869 = vmatprep.subr.mxu0 0.0
  %2870 = vmatpush1.msra.mxu0 %v2844
  %2871 = vmatprep.subr.mxu0 0.0
  %2872 = vmatpush1.msra.mxu0 %v2845
  %2873 = vmatprep.subr.mxu0 0.0
  %2874 = vmatpush1.msra.mxu0 %v2846
  %2875 = vmatprep.subr.mxu0 0.0
  %2876 = vmatpush1.msra.mxu0 %v2847
  %2877 = vmatprep.subr.mxu0 0.0
  %2878 = vmatpush1.msra.mxu0 %v2848
  %2879 = vmatprep.subr.mxu0 0.0
  %2880 = vmatpush1.msra.mxu0 %v2849
  %2881 = vmatprep.subr.mxu0 0.0
  %2882 = vmatpush1.msra.mxu0 %v2850
  %2883 = vmatprep.subr.mxu0 0.0
  %2884 = vmatpush1.msra.mxu0 0.0
  %2885 = vmatprep.subr.mxu0 0.0
  %2886 = vmatpush1.msra.mxu0 0.0
  %2887 = vmatprep.subr.mxu0 0.0
  %2888 = vmatpush1.msra.mxu0 0.0
  %2889 = vmatprep.subr.mxu0 0.0
  %2890 = vmatpush1.msra.mxu0 0.0
  %2891 = vmatprep.subr.mxu0 0.0
  %2892 = vmatpush1.msra.mxu0 0.0
  %2893 = vmatprep.subr.mxu0 0.0
  %2894 = vmatpush1.msra.mxu0 0.0
  %2895 = vmatprep.subr.mxu0 0.0
  %2896 = vmatpush1.msra.mxu0 0.0
  %2897 = vmatprep.subr.mxu0 0.0
  %2898 = vmatpush1.msra.mxu0 0.0
  %2899 = vmatprep.subr.mxu0 0.0
  %2900 = vmatpush1.msra.mxu0 0.0
  %2901 = vmatprep.subr.mxu0 0.0
  %2902 = vmatpush1.msra.mxu0 0.0
  %2903 = vmatprep.subr.mxu0 0.0
  %2904 = vmatpush1.msra.mxu0 0.0
  %2905 = vmatprep.subr.mxu0 0.0
  %2906 = vmatpush1.msra.mxu0 0.0
  %2907 = vmatprep.subr.mxu0 0.0
  %2908 = vmatpush1.msra.mxu0 0.0
  %2909 = vmatprep.subr.mxu0 0.0
  %2910 = vmatpush1.msra.mxu0 0.0
  %2911 = vmatprep.subr.mxu0 0.0
  %2912 = vmatpush1.msra.mxu0 0.0
  %2913 = vmatprep.subr.mxu0 0.0
  %2914 = vmatpush1.msra.mxu0 0.0
  %2915 = vmatprep.mubr.f32.mxu0 0.0
  %2916 = vmatmul.mubr.f32.gmra.mrb[0].mxu0 %v1838
  %v2917 = vpop.f32.mrb[0].mxu0
  %v2918 = vadd.f32 0.0, %v2917
  %v2919 = vpop.f32.mrb[0].mxu0
  %2920 = vmatprep.mubr.f32.mxu0 0.0
  %2921 = vmatmul.mubr.f32.gmra.mrb[0].mxu0 %v1843
  %v2922 = vpop.f32.mrb[0].mxu0
  %v2923 = vadd.f32 0.0, %v2922
  %v2924 = vpop.f32.mrb[0].mxu0
  %2925 = vmatprep.mubr.f32.mxu0 0.0
  %2926 = vmatmul.mubr.f32.gmra.mrb[0].mxu0 %v1848
  %v2927 = vpop.f32.mrb[0].mxu0
  %v2928 = vadd.f32 0.0, %v2927
  %v2929 = vpop.f32.mrb[0].mxu0
  %2930 = vdwg.mxu0
  %v2931 = vadd.f32 %v2831, %v2918
  %v2932 = vadd.f32 %v2832, %v2923
  %v2933 = vadd.f32 %v2833, %v2928
  %s2934 = scalar_lea.vmem %s5, 1280
  %v2935 = vld [vmem:[%s2934] sm:$0xff]
  %v2936 = vld [vmem:[%s2934 + $0x8] sm:$0xff]
  %v2937 = vld [vmem:[%s2934 + $0x10] sm:$0xff]
  %v2938 = vld [vmem:[%s2934 + $0x18] sm:$0xff]
  %v2939 = vld [vmem:[%s2934 + $0x20] sm:$0xff]
  %v2940 = vld [vmem:[%s2934 + $0x28] sm:$0xff]
  %v2941 = vld [vmem:[%s2934 + $0x30] sm:$0xff]
  %v2942 = vld [vmem:[%s2934 + $0x38] sm:$0xff]
  %v2943 = vld [vmem:[%s2934 + $0x40] sm:$0xff]
  %v2944 = vld [vmem:[%s2934 + $0x48] sm:$0xff]
  %v2945 = vld [vmem:[%s2934 + $0x50] sm:$0xff]
  %v2946 = vld [vmem:[%s2934 + $0x58] sm:$0xff]
  %v2947 = vld [vmem:[%s2934 + $0x60] sm:$0xff]
  %v2948 = vld [vmem:[%s2934 + $0x68] sm:$0xff]
  %v2949 = vld [vmem:[%s2934 + $0x70] sm:$0xff]
  %v2950 = vld [vmem:[%s2934 + $0x78] sm:$0xff]
  %2951 = vmatprep.subr.mxu0 0.0
  %2952 = vmatpush1.msra.mxu0 %v2935
  %2953 = vmatprep.subr.mxu0 0.0
  %2954 = vmatpush1.msra.mxu0 %v2936
  %2955 = vmatprep.subr.mxu0 0.0
  %2956 = vmatpush1.msra.mxu0 %v2937
  %2957 = vmatprep.subr.mxu0 0.0
  %2958 = vmatpush1.msra.mxu0 %v2938
  %2959 = vmatprep.subr.mxu0 0.0
  %2960 = vmatpush1.msra.mxu0 %v2939
  %2961 = vmatprep.subr.mxu0 0.0
  %2962 = vmatpush1.msra.mxu0 %v2940
  %2963 = vmatprep.subr.mxu0 0.0
  %2964 = vmatpush1.msra.mxu0 %v2941
  %2965 = vmatprep.subr.mxu0 0.0
  %2966 = vmatpush1.msra.mxu0 %v2942
  %2967 = vmatprep.subr.mxu0 0.0
  %2968 = vmatpush1.msra.mxu0 %v2943
  %2969 = vmatprep.subr.mxu0 0.0
  %2970 = vmatpush1.msra.mxu0 %v2944
  %2971 = vmatprep.subr.mxu0 0.0
  %2972 = vmatpush1.msra.mxu0 %v2945
  %2973 = vmatprep.subr.mxu0 0.0
  %2974 = vmatpush1.msra.mxu0 %v2946
  %2975 = vmatprep.subr.mxu0 0.0
  %2976 = vmatpush1.msra.mxu0 %v2947
  %2977 = vmatprep.subr.mxu0 0.0
  %2978 = vmatpush1.msra.mxu0 %v2948
  %2979 = vmatprep.subr.mxu0 0.0
  %2980 = vmatpush1.msra.mxu0 %v2949
  %2981 = vmatprep.subr.mxu0 0.0
  %2982 = vmatpush1.msra.mxu0 %v2950
  %2983 = vmatprep.subr.mxu0 0.0
  %2984 = vmatpush1.msra.mxu0 0.0
  %2985 = vmatprep.subr.mxu0 0.0
  %2986 = vmatpush1.msra.mxu0 0.0
  %2987 = vmatprep.subr.mxu0 0.0
  %2988 = vmatpush1.msra.mxu0 0.0
  %2989 = vmatprep.subr.mxu0 0.0
  %2990 = vmatpush1.msra.mxu0 0.0
  %2991 = vmatprep.subr.mxu0 0.0
  %2992 = vmatpush1.msra.mxu0 0.0
  %2993 = vmatprep.subr.mxu0 0.0
  %2994 = vmatpush1.msra.mxu0 0.0
  %2995 = vmatprep.subr.mxu0 0.0
  %2996 = vmatpush1.msra.mxu0 0.0
  %2997 = vmatprep.subr.mxu0 0.0
  %2998 = vmatpush1.msra.mxu0 0.0
  %2999 = vmatprep.subr.mxu0 0.0
  %3000 = vmatpush1.msra.mxu0 0.0
  %3001 = vmatprep.subr.mxu0 0.0
  %3002 = vmatpush1.msra.mxu0 0.0
  %3003 = vmatprep.subr.mxu0 0.0
  %3004 = vmatpush1.msra.mxu0 0.0
  %3005 = vmatprep.subr.mxu0 0.0
  %3006 = vmatpush1.msra.mxu0 0.0
  %3007 = vmatprep.subr.mxu0 0.0
  %3008 = vmatpush1.msra.mxu0 0.0
  %3009 = vmatprep.subr.mxu0 0.0
  %3010 = vmatpush1.msra.mxu0 0.0
  %3011 = vmatprep.subr.mxu0 0.0
  %3012 = vmatpush1.msra.mxu0 0.0
  %3013 = vmatprep.subr.mxu0 0.0
  %3014 = vmatpush1.msra.mxu0 0.0
  %3015 = vmatprep.mubr.f32.mxu0 0.0
  %3016 = vmatmul.mubr.f32.gmra.mrb[0].mxu0 %v1853
  %v3017 = vpop.f32.mrb[0].mxu0
  %v3018 = vadd.f32 0.0, %v3017
  %v3019 = vpop.f32.mrb[0].mxu0
  %3020 = vmatprep.mubr.f32.mxu0 0.0
  %3021 = vmatmul.mubr.f32.gmra.mrb[0].mxu0 %v1858
  %v3022 = vpop.f32.mrb[0].mxu0
  %v3023 = vadd.f32 0.0, %v3022
  %v3024 = vpop.f32.mrb[0].mxu0
  %3025 = vmatprep.mubr.f32.mxu0 0.0
  %3026 = vmatmul.mubr.f32.gmra.mrb[0].mxu0 %v1863
  %v3027 = vpop.f32.mrb[0].mxu0
  %v3028 = vadd.f32 0.0, %v3027
  %v3029 = vpop.f32.mrb[0].mxu0
  %3030 = vdwg.mxu0
  %v3031 = vadd.f32 %v2931, %v3018
  %v3032 = vadd.f32 %v2932, %v3023
  %v3033 = vadd.f32 %v2933, %v3028
  %s3034 = scalar_lea.vmem %s5, 1408
  %v3035 = vld [vmem:[%s3034] sm:$0xff]
  %v3036 = vld [vmem:[%s3034 + $0x8] sm:$0xff]
  %v3037 = vld [vmem:[%s3034 + $0x10] sm:$0xff]
  %v3038 = vld [vmem:[%s3034 + $0x18] sm:$0xff]
  %v3039 = vld [vmem:[%s3034 + $0x20] sm:$0xff]
  %v3040 = vld [vmem:[%s3034 + $0x28] sm:$0xff]
  %v3041 = vld [vmem:[%s3034 + $0x30] sm:$0xff]
  %v3042 = vld [vmem:[%s3034 + $0x38] sm:$0xff]
  %v3043 = vld [vmem:[%s3034 + $0x40] sm:$0xff]
  %v3044 = vld [vmem:[%s3034 + $0x48] sm:$0xff]
  %v3045 = vld [vmem:[%s3034 + $0x50] sm:$0xff]
  %v3046 = vld [vmem:[%s3034 + $0x58] sm:$0xff]
  %v3047 = vld [vmem:[%s3034 + $0x60] sm:$0xff]
  %v3048 = vld [vmem:[%s3034 + $0x68] sm:$0xff]
  %v3049 = vld [vmem:[%s3034 + $0x70] sm:$0xff]
  %v3050 = vld [vmem:[%s3034 + $0x78] sm:$0xff]
  %3051 = vmatprep.subr.mxu0 0.0
  %3052 = vmatpush1.msra.mxu0 %v3035
  %3053 = vmatprep.subr.mxu0 0.0
  %3054 = vmatpush1.msra.mxu0 %v3036
  %3055 = vmatprep.subr.mxu0 0.0
  %3056 = vmatpush1.msra.mxu0 %v3037
  %3057 = vmatprep.subr.mxu0 0.0
  %3058 = vmatpush1.msra.mxu0 %v3038
  %3059 = vmatprep.subr.mxu0 0.0
  %3060 = vmatpush1.msra.mxu0 %v3039
  %3061 = vmatprep.subr.mxu0 0.0
  %3062 = vmatpush1.msra.mxu0 %v3040
  %3063 = vmatprep.subr.mxu0 0.0
  %3064 = vmatpush1.msra.mxu0 %v3041
  %3065 = vmatprep.subr.mxu0 0.0
  %3066 = vmatpush1.msra.mxu0 %v3042
  %3067 = vmatprep.subr.mxu0 0.0
  %3068 = vmatpush1.msra.mxu0 %v3043
  %3069 = vmatprep.subr.mxu0 0.0
  %3070 = vmatpush1.msra.mxu0 %v3044
  %3071 = vmatprep.subr.mxu0 0.0
  %3072 = vmatpush1.msra.mxu0 %v3045
  %3073 = vmatprep.subr.mxu0 0.0
  %3074 = vmatpush1.msra.mxu0 %v3046
  %3075 = vmatprep.subr.mxu0 0.0
  %3076 = vmatpush1.msra.mxu0 %v3047
  %3077 = vmatprep.subr.mxu0 0.0
  %3078 = vmatpush1.msra.mxu0 %v3048
  %3079 = vmatprep.subr.mxu0 0.0
  %3080 = vmatpush1.msra.mxu0 %v3049
  %3081 = vmatprep.subr.mxu0 0.0
  %3082 = vmatpush1.msra.mxu0 %v3050
  %3083 = vmatprep.subr.mxu0 0.0
  %3084 = vmatpush1.msra.mxu0 0.0
  %3085 = vmatprep.subr.mxu0 0.0
  %3086 = vmatpush1.msra.mxu0 0.0
  %3087 = vmatprep.subr.mxu0 0.0
  %3088 = vmatpush1.msra.mxu0 0.0
  %3089 = vmatprep.subr.mxu0 0.0
  %3090 = vmatpush1.msra.mxu0 0.0
  %3091 = vmatprep.subr.mxu0 0.0
  %3092 = vmatpush1.msra.mxu0 0.0
  %3093 = vmatprep.subr.mxu0 0.0
  %3094 = vmatpush1.msra.mxu0 0.0
  %3095 = vmatprep.subr.mxu0 0.0
  %3096 = vmatpush1.msra.mxu0 0.0
  %3097 = vmatprep.subr.mxu0 0.0
  %3098 = vmatpush1.msra.mxu0 0.0
  %3099 = vmatprep.subr.mxu0 0.0
  %3100 = vmatpush1.msra.mxu0 0.0
  %3101 = vmatprep.subr.mxu0 0.0
  %3102 = vmatpush1.msra.mxu0 0.0
  %3103 = vmatprep.subr.mxu0 0.0
  %3104 = vmatpush1.msra.mxu0 0.0
  %3105 = vmatprep.subr.mxu0 0.0
  %3106 = vmatpush1.msra.mxu0 0.0
  %3107 = vmatprep.subr.mxu0 0.0
  %3108 = vmatpush1.msra.mxu0 0.0
  %3109 = vmatprep.subr.mxu0 0.0
  %3110 = vmatpush1.msra.mxu0 0.0
  %3111 = vmatprep.subr.mxu0 0.0
  %3112 = vmatpush1.msra.mxu0 0.0
  %3113 = vmatprep.subr.mxu0 0.0
  %3114 = vmatpush1.msra.mxu0 0.0
  %3115 = vmatprep.mubr.f32.mxu0 0.0
  %3116 = vmatmul.mubr.f32.gmra.mrb[0].mxu0 %v1868
  %v3117 = vpop.f32.mrb[0].mxu0
  %v3118 = vadd.f32 0.0, %v3117
  %v3119 = vpop.f32.mrb[0].mxu0
  %3120 = vmatprep.mubr.f32.mxu0 0.0
  %3121 = vmatmul.mubr.f32.gmra.mrb[0].mxu0 %v1873
  %v3122 = vpop.f32.mrb[0].mxu0
  %v3123 = vadd.f32 0.0, %v3122
  %v3124 = vpop.f32.mrb[0].mxu0
  %3125 = vmatprep.mubr.f32.mxu0 0.0
  %3126 = vmatmul.mubr.f32.gmra.mrb[0].mxu0 %v1878
  %v3127 = vpop.f32.mrb[0].mxu0
  %v3128 = vadd.f32 0.0, %v3127
  %v3129 = vpop.f32.mrb[0].mxu0
  %3130 = vdwg.mxu0
  %v3131 = vadd.f32 %v3031, %v3118
  %v3132 = vadd.f32 %v3032, %v3123
  %v3133 = vadd.f32 %v3033, %v3128
  %s3134 = scalar_lea.vmem %s5, 1536
  %v3135 = vld [vmem:[%s3134] sm:$0xff]
  %v3136 = vld [vmem:[%s3134 + $0x8] sm:$0xff]
  %v3137 = vld [vmem:[%s3134 + $0x10] sm:$0xff]
  %v3138 = vld [vmem:[%s3134 + $0x18] sm:$0xff]
  %v3139 = vld [vmem:[%s3134 + $0x20] sm:$0xff]
  %v3140 = vld [vmem:[%s3134 + $0x28] sm:$0xff]
  %v3141 = vld [vmem:[%s3134 + $0x30] sm:$0xff]
  %v3142 = vld [vmem:[%s3134 + $0x38] sm:$0xff]
  %v3143 = vld [vmem:[%s3134 + $0x40] sm:$0xff]
  %v3144 = vld [vmem:[%s3134 + $0x48] sm:$0xff]
  %v3145 = vld [vmem:[%s3134 + $0x50] sm:$0xff]
  %v3146 = vld [vmem:[%s3134 + $0x58] sm:$0xff]
  %v3147 = vld [vmem:[%s3134 + $0x60] sm:$0xff]
  %v3148 = vld [vmem:[%s3134 + $0x68] sm:$0xff]
  %v3149 = vld [vmem:[%s3134 + $0x70] sm:$0xff]
  %v3150 = vld [vmem:[%s3134 + $0x78] sm:$0xff]
  %3151 = vmatprep.subr.mxu0 0.0
  %3152 = vmatpush1.msra.mxu0 %v3135
  %3153 = vmatprep.subr.mxu0 0.0
  %3154 = vmatpush1.msra.mxu0 %v3136
  %3155 = vmatprep.subr.mxu0 0.0
  %3156 = vmatpush1.msra.mxu0 %v3137
  %3157 = vmatprep.subr.mxu0 0.0
  %3158 = vmatpush1.msra.mxu0 %v3138
  %3159 = vmatprep.subr.mxu0 0.0
  %3160 = vmatpush1.msra.mxu0 %v3139
  %3161 = vmatprep.subr.mxu0 0.0
  %3162 = vmatpush1.msra.mxu0 %v3140
  %3163 = vmatprep.subr.mxu0 0.0
  %3164 = vmatpush1.msra.mxu0 %v3141
  %3165 = vmatprep.subr.mxu0 0.0
  %3166 = vmatpush1.msra.mxu0 %v3142
  %3167 = vmatprep.subr.mxu0 0.0
  %3168 = vmatpush1.msra.mxu0 %v3143
  %3169 = vmatprep.subr.mxu0 0.0
  %3170 = vmatpush1.msra.mxu0 %v3144
  %3171 = vmatprep.subr.mxu0 0.0
  %3172 = vmatpush1.msra.mxu0 %v3145
  %3173 = vmatprep.subr.mxu0 0.0
  %3174 = vmatpush1.msra.mxu0 %v3146
  %3175 = vmatprep.subr.mxu0 0.0
  %3176 = vmatpush1.msra.mxu0 %v3147
  %3177 = vmatprep.subr.mxu0 0.0
  %3178 = vmatpush1.msra.mxu0 %v3148
  %3179 = vmatprep.subr.mxu0 0.0
  %3180 = vmatpush1.msra.mxu0 %v3149
  %3181 = vmatprep.subr.mxu0 0.0
  %3182 = vmatpush1.msra.mxu0 %v3150
  %3183 = vmatprep.subr.mxu0 0.0
  %3184 = vmatpush1.msra.mxu0 0.0
  %3185 = vmatprep.subr.mxu0 0.0
  %3186 = vmatpush1.msra.mxu0 0.0
  %3187 = vmatprep.subr.mxu0 0.0
  %3188 = vmatpush1.msra.mxu0 0.0
  %3189 = vmatprep.subr.mxu0 0.0
  %3190 = vmatpush1.msra.mxu0 0.0
  %3191 = vmatprep.subr.mxu0 0.0
  %3192 = vmatpush1.msra.mxu0 0.0
  %3193 = vmatprep.subr.mxu0 0.0
  %3194 = vmatpush1.msra.mxu0 0.0
  %3195 = vmatprep.subr.mxu0 0.0
  %3196 = vmatpush1.msra.mxu0 0.0
  %3197 = vmatprep.subr.mxu0 0.0
  %3198 = vmatpush1.msra.mxu0 0.0
  %3199 = vmatprep.subr.mxu0 0.0
  %3200 = vmatpush1.msra.mxu0 0.0
  %3201 = vmatprep.subr.mxu0 0.0
  %3202 = vmatpush1.msra.mxu0 0.0
  %3203 = vmatprep.subr.mxu0 0.0
  %3204 = vmatpush1.msra.mxu0 0.0
  %3205 = vmatprep.subr.mxu0 0.0
  %3206 = vmatpush1.msra.mxu0 0.0
  %3207 = vmatprep.subr.mxu0 0.0
  %3208 = vmatpush1.msra.mxu0 0.0
  %3209 = vmatprep.subr.mxu0 0.0
  %3210 = vmatpush1.msra.mxu0 0.0
  %3211 = vmatprep.subr.mxu0 0.0
  %3212 = vmatpush1.msra.mxu0 0.0
  %3213 = vmatprep.subr.mxu0 0.0
  %3214 = vmatpush1.msra.mxu0 0.0
  %3215 = vmatprep.mubr.f32.mxu0 0.0
  %3216 = vmatmul.mubr.f32.gmra.mrb[0].mxu0 %v1883
  %v3217 = vpop.f32.mrb[0].mxu0
  %v3218 = vadd.f32 0.0, %v3217
  %v3219 = vpop.f32.mrb[0].mxu0
  %3220 = vmatprep.mubr.f32.mxu0 0.0
  %3221 = vmatmul.mubr.f32.gmra.mrb[0].mxu0 %v1888
  %v3222 = vpop.f32.mrb[0].mxu0
  %v3223 = vadd.f32 0.0, %v3222
  %v3224 = vpop.f32.mrb[0].mxu0
  %3225 = vmatprep.mubr.f32.mxu0 0.0
  %3226 = vmatmul.mubr.f32.gmra.mrb[0].mxu0 %v1893
  %v3227 = vpop.f32.mrb[0].mxu0
  %v3228 = vadd.f32 0.0, %v3227
  %v3229 = vpop.f32.mrb[0].mxu0
  %3230 = vdwg.mxu0
  %v3231 = vadd.f32 %v3131, %v3218
  %v3232 = vadd.f32 %v3132, %v3223
  %v3233 = vadd.f32 %v3133, %v3228
  %s3234 = scalar_lea.vmem %s5, 1664
  %v3235 = vld [vmem:[%s3234] sm:$0xff]
  %v3236 = vld [vmem:[%s3234 + $0x8] sm:$0xff]
  %v3237 = vld [vmem:[%s3234 + $0x10] sm:$0xff]
  %v3238 = vld [vmem:[%s3234 + $0x18] sm:$0xff]
  %v3239 = vld [vmem:[%s3234 + $0x20] sm:$0xff]
  %v3240 = vld [vmem:[%s3234 + $0x28] sm:$0xff]
  %v3241 = vld [vmem:[%s3234 + $0x30] sm:$0xff]
  %v3242 = vld [vmem:[%s3234 + $0x38] sm:$0xff]
  %v3243 = vld [vmem:[%s3234 + $0x40] sm:$0xff]
  %v3244 = vld [vmem:[%s3234 + $0x48] sm:$0xff]
  %v3245 = vld [vmem:[%s3234 + $0x50] sm:$0xff]
  %v3246 = vld [vmem:[%s3234 + $0x58] sm:$0xff]
  %v3247 = vld [vmem:[%s3234 + $0x60] sm:$0xff]
  %v3248 = vld [vmem:[%s3234 + $0x68] sm:$0xff]
  %v3249 = vld [vmem:[%s3234 + $0x70] sm:$0xff]
  %v3250 = vld [vmem:[%s3234 + $0x78] sm:$0xff]
  %3251 = vmatprep.subr.mxu0 0.0
  %3252 = vmatpush1.msra.mxu0 %v3235
  %3253 = vmatprep.subr.mxu0 0.0
  %3254 = vmatpush1.msra.mxu0 %v3236
  %3255 = vmatprep.subr.mxu0 0.0
  %3256 = vmatpush1.msra.mxu0 %v3237
  %3257 = vmatprep.subr.mxu0 0.0
  %3258 = vmatpush1.msra.mxu0 %v3238
  %3259 = vmatprep.subr.mxu0 0.0
  %3260 = vmatpush1.msra.mxu0 %v3239
  %3261 = vmatprep.subr.mxu0 0.0
  %3262 = vmatpush1.msra.mxu0 %v3240
  %3263 = vmatprep.subr.mxu0 0.0
  %3264 = vmatpush1.msra.mxu0 %v3241
  %3265 = vmatprep.subr.mxu0 0.0
  %3266 = vmatpush1.msra.mxu0 %v3242
  %3267 = vmatprep.subr.mxu0 0.0
  %3268 = vmatpush1.msra.mxu0 %v3243
  %3269 = vmatprep.subr.mxu0 0.0
  %3270 = vmatpush1.msra.mxu0 %v3244
  %3271 = vmatprep.subr.mxu0 0.0
  %3272 = vmatpush1.msra.mxu0 %v3245
  %3273 = vmatprep.subr.mxu0 0.0
  %3274 = vmatpush1.msra.mxu0 %v3246
  %3275 = vmatprep.subr.mxu0 0.0
  %3276 = vmatpush1.msra.mxu0 %v3247
  %3277 = vmatprep.subr.mxu0 0.0
  %3278 = vmatpush1.msra.mxu0 %v3248
  %3279 = vmatprep.subr.mxu0 0.0
  %3280 = vmatpush1.msra.mxu0 %v3249
  %3281 = vmatprep.subr.mxu0 0.0
  %3282 = vmatpush1.msra.mxu0 %v3250
  %3283 = vmatprep.subr.mxu0 0.0
  %3284 = vmatpush1.msra.mxu0 0.0
  %3285 = vmatprep.subr.mxu0 0.0
  %3286 = vmatpush1.msra.mxu0 0.0
  %3287 = vmatprep.subr.mxu0 0.0
  %3288 = vmatpush1.msra.mxu0 0.0
  %3289 = vmatprep.subr.mxu0 0.0
  %3290 = vmatpush1.msra.mxu0 0.0
  %3291 = vmatprep.subr.mxu0 0.0
  %3292 = vmatpush1.msra.mxu0 0.0
  %3293 = vmatprep.subr.mxu0 0.0
  %3294 = vmatpush1.msra.mxu0 0.0
  %3295 = vmatprep.subr.mxu0 0.0
  %3296 = vmatpush1.msra.mxu0 0.0
  %3297 = vmatprep.subr.mxu0 0.0
  %3298 = vmatpush1.msra.mxu0 0.0
  %3299 = vmatprep.subr.mxu0 0.0
  %3300 = vmatpush1.msra.mxu0 0.0
  %3301 = vmatprep.subr.mxu0 0.0
  %3302 = vmatpush1.msra.mxu0 0.0
  %3303 = vmatprep.subr.mxu0 0.0
  %3304 = vmatpush1.msra.mxu0 0.0
  %3305 = vmatprep.subr.mxu0 0.0
  %3306 = vmatpush1.msra.mxu0 0.0
  %3307 = vmatprep.subr.mxu0 0.0
  %3308 = vmatpush1.msra.mxu0 0.0
  %3309 = vmatprep.subr.mxu0 0.0
  %3310 = vmatpush1.msra.mxu0 0.0
  %3311 = vmatprep.subr.mxu0 0.0
  %3312 = vmatpush1.msra.mxu0 0.0
  %3313 = vmatprep.subr.mxu0 0.0
  %3314 = vmatpush1.msra.mxu0 0.0
  %3315 = vmatprep.mubr.f32.mxu0 0.0
  %3316 = vmatmul.mubr.f32.gmra.mrb[0].mxu0 %v1898
  %v3317 = vpop.f32.mrb[0].mxu0
  %v3318 = vadd.f32 0.0, %v3317
  %v3319 = vpop.f32.mrb[0].mxu0
  %3320 = vmatprep.mubr.f32.mxu0 0.0
  %3321 = vmatmul.mubr.f32.gmra.mrb[0].mxu0 %v1903
  %v3322 = vpop.f32.mrb[0].mxu0
  %v3323 = vadd.f32 0.0, %v3322
  %v3324 = vpop.f32.mrb[0].mxu0
  %3325 = vmatprep.mubr.f32.mxu0 0.0
  %3326 = vmatmul.mubr.f32.gmra.mrb[0].mxu0 %v1908
  %v3327 = vpop.f32.mrb[0].mxu0
  %v3328 = vadd.f32 0.0, %v3327
  %v3329 = vpop.f32.mrb[0].mxu0
  %3330 = vdwg.mxu0
  %v3331 = vadd.f32 %v3231, %v3318
  %v3332 = vadd.f32 %v3232, %v3323
  %v3333 = vadd.f32 %v3233, %v3328
  %s3334 = scalar_lea.vmem %s5, 1792
  %v3335 = vld [vmem:[%s3334] sm:$0xff]
  %v3336 = vld [vmem:[%s3334 + $0x8] sm:$0xff]
  %v3337 = vld [vmem:[%s3334 + $0x10] sm:$0xff]
  %v3338 = vld [vmem:[%s3334 + $0x18] sm:$0xff]
  %v3339 = vld [vmem:[%s3334 + $0x20] sm:$0xff]
  %v3340 = vld [vmem:[%s3334 + $0x28] sm:$0xff]
  %v3341 = vld [vmem:[%s3334 + $0x30] sm:$0xff]
  %v3342 = vld [vmem:[%s3334 + $0x38] sm:$0xff]
  %v3343 = vld [vmem:[%s3334 + $0x40] sm:$0xff]
  %v3344 = vld [vmem:[%s3334 + $0x48] sm:$0xff]
  %v3345 = vld [vmem:[%s3334 + $0x50] sm:$0xff]
  %v3346 = vld [vmem:[%s3334 + $0x58] sm:$0xff]
  %v3347 = vld [vmem:[%s3334 + $0x60] sm:$0xff]
  %v3348 = vld [vmem:[%s3334 + $0x68] sm:$0xff]
  %v3349 = vld [vmem:[%s3334 + $0x70] sm:$0xff]
  %v3350 = vld [vmem:[%s3334 + $0x78] sm:$0xff]
  %3351 = vmatprep.subr.mxu0 0.0
  %3352 = vmatpush1.msra.mxu0 %v3335
  %3353 = vmatprep.subr.mxu0 0.0
  %3354 = vmatpush1.msra.mxu0 %v3336
  %3355 = vmatprep.subr.mxu0 0.0
  %3356 = vmatpush1.msra.mxu0 %v3337
  %3357 = vmatprep.subr.mxu0 0.0
  %3358 = vmatpush1.msra.mxu0 %v3338
  %3359 = vmatprep.subr.mxu0 0.0
  %3360 = vmatpush1.msra.mxu0 %v3339
  %3361 = vmatprep.subr.mxu0 0.0
  %3362 = vmatpush1.msra.mxu0 %v3340
  %3363 = vmatprep.subr.mxu0 0.0
  %3364 = vmatpush1.msra.mxu0 %v3341
  %3365 = vmatprep.subr.mxu0 0.0
  %3366 = vmatpush1.msra.mxu0 %v3342
  %3367 = vmatprep.subr.mxu0 0.0
  %3368 = vmatpush1.msra.mxu0 %v3343
  %3369 = vmatprep.subr.mxu0 0.0
  %3370 = vmatpush1.msra.mxu0 %v3344
  %3371 = vmatprep.subr.mxu0 0.0
  %3372 = vmatpush1.msra.mxu0 %v3345
  %3373 = vmatprep.subr.mxu0 0.0
  %3374 = vmatpush1.msra.mxu0 %v3346
  %3375 = vmatprep.subr.mxu0 0.0
  %3376 = vmatpush1.msra.mxu0 %v3347
  %3377 = vmatprep.subr.mxu0 0.0
  %3378 = vmatpush1.msra.mxu0 %v3348
  %3379 = vmatprep.subr.mxu0 0.0
  %3380 = vmatpush1.msra.mxu0 %v3349
  %3381 = vmatprep.subr.mxu0 0.0
  %3382 = vmatpush1.msra.mxu0 %v3350
  %3383 = vmatprep.subr.mxu0 0.0
  %3384 = vmatpush1.msra.mxu0 0.0
  %3385 = vmatprep.subr.mxu0 0.0
  %3386 = vmatpush1.msra.mxu0 0.0
  %3387 = vmatprep.subr.mxu0 0.0
  %3388 = vmatpush1.msra.mxu0 0.0
  %3389 = vmatprep.subr.mxu0 0.0
  %3390 = vmatpush1.msra.mxu0 0.0
  %3391 = vmatprep.subr.mxu0 0.0
  %3392 = vmatpush1.msra.mxu0 0.0
  %3393 = vmatprep.subr.mxu0 0.0
  %3394 = vmatpush1.msra.mxu0 0.0
  %3395 = vmatprep.subr.mxu0 0.0
  %3396 = vmatpush1.msra.mxu0 0.0
  %3397 = vmatprep.subr.mxu0 0.0
  %3398 = vmatpush1.msra.mxu0 0.0
  %3399 = vmatprep.subr.mxu0 0.0
  %3400 = vmatpush1.msra.mxu0 0.0
  %3401 = vmatprep.subr.mxu0 0.0
  %3402 = vmatpush1.msra.mxu0 0.0
  %3403 = vmatprep.subr.mxu0 0.0
  %3404 = vmatpush1.msra.mxu0 0.0
  %3405 = vmatprep.subr.mxu0 0.0
  %3406 = vmatpush1.msra.mxu0 0.0
  %3407 = vmatprep.subr.mxu0 0.0
  %3408 = vmatpush1.msra.mxu0 0.0
  %3409 = vmatprep.subr.mxu0 0.0
  %3410 = vmatpush1.msra.mxu0 0.0
  %3411 = vmatprep.subr.mxu0 0.0
  %3412 = vmatpush1.msra.mxu0 0.0
  %3413 = vmatprep.subr.mxu0 0.0
  %3414 = vmatpush1.msra.mxu0 0.0
  %3415 = vmatprep.mubr.f32.mxu0 0.0
  %3416 = vmatmul.mubr.f32.gmra.mrb[0].mxu0 %v1913
  %v3417 = vpop.f32.mrb[0].mxu0
  %v3418 = vadd.f32 0.0, %v3417
  %v3419 = vpop.f32.mrb[0].mxu0
  %3420 = vmatprep.mubr.f32.mxu0 0.0
  %3421 = vmatmul.mubr.f32.gmra.mrb[0].mxu0 %v1918
  %v3422 = vpop.f32.mrb[0].mxu0
  %v3423 = vadd.f32 0.0, %v3422
  %v3424 = vpop.f32.mrb[0].mxu0
  %3425 = vmatprep.mubr.f32.mxu0 0.0
  %3426 = vmatmul.mubr.f32.gmra.mrb[0].mxu0 %v1923
  %v3427 = vpop.f32.mrb[0].mxu0
  %v3428 = vadd.f32 0.0, %v3427
  %v3429 = vpop.f32.mrb[0].mxu0
  %3430 = vdwg.mxu0
  %v3431 = vadd.f32 %v3331, %v3418
  %v3432 = vadd.f32 %v3332, %v3423
  %v3433 = vadd.f32 %v3333, %v3428
  %s3434 = scalar_lea.vmem %s5, 1920
  %v3435 = vld [vmem:[%s3434] sm:$0xff]
  %v3436 = vld [vmem:[%s3434 + $0x8] sm:$0xff]
  %v3437 = vld [vmem:[%s3434 + $0x10] sm:$0xff]
  %v3438 = vld [vmem:[%s3434 + $0x18] sm:$0xff]
  %v3439 = vld [vmem:[%s3434 + $0x20] sm:$0xff]
  %v3440 = vld [vmem:[%s3434 + $0x28] sm:$0xff]
  %v3441 = vld [vmem:[%s3434 + $0x30] sm:$0xff]
  %v3442 = vld [vmem:[%s3434 + $0x38] sm:$0xff]
  %v3443 = vld [vmem:[%s3434 + $0x40] sm:$0xff]
  %v3444 = vld [vmem:[%s3434 + $0x48] sm:$0xff]
  %v3445 = vld [vmem:[%s3434 + $0x50] sm:$0xff]
  %v3446 = vld [vmem:[%s3434 + $0x58] sm:$0xff]
  %v3447 = vld [vmem:[%s3434 + $0x60] sm:$0xff]
  %v3448 = vld [vmem:[%s3434 + $0x68] sm:$0xff]
  %v3449 = vld [vmem:[%s3434 + $0x70] sm:$0xff]
  %v3450 = vld [vmem:[%s3434 + $0x78] sm:$0xff]
  %3451 = vmatprep.subr.mxu0 0.0
  %3452 = vmatpush1.msra.mxu0 %v3435
  %3453 = vmatprep.subr.mxu0 0.0
  %3454 = vmatpush1.msra.mxu0 %v3436
  %3455 = vmatprep.subr.mxu0 0.0
  %3456 = vmatpush1.msra.mxu0 %v3437
  %3457 = vmatprep.subr.mxu0 0.0
  %3458 = vmatpush1.msra.mxu0 %v3438
  %3459 = vmatprep.subr.mxu0 0.0
  %3460 = vmatpush1.msra.mxu0 %v3439
  %3461 = vmatprep.subr.mxu0 0.0
  %3462 = vmatpush1.msra.mxu0 %v3440
  %3463 = vmatprep.subr.mxu0 0.0
  %3464 = vmatpush1.msra.mxu0 %v3441
  %3465 = vmatprep.subr.mxu0 0.0
  %3466 = vmatpush1.msra.mxu0 %v3442
  %3467 = vmatprep.subr.mxu0 0.0
  %3468 = vmatpush1.msra.mxu0 %v3443
  %3469 = vmatprep.subr.mxu0 0.0
  %3470 = vmatpush1.msra.mxu0 %v3444
  %3471 = vmatprep.subr.mxu0 0.0
  %3472 = vmatpush1.msra.mxu0 %v3445
  %3473 = vmatprep.subr.mxu0 0.0
  %3474 = vmatpush1.msra.mxu0 %v3446
  %3475 = vmatprep.subr.mxu0 0.0
  %3476 = vmatpush1.msra.mxu0 %v3447
  %3477 = vmatprep.subr.mxu0 0.0
  %3478 = vmatpush1.msra.mxu0 %v3448
  %3479 = vmatprep.subr.mxu0 0.0
  %3480 = vmatpush1.msra.mxu0 %v3449
  %3481 = vmatprep.subr.mxu0 0.0
  %3482 = vmatpush1.msra.mxu0 %v3450
  %3483 = vmatprep.subr.mxu0 0.0
  %3484 = vmatpush1.msra.mxu0 0.0
  %3485 = vmatprep.subr.mxu0 0.0
  %3486 = vmatpush1.msra.mxu0 0.0
  %3487 = vmatprep.subr.mxu0 0.0
  %3488 = vmatpush1.msra.mxu0 0.0
  %3489 = vmatprep.subr.mxu0 0.0
  %3490 = vmatpush1.msra.mxu0 0.0
  %3491 = vmatprep.subr.mxu0 0.0
  %3492 = vmatpush1.msra.mxu0 0.0
  %3493 = vmatprep.subr.mxu0 0.0
  %3494 = vmatpush1.msra.mxu0 0.0
  %3495 = vmatprep.subr.mxu0 0.0
  %3496 = vmatpush1.msra.mxu0 0.0
  %3497 = vmatprep.subr.mxu0 0.0
  %3498 = vmatpush1.msra.mxu0 0.0
  %3499 = vmatprep.subr.mxu0 0.0
  %3500 = vmatpush1.msra.mxu0 0.0
  %3501 = vmatprep.subr.mxu0 0.0
  %3502 = vmatpush1.msra.mxu0 0.0
  %3503 = vmatprep.subr.mxu0 0.0
  %3504 = vmatpush1.msra.mxu0 0.0
  %3505 = vmatprep.subr.mxu0 0.0
  %3506 = vmatpush1.msra.mxu0 0.0
  %3507 = vmatprep.subr.mxu0 0.0
  %3508 = vmatpush1.msra.mxu0 0.0
  %3509 = vmatprep.subr.mxu0 0.0
  %3510 = vmatpush1.msra.mxu0 0.0
  %3511 = vmatprep.subr.mxu0 0.0
  %3512 = vmatpush1.msra.mxu0 0.0
  %3513 = vmatprep.subr.mxu0 0.0
  %3514 = vmatpush1.msra.mxu0 0.0
  %3515 = vmatprep.mubr.f32.mxu0 0.0
  %3516 = vmatmul.mubr.f32.gmra.mrb[0].mxu0 %v1928
  %v3517 = vpop.f32.mrb[0].mxu0
  %v3518 = vadd.f32 0.0, %v3517
  %v3519 = vpop.f32.mrb[0].mxu0
  %3520 = vmatprep.mubr.f32.mxu0 0.0
  %3521 = vmatmul.mubr.f32.gmra.mrb[0].mxu0 %v1933
  %v3522 = vpop.f32.mrb[0].mxu0
  %v3523 = vadd.f32 0.0, %v3522
  %v3524 = vpop.f32.mrb[0].mxu0
  %3525 = vmatprep.mubr.f32.mxu0 0.0
  %3526 = vmatmul.mubr.f32.gmra.mrb[0].mxu0 %v1938
  %v3527 = vpop.f32.mrb[0].mxu0
  %v3528 = vadd.f32 0.0, %v3527
  %v3529 = vpop.f32.mrb[0].mxu0
  %3530 = vdwg.mxu0
  %v3531 = vadd.f32 %v3431, %v3518
  %v3532 = vadd.f32 %v3432, %v3523
  %v3533 = vadd.f32 %v3433, %v3528
  %v3534 = vld [vmem:[%s6] sm:$0x1]
  %v3536 = vlaneseq
  %v3537 = vshrl.u32 %v3536, 7
  %v3538 = vsub.s32 0, %v3537
  %v3539 = vrot.slane %v3534, %v3538
  %v3541 = vadd.f32 %v3531, %v3539
  %v3542 = vadd.f32 %v3532, %v3539
  %v3543 = vadd.f32 %v3533, %v3539
  %v3544 = vxor.u32 %v3541, 2147483648
  %v3545 = vxor.u32 %v3542, 2147483648
  %v3546 = vxor.u32 %v3543, 2147483648
  %v3547 = vmul.f32 %v3544, 1.442695
  %v3548 = vpow.pop %v3547
  %v3549 = vmul.f32 %v3545, 1.442695
  %v3550 = vpow.pop %v3549
  %v3551 = vmul.f32 %v3546, 1.442695
  %v3552 = vpow.pop %v3551
  %v3553 = vadd.f32 %v3548, 1.0
  %v3554 = vadd.f32 %v3550, 1.0
  %v3555 = vadd.f32 %v3552, 1.0
  %v3556 = vrcp.pop %v3553
  %v3557 = vmul.f32 1.0, %v3556
  %v3558 = vrcp.pop %v3554
  %v3559 = vmul.f32 1.0, %v3558
  %v3560 = vrcp.pop %v3555
  %v3561 = vmul.f32 1.0, %v3560
  %v3562 = vmul.f32 %v3541, %v3557
  %v3563 = vmul.f32 %v3542, %v3559
  %v3564 = vmul.f32 %v3543, %v3561
  %v3565 = vld [vmem:[%s7] sm:$0xff]
  %v3566 = vld [vmem:[%s7 + $0x8] sm:$0xff]
  %v3567 = vld [vmem:[%s7 + $0x10] sm:$0xff]
  %v3568 = vld [vmem:[%s7 + $0x18] sm:$0xff]
  %v3569 = vld [vmem:[%s7 + $0x20] sm:$0xff]
  %v3570 = vld [vmem:[%s7 + $0x28] sm:$0xff]
  %v3571 = vld [vmem:[%s7 + $0x30] sm:$0xff]
  %v3572 = vld [vmem:[%s7 + $0x38] sm:$0xff]
  %v3573 = vld [vmem:[%s7 + $0x40] sm:$0xff]
  %vm3574 = vcmask 195584
  %v3576 = vsel %vm3574, %v3565, 0
  %v3579 = vsel %vm3574, %v3566, 0
  %v3582 = vsel %vm3574, %v3567, 0
  %v3585 = vsel %vm3574, %v3568, 0
  %v3588 = vsel %vm3574, %v3569, 0
  %v3591 = vsel %vm3574, %v3570, 0
  %v3594 = vsel %vm3574, %v3571, 0
  %v3597 = vsel %vm3574, %v3572, 0
  %v3600 = vsel %vm3574, %v3573, 0
  %3602 = vmatprep.subr.mxu0 0.0
  %3603 = vmatpush1.msra.mxu0 %v3562
  %3604 = vmatprep.subr.mxu0 0.0
  %3605 = vmatpush1.msra.mxu0 %v3563
  %3606 = vmatprep.subr.mxu0 0.0
  %3607 = vmatpush1.msra.mxu0 %v3564
  %3608 = vmatprep.subr.mxu0 0.0
  %3609 = vmatpush1.msra.mxu0 0.0
  %3610 = vmatprep.subr.mxu0 0.0
  %3611 = vmatpush1.msra.mxu0 0.0
  %3612 = vmatprep.subr.mxu0 0.0
  %3613 = vmatpush1.msra.mxu0 0.0
  %3614 = vmatprep.subr.mxu0 0.0
  %3615 = vmatpush1.msra.mxu0 0.0
  %3616 = vmatprep.subr.mxu0 0.0
  %3617 = vmatpush1.msra.mxu0 0.0
  %3618 = vmatprep.subr.mxu0 0.0
  %3619 = vmatpush1.msra.mxu0 0.0
  %3620 = vmatprep.subr.mxu0 0.0
  %3621 = vmatpush1.msra.mxu0 0.0
  %3622 = vmatprep.subr.mxu0 0.0
  %3623 = vmatpush1.msra.mxu0 0.0
  %3624 = vmatprep.subr.mxu0 0.0
  %3625 = vmatpush1.msra.mxu0 0.0
  %3626 = vmatprep.subr.mxu0 0.0
  %3627 = vmatpush1.msra.mxu0 0.0
  %3628 = vmatprep.subr.mxu0 0.0
  %3629 = vmatpush1.msra.mxu0 0.0
  %3630 = vmatprep.subr.mxu0 0.0
  %3631 = vmatpush1.msra.mxu0 0.0
  %3632 = vmatprep.subr.mxu0 0.0
  %3633 = vmatpush1.msra.mxu0 0.0
  %3634 = vmatprep.subr.mxu0 0.0
  %3635 = vmatpush1.msra.mxu0 0.0
  %3636 = vmatprep.subr.mxu0 0.0
  %3637 = vmatpush1.msra.mxu0 0.0
  %3638 = vmatprep.subr.mxu0 0.0
  %3639 = vmatpush1.msra.mxu0 0.0
  %3640 = vmatprep.subr.mxu0 0.0
  %3641 = vmatpush1.msra.mxu0 0.0
  %3642 = vmatprep.subr.mxu0 0.0
  %3643 = vmatpush1.msra.mxu0 0.0
  %3644 = vmatprep.subr.mxu0 0.0
  %3645 = vmatpush1.msra.mxu0 0.0
  %3646 = vmatprep.subr.mxu0 0.0
  %3647 = vmatpush1.msra.mxu0 0.0
  %3648 = vmatprep.subr.mxu0 0.0
  %3649 = vmatpush1.msra.mxu0 0.0
  %3650 = vmatprep.subr.mxu0 0.0
  %3651 = vmatpush1.msra.mxu0 0.0
  %3652 = vmatprep.subr.mxu0 0.0
  %3653 = vmatpush1.msra.mxu0 0.0
  %3654 = vmatprep.subr.mxu0 0.0
  %3655 = vmatpush1.msra.mxu0 0.0
  %3656 = vmatprep.subr.mxu0 0.0
  %3657 = vmatpush1.msra.mxu0 0.0
  %3658 = vmatprep.subr.mxu0 0.0
  %3659 = vmatpush1.msra.mxu0 0.0
  %3660 = vmatprep.subr.mxu0 0.0
  %3661 = vmatpush1.msra.mxu0 0.0
  %3662 = vmatprep.subr.mxu0 0.0
  %3663 = vmatpush1.msra.mxu0 0.0
  %3664 = vmatprep.subr.mxu0 0.0
  %3665 = vmatpush1.msra.mxu0 0.0
  %3666 = vmatprep.mubr.f32.mxu0 0.0
  %3667 = vmatmul.mubr.f32.gmra.mrb[0].mxu0 %v3576
  %v3668 = vpop.f32.mrb[0].mxu0
  %v3669 = vadd.f32 0.0, %v3668
  %v3670 = vpop.f32.mrb[0].mxu0
  %3671 = vmatprep.mubr.f32.mxu0 0.0
  %3672 = vmatmul.mubr.f32.gmra.mrb[0].mxu0 %v3579
  %v3673 = vpop.f32.mrb[0].mxu0
  %v3674 = vadd.f32 0.0, %v3673
  %v3675 = vpop.f32.mrb[0].mxu0
  %3676 = vmatprep.mubr.f32.mxu0 0.0
  %3677 = vmatmul.mubr.f32.gmra.mrb[0].mxu0 %v3582
  %v3678 = vpop.f32.mrb[0].mxu0
  %v3679 = vadd.f32 0.0, %v3678
  %v3680 = vpop.f32.mrb[0].mxu0
  %3681 = vmatprep.mubr.f32.mxu0 0.0
  %3682 = vmatmul.mubr.f32.gmra.mrb[0].mxu0 %v3585
  %v3683 = vpop.f32.mrb[0].mxu0
  %v3684 = vadd.f32 0.0, %v3683
  %v3685 = vpop.f32.mrb[0].mxu0
  %3686 = vmatprep.mubr.f32.mxu0 0.0
  %3687 = vmatmul.mubr.f32.gmra.mrb[0].mxu0 %v3588
  %v3688 = vpop.f32.mrb[0].mxu0
  %v3689 = vadd.f32 0.0, %v3688
  %v3690 = vpop.f32.mrb[0].mxu0
  %3691 = vmatprep.mubr.f32.mxu0 0.0
  %3692 = vmatmul.mubr.f32.gmra.mrb[0].mxu0 %v3591
  %v3693 = vpop.f32.mrb[0].mxu0
  %v3694 = vadd.f32 0.0, %v3693
  %v3695 = vpop.f32.mrb[0].mxu0
  %3696 = vmatprep.mubr.f32.mxu0 0.0
  %3697 = vmatmul.mubr.f32.gmra.mrb[0].mxu0 %v3594
  %v3698 = vpop.f32.mrb[0].mxu0
  %v3699 = vadd.f32 0.0, %v3698
  %v3700 = vpop.f32.mrb[0].mxu0
  %3701 = vmatprep.mubr.f32.mxu0 0.0
  %3702 = vmatmul.mubr.f32.gmra.mrb[0].mxu0 %v3597
  %v3703 = vpop.f32.mrb[0].mxu0
  %v3704 = vadd.f32 0.0, %v3703
  %v3705 = vpop.f32.mrb[0].mxu0
  %3706 = vmatprep.mubr.f32.mxu0 0.0
  %3707 = vmatmul.mubr.f32.gmra.mrb[0].mxu0 %v3600
  %v3708 = vpop.f32.mrb[0].mxu0
  %v3709 = vadd.f32 0.0, %v3708
  %v3710 = vpop.f32.mrb[0].mxu0
  %3711 = vdwg.mxu0
  %v3712 = vld [vmem:[%s8] sm:$0xff]
  %v3713 = vld [vmem:[%s8 + $0x8] sm:$0xff]
  %v3714 = vld [vmem:[%s8 + $0x10] sm:$0xff]
  %v3715 = vld [vmem:[%s8 + $0x18] sm:$0xff]
  %v3716 = vld [vmem:[%s8 + $0x20] sm:$0xff]
  %v3717 = vld [vmem:[%s8 + $0x28] sm:$0xff]
  %v3718 = vld [vmem:[%s8 + $0x30] sm:$0xff]
  %v3719 = vld [vmem:[%s8 + $0x38] sm:$0xff]
  %v3720 = vld [vmem:[%s8 + $0x40] sm:$0xff]
  %v3721 = vld [vmem:[%s8 + $0x48] sm:$0xff]
  %v3722 = vld [vmem:[%s8 + $0x50] sm:$0xff]
  %v3723 = vld [vmem:[%s8 + $0x58] sm:$0xff]
  %v3724 = vld [vmem:[%s8 + $0x60] sm:$0xff]
  %v3725 = vld [vmem:[%s8 + $0x68] sm:$0xff]
  %v3726 = vld [vmem:[%s8 + $0x70] sm:$0xff]
  %v3727 = vld [vmem:[%s8 + $0x78] sm:$0xff]
  %s3728 = scalar_lea.vmem %s8, 128
  %v3729 = vld [vmem:[%s3728] sm:$0xff]
  %v3730 = vld [vmem:[%s3728 + $0x8] sm:$0xff]
  %v3731 = vld [vmem:[%s3728 + $0x10] sm:$0xff]
  %v3732 = vld [vmem:[%s3728 + $0x18] sm:$0xff]
  %v3733 = vld [vmem:[%s3728 + $0x20] sm:$0xff]
  %v3734 = vld [vmem:[%s3728 + $0x28] sm:$0xff]
  %v3735 = vld [vmem:[%s3728 + $0x30] sm:$0xff]
  %v3736 = vld [vmem:[%s3728 + $0x38] sm:$0xff]
  %v3737 = vld [vmem:[%s3728 + $0x40] sm:$0xff]
  %v3738 = vld [vmem:[%s3728 + $0x48] sm:$0xff]
  %v3739 = vld [vmem:[%s3728 + $0x50] sm:$0xff]
  %v3740 = vld [vmem:[%s3728 + $0x58] sm:$0xff]
  %v3741 = vld [vmem:[%s3728 + $0x60] sm:$0xff]
  %v3742 = vld [vmem:[%s3728 + $0x68] sm:$0xff]
  %v3743 = vld [vmem:[%s3728 + $0x70] sm:$0xff]
  %v3744 = vld [vmem:[%s3728 + $0x78] sm:$0xff]
  %3745 = vmatprep.subr.mxu0 0.0
  %3746 = vmatpush1.msra.mxu0 %v3729
  %3747 = vmatprep.subr.mxu0 0.0
  %3748 = vmatpush1.msra.mxu0 %v3730
  %3749 = vmatprep.subr.mxu0 0.0
  %3750 = vmatpush1.msra.mxu0 %v3731
  %3751 = vmatprep.subr.mxu0 0.0
  %3752 = vmatpush1.msra.mxu0 %v3732
  %3753 = vmatprep.subr.mxu0 0.0
  %3754 = vmatpush1.msra.mxu0 %v3733
  %3755 = vmatprep.subr.mxu0 0.0
  %3756 = vmatpush1.msra.mxu0 %v3734
  %3757 = vmatprep.subr.mxu0 0.0
  %3758 = vmatpush1.msra.mxu0 %v3735
  %3759 = vmatprep.subr.mxu0 0.0
  %3760 = vmatpush1.msra.mxu0 %v3736
  %3761 = vmatprep.subr.mxu0 0.0
  %3762 = vmatpush1.msra.mxu0 %v3737
  %3763 = vmatprep.subr.mxu0 0.0
  %3764 = vmatpush1.msra.mxu0 %v3738
  %3765 = vmatprep.subr.mxu0 0.0
  %3766 = vmatpush1.msra.mxu0 %v3739
  %3767 = vmatprep.subr.mxu0 0.0
  %3768 = vmatpush1.msra.mxu0 %v3740
  %3769 = vmatprep.subr.mxu0 0.0
  %3770 = vmatpush1.msra.mxu0 %v3741
  %3771 = vmatprep.subr.mxu0 0.0
  %3772 = vmatpush1.msra.mxu0 %v3742
  %3773 = vmatprep.subr.mxu0 0.0
  %3774 = vmatpush1.msra.mxu0 %v3743
  %3775 = vmatprep.subr.mxu0 0.0
  %3776 = vmatpush1.msra.mxu0 %v3744
  %3777 = vmatprep.subr.mxu0 0.0
  %3778 = vmatpush1.msra.mxu0 0.0
  %3779 = vmatprep.subr.mxu0 0.0
  %3780 = vmatpush1.msra.mxu0 0.0
  %3781 = vmatprep.subr.mxu0 0.0
  %3782 = vmatpush1.msra.mxu0 0.0
  %3783 = vmatprep.subr.mxu0 0.0
  %3784 = vmatpush1.msra.mxu0 0.0
  %3785 = vmatprep.subr.mxu0 0.0
  %3786 = vmatpush1.msra.mxu0 0.0
  %3787 = vmatprep.subr.mxu0 0.0
  %3788 = vmatpush1.msra.mxu0 0.0
  %3789 = vmatprep.subr.mxu0 0.0
  %3790 = vmatpush1.msra.mxu0 0.0
  %3791 = vmatprep.subr.mxu0 0.0
  %3792 = vmatpush1.msra.mxu0 0.0
  %3793 = vmatprep.subr.mxu0 0.0
  %3794 = vmatpush1.msra.mxu0 0.0
  %3795 = vmatprep.subr.mxu0 0.0
  %3796 = vmatpush1.msra.mxu0 0.0
  %3797 = vmatprep.subr.mxu0 0.0
  %3798 = vmatpush1.msra.mxu0 0.0
  %3799 = vmatprep.subr.mxu0 0.0
  %3800 = vmatpush1.msra.mxu0 0.0
  %3801 = vmatprep.subr.mxu0 0.0
  %3802 = vmatpush1.msra.mxu0 0.0
  %3803 = vmatprep.subr.mxu0 0.0
  %3804 = vmatpush1.msra.mxu0 0.0
  %3805 = vmatprep.subr.mxu0 0.0
  %3806 = vmatpush1.msra.mxu0 0.0
  %3807 = vmatprep.subr.mxu0 0.0
  %3808 = vmatpush1.msra.mxu0 0.0
  %3809 = vmatprep.mubr.f32.mxu0 0.0
  %3810 = vmatmul.mubr.f32.gmra.mrb[0].mxu0 %v3674
  %v3811 = vpop.f32.mrb[0].mxu0
  %v3812 = vadd.f32 0.0, %v3811
  %v3813 = vpop.f32.mrb[0].mxu0
  %3814 = vdwg.mxu0
  %3815 = vmatprep.subr.mxu0 0.0
  %3816 = vmatpush1.msra.mxu0 %v3712
  %3817 = vmatprep.subr.mxu0 0.0
  %3818 = vmatpush1.msra.mxu0 %v3713
  %3819 = vmatprep.subr.mxu0 0.0
  %3820 = vmatpush1.msra.mxu0 %v3714
  %3821 = vmatprep.subr.mxu0 0.0
  %3822 = vmatpush1.msra.mxu0 %v3715
  %3823 = vmatprep.subr.mxu0 0.0
  %3824 = vmatpush1.msra.mxu0 %v3716
  %3825 = vmatprep.subr.mxu0 0.0
  %3826 = vmatpush1.msra.mxu0 %v3717
  %3827 = vmatprep.subr.mxu0 0.0
  %3828 = vmatpush1.msra.mxu0 %v3718
  %3829 = vmatprep.subr.mxu0 0.0
  %3830 = vmatpush1.msra.mxu0 %v3719
  %3831 = vmatprep.subr.mxu0 0.0
  %3832 = vmatpush1.msra.mxu0 %v3720
  %3833 = vmatprep.subr.mxu0 0.0
  %3834 = vmatpush1.msra.mxu0 %v3721
  %3835 = vmatprep.subr.mxu0 0.0
  %3836 = vmatpush1.msra.mxu0 %v3722
  %3837 = vmatprep.subr.mxu0 0.0
  %3838 = vmatpush1.msra.mxu0 %v3723
  %3839 = vmatprep.subr.mxu0 0.0
  %3840 = vmatpush1.msra.mxu0 %v3724
  %3841 = vmatprep.subr.mxu0 0.0
  %3842 = vmatpush1.msra.mxu0 %v3725
  %3843 = vmatprep.subr.mxu0 0.0
  %3844 = vmatpush1.msra.mxu0 %v3726
  %3845 = vmatprep.subr.mxu0 0.0
  %3846 = vmatpush1.msra.mxu0 %v3727
  %3847 = vmatprep.subr.mxu0 0.0
  %3848 = vmatpush1.msra.mxu0 0.0
  %3849 = vmatprep.subr.mxu0 0.0
  %3850 = vmatpush1.msra.mxu0 0.0
  %3851 = vmatprep.subr.mxu0 0.0
  %3852 = vmatpush1.msra.mxu0 0.0
  %3853 = vmatprep.subr.mxu0 0.0
  %3854 = vmatpush1.msra.mxu0 0.0
  %3855 = vmatprep.subr.mxu0 0.0
  %3856 = vmatpush1.msra.mxu0 0.0
  %3857 = vmatprep.subr.mxu0 0.0
  %3858 = vmatpush1.msra.mxu0 0.0
  %3859 = vmatprep.subr.mxu0 0.0
  %3860 = vmatpush1.msra.mxu0 0.0
  %3861 = vmatprep.subr.mxu0 0.0
  %3862 = vmatpush1.msra.mxu0 0.0
  %3863 = vmatprep.subr.mxu0 0.0
  %3864 = vmatpush1.msra.mxu0 0.0
  %3865 = vmatprep.subr.mxu0 0.0
  %3866 = vmatpush1.msra.mxu0 0.0
  %3867 = vmatprep.subr.mxu0 0.0
  %3868 = vmatpush1.msra.mxu0 0.0
  %3869 = vmatprep.subr.mxu0 0.0
  %3870 = vmatpush1.msra.mxu0 0.0
  %3871 = vmatprep.subr.mxu0 0.0
  %3872 = vmatpush1.msra.mxu0 0.0
  %3873 = vmatprep.subr.mxu0 0.0
  %3874 = vmatpush1.msra.mxu0 0.0
  %3875 = vmatprep.subr.mxu0 0.0
  %3876 = vmatpush1.msra.mxu0 0.0
  %3877 = vmatprep.subr.mxu0 0.0
  %3878 = vmatpush1.msra.mxu0 0.0
  %3879 = vmatprep.mubr.f32.mxu0 0.0
  %3880 = vmatmul.mubr.f32.gmra.mrb[0].mxu0 %v3669
  %v3881 = vpop.f32.mrb[0].mxu0
  %v3882 = vadd.f32 %v3812, %v3881
  %v3883 = vpop.f32.mrb[0].mxu0
  %3884 = vdwg.mxu0
  %s3885 = scalar_lea.vmem %s8, 256
  %v3886 = vld [vmem:[%s3885] sm:$0xff]
  %v3887 = vld [vmem:[%s3885 + $0x8] sm:$0xff]
  %v3888 = vld [vmem:[%s3885 + $0x10] sm:$0xff]
  %v3889 = vld [vmem:[%s3885 + $0x18] sm:$0xff]
  %v3890 = vld [vmem:[%s3885 + $0x20] sm:$0xff]
  %v3891 = vld [vmem:[%s3885 + $0x28] sm:$0xff]
  %v3892 = vld [vmem:[%s3885 + $0x30] sm:$0xff]
  %v3893 = vld [vmem:[%s3885 + $0x38] sm:$0xff]
  %v3894 = vld [vmem:[%s3885 + $0x40] sm:$0xff]
  %v3895 = vld [vmem:[%s3885 + $0x48] sm:$0xff]
  %v3896 = vld [vmem:[%s3885 + $0x50] sm:$0xff]
  %v3897 = vld [vmem:[%s3885 + $0x58] sm:$0xff]
  %v3898 = vld [vmem:[%s3885 + $0x60] sm:$0xff]
  %v3899 = vld [vmem:[%s3885 + $0x68] sm:$0xff]
  %v3900 = vld [vmem:[%s3885 + $0x70] sm:$0xff]
  %v3901 = vld [vmem:[%s3885 + $0x78] sm:$0xff]
  %3902 = vmatprep.subr.mxu0 0.0
  %3903 = vmatpush1.msra.mxu0 %v3886
  %3904 = vmatprep.subr.mxu0 0.0
  %3905 = vmatpush1.msra.mxu0 %v3887
  %3906 = vmatprep.subr.mxu0 0.0
  %3907 = vmatpush1.msra.mxu0 %v3888
  %3908 = vmatprep.subr.mxu0 0.0
  %3909 = vmatpush1.msra.mxu0 %v3889
  %3910 = vmatprep.subr.mxu0 0.0
  %3911 = vmatpush1.msra.mxu0 %v3890
  %3912 = vmatprep.subr.mxu0 0.0
  %3913 = vmatpush1.msra.mxu0 %v3891
  %3914 = vmatprep.subr.mxu0 0.0
  %3915 = vmatpush1.msra.mxu0 %v3892
  %3916 = vmatprep.subr.mxu0 0.0
  %3917 = vmatpush1.msra.mxu0 %v3893
  %3918 = vmatprep.subr.mxu0 0.0
  %3919 = vmatpush1.msra.mxu0 %v3894
  %3920 = vmatprep.subr.mxu0 0.0
  %3921 = vmatpush1.msra.mxu0 %v3895
  %3922 = vmatprep.subr.mxu0 0.0
  %3923 = vmatpush1.msra.mxu0 %v3896
  %3924 = vmatprep.subr.mxu0 0.0
  %3925 = vmatpush1.msra.mxu0 %v3897
  %3926 = vmatprep.subr.mxu0 0.0
  %3927 = vmatpush1.msra.mxu0 %v3898
  %3928 = vmatprep.subr.mxu0 0.0
  %3929 = vmatpush1.msra.mxu0 %v3899
  %3930 = vmatprep.subr.mxu0 0.0
  %3931 = vmatpush1.msra.mxu0 %v3900
  %3932 = vmatprep.subr.mxu0 0.0
  %3933 = vmatpush1.msra.mxu0 %v3901
  %3934 = vmatprep.subr.mxu0 0.0
  %3935 = vmatpush1.msra.mxu0 0.0
  %3936 = vmatprep.subr.mxu0 0.0
  %3937 = vmatpush1.msra.mxu0 0.0
  %3938 = vmatprep.subr.mxu0 0.0
  %3939 = vmatpush1.msra.mxu0 0.0
  %3940 = vmatprep.subr.mxu0 0.0
  %3941 = vmatpush1.msra.mxu0 0.0
  %3942 = vmatprep.subr.mxu0 0.0
  %3943 = vmatpush1.msra.mxu0 0.0
  %3944 = vmatprep.subr.mxu0 0.0
  %3945 = vmatpush1.msra.mxu0 0.0
  %3946 = vmatprep.subr.mxu0 0.0
  %3947 = vmatpush1.msra.mxu0 0.0
  %3948 = vmatprep.subr.mxu0 0.0
  %3949 = vmatpush1.msra.mxu0 0.0
  %3950 = vmatprep.subr.mxu0 0.0
  %3951 = vmatpush1.msra.mxu0 0.0
  %3952 = vmatprep.subr.mxu0 0.0
  %3953 = vmatpush1.msra.mxu0 0.0
  %3954 = vmatprep.subr.mxu0 0.0
  %3955 = vmatpush1.msra.mxu0 0.0
  %3956 = vmatprep.subr.mxu0 0.0
  %3957 = vmatpush1.msra.mxu0 0.0
  %3958 = vmatprep.subr.mxu0 0.0
  %3959 = vmatpush1.msra.mxu0 0.0
  %3960 = vmatprep.subr.mxu0 0.0
  %3961 = vmatpush1.msra.mxu0 0.0
  %3962 = vmatprep.subr.mxu0 0.0
  %3963 = vmatpush1.msra.mxu0 0.0
  %3964 = vmatprep.subr.mxu0 0.0
  %3965 = vmatpush1.msra.mxu0 0.0
  %3966 = vmatprep.mubr.f32.mxu0 0.0
  %3967 = vmatmul.mubr.f32.gmra.mrb[0].mxu0 %v3679
  %v3968 = vpop.f32.mrb[0].mxu0
  %v3969 = vadd.f32 0.0, %v3968
  %v3970 = vpop.f32.mrb[0].mxu0
  %3971 = vdwg.mxu0
  %v3972 = vadd.f32 %v3882, %v3969
  %s3973 = scalar_lea.vmem %s8, 384
  %v3974 = vld [vmem:[%s3973] sm:$0xff]
  %v3975 = vld [vmem:[%s3973 + $0x8] sm:$0xff]
  %v3976 = vld [vmem:[%s3973 + $0x10] sm:$0xff]
  %v3977 = vld [vmem:[%s3973 + $0x18] sm:$0xff]
  %v3978 = vld [vmem:[%s3973 + $0x20] sm:$0xff]
  %v3979 = vld [vmem:[%s3973 + $0x28] sm:$0xff]
  %v3980 = vld [vmem:[%s3973 + $0x30] sm:$0xff]
  %v3981 = vld [vmem:[%s3973 + $0x38] sm:$0xff]
  %v3982 = vld [vmem:[%s3973 + $0x40] sm:$0xff]
  %v3983 = vld [vmem:[%s3973 + $0x48] sm:$0xff]
  %v3984 = vld [vmem:[%s3973 + $0x50] sm:$0xff]
  %v3985 = vld [vmem:[%s3973 + $0x58] sm:$0xff]
  %v3986 = vld [vmem:[%s3973 + $0x60] sm:$0xff]
  %v3987 = vld [vmem:[%s3973 + $0x68] sm:$0xff]
  %v3988 = vld [vmem:[%s3973 + $0x70] sm:$0xff]
  %v3989 = vld [vmem:[%s3973 + $0x78] sm:$0xff]
  %3990 = vmatprep.subr.mxu0 0.0
  %3991 = vmatpush1.msra.mxu0 %v3974
  %3992 = vmatprep.subr.mxu0 0.0
  %3993 = vmatpush1.msra.mxu0 %v3975
  %3994 = vmatprep.subr.mxu0 0.0
  %3995 = vmatpush1.msra.mxu0 %v3976
  %3996 = vmatprep.subr.mxu0 0.0
  %3997 = vmatpush1.msra.mxu0 %v3977
  %3998 = vmatprep.subr.mxu0 0.0
  %3999 = vmatpush1.msra.mxu0 %v3978
  %4000 = vmatprep.subr.mxu0 0.0
  %4001 = vmatpush1.msra.mxu0 %v3979
  %4002 = vmatprep.subr.mxu0 0.0
  %4003 = vmatpush1.msra.mxu0 %v3980
  %4004 = vmatprep.subr.mxu0 0.0
  %4005 = vmatpush1.msra.mxu0 %v3981
  %4006 = vmatprep.subr.mxu0 0.0
  %4007 = vmatpush1.msra.mxu0 %v3982
  %4008 = vmatprep.subr.mxu0 0.0
  %4009 = vmatpush1.msra.mxu0 %v3983
  %4010 = vmatprep.subr.mxu0 0.0
  %4011 = vmatpush1.msra.mxu0 %v3984
  %4012 = vmatprep.subr.mxu0 0.0
  %4013 = vmatpush1.msra.mxu0 %v3985
  %4014 = vmatprep.subr.mxu0 0.0
  %4015 = vmatpush1.msra.mxu0 %v3986
  %4016 = vmatprep.subr.mxu0 0.0
  %4017 = vmatpush1.msra.mxu0 %v3987
  %4018 = vmatprep.subr.mxu0 0.0
  %4019 = vmatpush1.msra.mxu0 %v3988
  %4020 = vmatprep.subr.mxu0 0.0
  %4021 = vmatpush1.msra.mxu0 %v3989
  %4022 = vmatprep.subr.mxu0 0.0
  %4023 = vmatpush1.msra.mxu0 0.0
  %4024 = vmatprep.subr.mxu0 0.0
  %4025 = vmatpush1.msra.mxu0 0.0
  %4026 = vmatprep.subr.mxu0 0.0
  %4027 = vmatpush1.msra.mxu0 0.0
  %4028 = vmatprep.subr.mxu0 0.0
  %4029 = vmatpush1.msra.mxu0 0.0
  %4030 = vmatprep.subr.mxu0 0.0
  %4031 = vmatpush1.msra.mxu0 0.0
  %4032 = vmatprep.subr.mxu0 0.0
  %4033 = vmatpush1.msra.mxu0 0.0
  %4034 = vmatprep.subr.mxu0 0.0
  %4035 = vmatpush1.msra.mxu0 0.0
  %4036 = vmatprep.subr.mxu0 0.0
  %4037 = vmatpush1.msra.mxu0 0.0
  %4038 = vmatprep.subr.mxu0 0.0
  %4039 = vmatpush1.msra.mxu0 0.0
  %4040 = vmatprep.subr.mxu0 0.0
  %4041 = vmatpush1.msra.mxu0 0.0
  %4042 = vmatprep.subr.mxu0 0.0
  %4043 = vmatpush1.msra.mxu0 0.0
  %4044 = vmatprep.subr.mxu0 0.0
  %4045 = vmatpush1.msra.mxu0 0.0
  %4046 = vmatprep.subr.mxu0 0.0
  %4047 = vmatpush1.msra.mxu0 0.0
  %4048 = vmatprep.subr.mxu0 0.0
  %4049 = vmatpush1.msra.mxu0 0.0
  %4050 = vmatprep.subr.mxu0 0.0
  %4051 = vmatpush1.msra.mxu0 0.0
  %4052 = vmatprep.subr.mxu0 0.0
  %4053 = vmatpush1.msra.mxu0 0.0
  %4054 = vmatprep.mubr.f32.mxu0 0.0
  %4055 = vmatmul.mubr.f32.gmra.mrb[0].mxu0 %v3684
  %v4056 = vpop.f32.mrb[0].mxu0
  %v4057 = vadd.f32 0.0, %v4056
  %v4058 = vpop.f32.mrb[0].mxu0
  %4059 = vdwg.mxu0
  %v4060 = vadd.f32 %v3972, %v4057
  %s4061 = scalar_lea.vmem %s8, 512
  %v4062 = vld [vmem:[%s4061] sm:$0xff]
  %v4063 = vld [vmem:[%s4061 + $0x8] sm:$0xff]
  %v4064 = vld [vmem:[%s4061 + $0x10] sm:$0xff]
  %v4065 = vld [vmem:[%s4061 + $0x18] sm:$0xff]
  %v4066 = vld [vmem:[%s4061 + $0x20] sm:$0xff]
  %v4067 = vld [vmem:[%s4061 + $0x28] sm:$0xff]
  %v4068 = vld [vmem:[%s4061 + $0x30] sm:$0xff]
  %v4069 = vld [vmem:[%s4061 + $0x38] sm:$0xff]
  %v4070 = vld [vmem:[%s4061 + $0x40] sm:$0xff]
  %v4071 = vld [vmem:[%s4061 + $0x48] sm:$0xff]
  %v4072 = vld [vmem:[%s4061 + $0x50] sm:$0xff]
  %v4073 = vld [vmem:[%s4061 + $0x58] sm:$0xff]
  %v4074 = vld [vmem:[%s4061 + $0x60] sm:$0xff]
  %v4075 = vld [vmem:[%s4061 + $0x68] sm:$0xff]
  %v4076 = vld [vmem:[%s4061 + $0x70] sm:$0xff]
  %v4077 = vld [vmem:[%s4061 + $0x78] sm:$0xff]
  %4078 = vmatprep.subr.mxu0 0.0
  %4079 = vmatpush1.msra.mxu0 %v4062
  %4080 = vmatprep.subr.mxu0 0.0
  %4081 = vmatpush1.msra.mxu0 %v4063
  %4082 = vmatprep.subr.mxu0 0.0
  %4083 = vmatpush1.msra.mxu0 %v4064
  %4084 = vmatprep.subr.mxu0 0.0
  %4085 = vmatpush1.msra.mxu0 %v4065
  %4086 = vmatprep.subr.mxu0 0.0
  %4087 = vmatpush1.msra.mxu0 %v4066
  %4088 = vmatprep.subr.mxu0 0.0
  %4089 = vmatpush1.msra.mxu0 %v4067
  %4090 = vmatprep.subr.mxu0 0.0
  %4091 = vmatpush1.msra.mxu0 %v4068
  %4092 = vmatprep.subr.mxu0 0.0
  %4093 = vmatpush1.msra.mxu0 %v4069
  %4094 = vmatprep.subr.mxu0 0.0
  %4095 = vmatpush1.msra.mxu0 %v4070
  %4096 = vmatprep.subr.mxu0 0.0
  %4097 = vmatpush1.msra.mxu0 %v4071
  %4098 = vmatprep.subr.mxu0 0.0
  %4099 = vmatpush1.msra.mxu0 %v4072
  %4100 = vmatprep.subr.mxu0 0.0
  %4101 = vmatpush1.msra.mxu0 %v4073
  %4102 = vmatprep.subr.mxu0 0.0
  %4103 = vmatpush1.msra.mxu0 %v4074
  %4104 = vmatprep.subr.mxu0 0.0
  %4105 = vmatpush1.msra.mxu0 %v4075
  %4106 = vmatprep.subr.mxu0 0.0
  %4107 = vmatpush1.msra.mxu0 %v4076
  %4108 = vmatprep.subr.mxu0 0.0
  %4109 = vmatpush1.msra.mxu0 %v4077
  %4110 = vmatprep.subr.mxu0 0.0
  %4111 = vmatpush1.msra.mxu0 0.0
  %4112 = vmatprep.subr.mxu0 0.0
  %4113 = vmatpush1.msra.mxu0 0.0
  %4114 = vmatprep.subr.mxu0 0.0
  %4115 = vmatpush1.msra.mxu0 0.0
  %4116 = vmatprep.subr.mxu0 0.0
  %4117 = vmatpush1.msra.mxu0 0.0
  %4118 = vmatprep.subr.mxu0 0.0
  %4119 = vmatpush1.msra.mxu0 0.0
  %4120 = vmatprep.subr.mxu0 0.0
  %4121 = vmatpush1.msra.mxu0 0.0
  %4122 = vmatprep.subr.mxu0 0.0
  %4123 = vmatpush1.msra.mxu0 0.0
  %4124 = vmatprep.subr.mxu0 0.0
  %4125 = vmatpush1.msra.mxu0 0.0
  %4126 = vmatprep.subr.mxu0 0.0
  %4127 = vmatpush1.msra.mxu0 0.0
  %4128 = vmatprep.subr.mxu0 0.0
  %4129 = vmatpush1.msra.mxu0 0.0
  %4130 = vmatprep.subr.mxu0 0.0
  %4131 = vmatpush1.msra.mxu0 0.0
  %4132 = vmatprep.subr.mxu0 0.0
  %4133 = vmatpush1.msra.mxu0 0.0
  %4134 = vmatprep.subr.mxu0 0.0
  %4135 = vmatpush1.msra.mxu0 0.0
  %4136 = vmatprep.subr.mxu0 0.0
  %4137 = vmatpush1.msra.mxu0 0.0
  %4138 = vmatprep.subr.mxu0 0.0
  %4139 = vmatpush1.msra.mxu0 0.0
  %4140 = vmatprep.subr.mxu0 0.0
  %4141 = vmatpush1.msra.mxu0 0.0
  %4142 = vmatprep.mubr.f32.mxu0 0.0
  %4143 = vmatmul.mubr.f32.gmra.mrb[0].mxu0 %v3689
  %v4144 = vpop.f32.mrb[0].mxu0
  %v4145 = vadd.f32 0.0, %v4144
  %v4146 = vpop.f32.mrb[0].mxu0
  %4147 = vdwg.mxu0
  %v4148 = vadd.f32 %v4060, %v4145
  %s4149 = scalar_lea.vmem %s8, 640
  %v4150 = vld [vmem:[%s4149] sm:$0xff]
  %v4151 = vld [vmem:[%s4149 + $0x8] sm:$0xff]
  %v4152 = vld [vmem:[%s4149 + $0x10] sm:$0xff]
  %v4153 = vld [vmem:[%s4149 + $0x18] sm:$0xff]
  %v4154 = vld [vmem:[%s4149 + $0x20] sm:$0xff]
  %v4155 = vld [vmem:[%s4149 + $0x28] sm:$0xff]
  %v4156 = vld [vmem:[%s4149 + $0x30] sm:$0xff]
  %v4157 = vld [vmem:[%s4149 + $0x38] sm:$0xff]
  %v4158 = vld [vmem:[%s4149 + $0x40] sm:$0xff]
  %v4159 = vld [vmem:[%s4149 + $0x48] sm:$0xff]
  %v4160 = vld [vmem:[%s4149 + $0x50] sm:$0xff]
  %v4161 = vld [vmem:[%s4149 + $0x58] sm:$0xff]
  %v4162 = vld [vmem:[%s4149 + $0x60] sm:$0xff]
  %v4163 = vld [vmem:[%s4149 + $0x68] sm:$0xff]
  %v4164 = vld [vmem:[%s4149 + $0x70] sm:$0xff]
  %v4165 = vld [vmem:[%s4149 + $0x78] sm:$0xff]
  %4166 = vmatprep.subr.mxu0 0.0
  %4167 = vmatpush1.msra.mxu0 %v4150
  %4168 = vmatprep.subr.mxu0 0.0
  %4169 = vmatpush1.msra.mxu0 %v4151
  %4170 = vmatprep.subr.mxu0 0.0
  %4171 = vmatpush1.msra.mxu0 %v4152
  %4172 = vmatprep.subr.mxu0 0.0
  %4173 = vmatpush1.msra.mxu0 %v4153
  %4174 = vmatprep.subr.mxu0 0.0
  %4175 = vmatpush1.msra.mxu0 %v4154
  %4176 = vmatprep.subr.mxu0 0.0
  %4177 = vmatpush1.msra.mxu0 %v4155
  %4178 = vmatprep.subr.mxu0 0.0
  %4179 = vmatpush1.msra.mxu0 %v4156
  %4180 = vmatprep.subr.mxu0 0.0
  %4181 = vmatpush1.msra.mxu0 %v4157
  %4182 = vmatprep.subr.mxu0 0.0
  %4183 = vmatpush1.msra.mxu0 %v4158
  %4184 = vmatprep.subr.mxu0 0.0
  %4185 = vmatpush1.msra.mxu0 %v4159
  %4186 = vmatprep.subr.mxu0 0.0
  %4187 = vmatpush1.msra.mxu0 %v4160
  %4188 = vmatprep.subr.mxu0 0.0
  %4189 = vmatpush1.msra.mxu0 %v4161
  %4190 = vmatprep.subr.mxu0 0.0
  %4191 = vmatpush1.msra.mxu0 %v4162
  %4192 = vmatprep.subr.mxu0 0.0
  %4193 = vmatpush1.msra.mxu0 %v4163
  %4194 = vmatprep.subr.mxu0 0.0
  %4195 = vmatpush1.msra.mxu0 %v4164
  %4196 = vmatprep.subr.mxu0 0.0
  %4197 = vmatpush1.msra.mxu0 %v4165
  %4198 = vmatprep.subr.mxu0 0.0
  %4199 = vmatpush1.msra.mxu0 0.0
  %4200 = vmatprep.subr.mxu0 0.0
  %4201 = vmatpush1.msra.mxu0 0.0
  %4202 = vmatprep.subr.mxu0 0.0
  %4203 = vmatpush1.msra.mxu0 0.0
  %4204 = vmatprep.subr.mxu0 0.0
  %4205 = vmatpush1.msra.mxu0 0.0
  %4206 = vmatprep.subr.mxu0 0.0
  %4207 = vmatpush1.msra.mxu0 0.0
  %4208 = vmatprep.subr.mxu0 0.0
  %4209 = vmatpush1.msra.mxu0 0.0
  %4210 = vmatprep.subr.mxu0 0.0
  %4211 = vmatpush1.msra.mxu0 0.0
  %4212 = vmatprep.subr.mxu0 0.0
  %4213 = vmatpush1.msra.mxu0 0.0
  %4214 = vmatprep.subr.mxu0 0.0
  %4215 = vmatpush1.msra.mxu0 0.0
  %4216 = vmatprep.subr.mxu0 0.0
  %4217 = vmatpush1.msra.mxu0 0.0
  %4218 = vmatprep.subr.mxu0 0.0
  %4219 = vmatpush1.msra.mxu0 0.0
  %4220 = vmatprep.subr.mxu0 0.0
  %4221 = vmatpush1.msra.mxu0 0.0
  %4222 = vmatprep.subr.mxu0 0.0
  %4223 = vmatpush1.msra.mxu0 0.0
  %4224 = vmatprep.subr.mxu0 0.0
  %4225 = vmatpush1.msra.mxu0 0.0
  %4226 = vmatprep.subr.mxu0 0.0
  %4227 = vmatpush1.msra.mxu0 0.0
  %4228 = vmatprep.subr.mxu0 0.0
  %4229 = vmatpush1.msra.mxu0 0.0
  %4230 = vmatprep.mubr.f32.mxu0 0.0
  %4231 = vmatmul.mubr.f32.gmra.mrb[0].mxu0 %v3694
  %v4232 = vpop.f32.mrb[0].mxu0
  %v4233 = vadd.f32 0.0, %v4232
  %v4234 = vpop.f32.mrb[0].mxu0
  %4235 = vdwg.mxu0
  %v4236 = vadd.f32 %v4148, %v4233
  %s4237 = scalar_lea.vmem %s8, 768
  %v4238 = vld [vmem:[%s4237] sm:$0xff]
  %v4239 = vld [vmem:[%s4237 + $0x8] sm:$0xff]
  %v4240 = vld [vmem:[%s4237 + $0x10] sm:$0xff]
  %v4241 = vld [vmem:[%s4237 + $0x18] sm:$0xff]
  %v4242 = vld [vmem:[%s4237 + $0x20] sm:$0xff]
  %v4243 = vld [vmem:[%s4237 + $0x28] sm:$0xff]
  %v4244 = vld [vmem:[%s4237 + $0x30] sm:$0xff]
  %v4245 = vld [vmem:[%s4237 + $0x38] sm:$0xff]
  %v4246 = vld [vmem:[%s4237 + $0x40] sm:$0xff]
  %v4247 = vld [vmem:[%s4237 + $0x48] sm:$0xff]
  %v4248 = vld [vmem:[%s4237 + $0x50] sm:$0xff]
  %v4249 = vld [vmem:[%s4237 + $0x58] sm:$0xff]
  %v4250 = vld [vmem:[%s4237 + $0x60] sm:$0xff]
  %v4251 = vld [vmem:[%s4237 + $0x68] sm:$0xff]
  %v4252 = vld [vmem:[%s4237 + $0x70] sm:$0xff]
  %v4253 = vld [vmem:[%s4237 + $0x78] sm:$0xff]
  %4254 = vmatprep.subr.mxu0 0.0
  %4255 = vmatpush1.msra.mxu0 %v4238
  %4256 = vmatprep.subr.mxu0 0.0
  %4257 = vmatpush1.msra.mxu0 %v4239
  %4258 = vmatprep.subr.mxu0 0.0
  %4259 = vmatpush1.msra.mxu0 %v4240
  %4260 = vmatprep.subr.mxu0 0.0
  %4261 = vmatpush1.msra.mxu0 %v4241
  %4262 = vmatprep.subr.mxu0 0.0
  %4263 = vmatpush1.msra.mxu0 %v4242
  %4264 = vmatprep.subr.mxu0 0.0
  %4265 = vmatpush1.msra.mxu0 %v4243
  %4266 = vmatprep.subr.mxu0 0.0
  %4267 = vmatpush1.msra.mxu0 %v4244
  %4268 = vmatprep.subr.mxu0 0.0
  %4269 = vmatpush1.msra.mxu0 %v4245
  %4270 = vmatprep.subr.mxu0 0.0
  %4271 = vmatpush1.msra.mxu0 %v4246
  %4272 = vmatprep.subr.mxu0 0.0
  %4273 = vmatpush1.msra.mxu0 %v4247
  %4274 = vmatprep.subr.mxu0 0.0
  %4275 = vmatpush1.msra.mxu0 %v4248
  %4276 = vmatprep.subr.mxu0 0.0
  %4277 = vmatpush1.msra.mxu0 %v4249
  %4278 = vmatprep.subr.mxu0 0.0
  %4279 = vmatpush1.msra.mxu0 %v4250
  %4280 = vmatprep.subr.mxu0 0.0
  %4281 = vmatpush1.msra.mxu0 %v4251
  %4282 = vmatprep.subr.mxu0 0.0
  %4283 = vmatpush1.msra.mxu0 %v4252
  %4284 = vmatprep.subr.mxu0 0.0
  %4285 = vmatpush1.msra.mxu0 %v4253
  %4286 = vmatprep.subr.mxu0 0.0
  %4287 = vmatpush1.msra.mxu0 0.0
  %4288 = vmatprep.subr.mxu0 0.0
  %4289 = vmatpush1.msra.mxu0 0.0
  %4290 = vmatprep.subr.mxu0 0.0
  %4291 = vmatpush1.msra.mxu0 0.0
  %4292 = vmatprep.subr.mxu0 0.0
  %4293 = vmatpush1.msra.mxu0 0.0
  %4294 = vmatprep.subr.mxu0 0.0
  %4295 = vmatpush1.msra.mxu0 0.0
  %4296 = vmatprep.subr.mxu0 0.0
  %4297 = vmatpush1.msra.mxu0 0.0
  %4298 = vmatprep.subr.mxu0 0.0
  %4299 = vmatpush1.msra.mxu0 0.0
  %4300 = vmatprep.subr.mxu0 0.0
  %4301 = vmatpush1.msra.mxu0 0.0
  %4302 = vmatprep.subr.mxu0 0.0
  %4303 = vmatpush1.msra.mxu0 0.0
  %4304 = vmatprep.subr.mxu0 0.0
  %4305 = vmatpush1.msra.mxu0 0.0
  %4306 = vmatprep.subr.mxu0 0.0
  %4307 = vmatpush1.msra.mxu0 0.0
  %4308 = vmatprep.subr.mxu0 0.0
  %4309 = vmatpush1.msra.mxu0 0.0
  %4310 = vmatprep.subr.mxu0 0.0
  %4311 = vmatpush1.msra.mxu0 0.0
  %4312 = vmatprep.subr.mxu0 0.0
  %4313 = vmatpush1.msra.mxu0 0.0
  %4314 = vmatprep.subr.mxu0 0.0
  %4315 = vmatpush1.msra.mxu0 0.0
  %4316 = vmatprep.subr.mxu0 0.0
  %4317 = vmatpush1.msra.mxu0 0.0
  %4318 = vmatprep.mubr.f32.mxu0 0.0
  %4319 = vmatmul.mubr.f32.gmra.mrb[0].mxu0 %v3699
  %v4320 = vpop.f32.mrb[0].mxu0
  %v4321 = vadd.f32 0.0, %v4320
  %v4322 = vpop.f32.mrb[0].mxu0
  %4323 = vdwg.mxu0
  %v4324 = vadd.f32 %v4236, %v4321
  %s4325 = scalar_lea.vmem %s8, 896
  %v4326 = vld [vmem:[%s4325] sm:$0xff]
  %v4327 = vld [vmem:[%s4325 + $0x8] sm:$0xff]
  %v4328 = vld [vmem:[%s4325 + $0x10] sm:$0xff]
  %v4329 = vld [vmem:[%s4325 + $0x18] sm:$0xff]
  %v4330 = vld [vmem:[%s4325 + $0x20] sm:$0xff]
  %v4331 = vld [vmem:[%s4325 + $0x28] sm:$0xff]
  %v4332 = vld [vmem:[%s4325 + $0x30] sm:$0xff]
  %v4333 = vld [vmem:[%s4325 + $0x38] sm:$0xff]
  %v4334 = vld [vmem:[%s4325 + $0x40] sm:$0xff]
  %v4335 = vld [vmem:[%s4325 + $0x48] sm:$0xff]
  %v4336 = vld [vmem:[%s4325 + $0x50] sm:$0xff]
  %v4337 = vld [vmem:[%s4325 + $0x58] sm:$0xff]
  %v4338 = vld [vmem:[%s4325 + $0x60] sm:$0xff]
  %v4339 = vld [vmem:[%s4325 + $0x68] sm:$0xff]
  %v4340 = vld [vmem:[%s4325 + $0x70] sm:$0xff]
  %v4341 = vld [vmem:[%s4325 + $0x78] sm:$0xff]
  %4342 = vmatprep.subr.mxu0 0.0
  %4343 = vmatpush1.msra.mxu0 %v4326
  %4344 = vmatprep.subr.mxu0 0.0
  %4345 = vmatpush1.msra.mxu0 %v4327
  %4346 = vmatprep.subr.mxu0 0.0
  %4347 = vmatpush1.msra.mxu0 %v4328
  %4348 = vmatprep.subr.mxu0 0.0
  %4349 = vmatpush1.msra.mxu0 %v4329
  %4350 = vmatprep.subr.mxu0 0.0
  %4351 = vmatpush1.msra.mxu0 %v4330
  %4352 = vmatprep.subr.mxu0 0.0
  %4353 = vmatpush1.msra.mxu0 %v4331
  %4354 = vmatprep.subr.mxu0 0.0
  %4355 = vmatpush1.msra.mxu0 %v4332
  %4356 = vmatprep.subr.mxu0 0.0
  %4357 = vmatpush1.msra.mxu0 %v4333
  %4358 = vmatprep.subr.mxu0 0.0
  %4359 = vmatpush1.msra.mxu0 %v4334
  %4360 = vmatprep.subr.mxu0 0.0
  %4361 = vmatpush1.msra.mxu0 %v4335
  %4362 = vmatprep.subr.mxu0 0.0
  %4363 = vmatpush1.msra.mxu0 %v4336
  %4364 = vmatprep.subr.mxu0 0.0
  %4365 = vmatpush1.msra.mxu0 %v4337
  %4366 = vmatprep.subr.mxu0 0.0
  %4367 = vmatpush1.msra.mxu0 %v4338
  %4368 = vmatprep.subr.mxu0 0.0
  %4369 = vmatpush1.msra.mxu0 %v4339
  %4370 = vmatprep.subr.mxu0 0.0
  %4371 = vmatpush1.msra.mxu0 %v4340
  %4372 = vmatprep.subr.mxu0 0.0
  %4373 = vmatpush1.msra.mxu0 %v4341
  %4374 = vmatprep.subr.mxu0 0.0
  %4375 = vmatpush1.msra.mxu0 0.0
  %4376 = vmatprep.subr.mxu0 0.0
  %4377 = vmatpush1.msra.mxu0 0.0
  %4378 = vmatprep.subr.mxu0 0.0
  %4379 = vmatpush1.msra.mxu0 0.0
  %4380 = vmatprep.subr.mxu0 0.0
  %4381 = vmatpush1.msra.mxu0 0.0
  %4382 = vmatprep.subr.mxu0 0.0
  %4383 = vmatpush1.msra.mxu0 0.0
  %4384 = vmatprep.subr.mxu0 0.0
  %4385 = vmatpush1.msra.mxu0 0.0
  %4386 = vmatprep.subr.mxu0 0.0
  %4387 = vmatpush1.msra.mxu0 0.0
  %4388 = vmatprep.subr.mxu0 0.0
  %4389 = vmatpush1.msra.mxu0 0.0
  %4390 = vmatprep.subr.mxu0 0.0
  %4391 = vmatpush1.msra.mxu0 0.0
  %4392 = vmatprep.subr.mxu0 0.0
  %4393 = vmatpush1.msra.mxu0 0.0
  %4394 = vmatprep.subr.mxu0 0.0
  %4395 = vmatpush1.msra.mxu0 0.0
  %4396 = vmatprep.subr.mxu0 0.0
  %4397 = vmatpush1.msra.mxu0 0.0
  %4398 = vmatprep.subr.mxu0 0.0
  %4399 = vmatpush1.msra.mxu0 0.0
  %4400 = vmatprep.subr.mxu0 0.0
  %4401 = vmatpush1.msra.mxu0 0.0
  %4402 = vmatprep.subr.mxu0 0.0
  %4403 = vmatpush1.msra.mxu0 0.0
  %4404 = vmatprep.subr.mxu0 0.0
  %4405 = vmatpush1.msra.mxu0 0.0
  %4406 = vmatprep.mubr.f32.mxu0 0.0
  %4407 = vmatmul.mubr.f32.gmra.mrb[0].mxu0 %v3704
  %v4408 = vpop.f32.mrb[0].mxu0
  %v4409 = vadd.f32 0.0, %v4408
  %v4410 = vpop.f32.mrb[0].mxu0
  %4411 = vdwg.mxu0
  %v4412 = vadd.f32 %v4324, %v4409
  %s4413 = scalar_lea.vmem %s8, 1024
  %v4414 = vld [vmem:[%s4413] sm:$0xff]
  %v4415 = vld [vmem:[%s4413 + $0x8] sm:$0xff]
  %v4416 = vld [vmem:[%s4413 + $0x10] sm:$0xff]
  %v4417 = vld [vmem:[%s4413 + $0x18] sm:$0xff]
  %v4418 = vld [vmem:[%s4413 + $0x20] sm:$0xff]
  %v4419 = vld [vmem:[%s4413 + $0x28] sm:$0xff]
  %v4420 = vld [vmem:[%s4413 + $0x30] sm:$0xff]
  %v4421 = vld [vmem:[%s4413 + $0x38] sm:$0xff]
  %v4422 = vld [vmem:[%s4413 + $0x40] sm:$0xff]
  %v4423 = vld [vmem:[%s4413 + $0x48] sm:$0xff]
  %v4424 = vld [vmem:[%s4413 + $0x50] sm:$0xff]
  %v4425 = vld [vmem:[%s4413 + $0x58] sm:$0xff]
  %v4426 = vld [vmem:[%s4413 + $0x60] sm:$0xff]
  %v4427 = vld [vmem:[%s4413 + $0x68] sm:$0xff]
  %v4428 = vld [vmem:[%s4413 + $0x70] sm:$0xff]
  %v4429 = vld [vmem:[%s4413 + $0x78] sm:$0xff]
  %4430 = vmatprep.subr.mxu0 0.0
  %4431 = vmatpush1.msra.mxu0 %v4414
  %4432 = vmatprep.subr.mxu0 0.0
  %4433 = vmatpush1.msra.mxu0 %v4415
  %4434 = vmatprep.subr.mxu0 0.0
  %4435 = vmatpush1.msra.mxu0 %v4416
  %4436 = vmatprep.subr.mxu0 0.0
  %4437 = vmatpush1.msra.mxu0 %v4417
  %4438 = vmatprep.subr.mxu0 0.0
  %4439 = vmatpush1.msra.mxu0 %v4418
  %4440 = vmatprep.subr.mxu0 0.0
  %4441 = vmatpush1.msra.mxu0 %v4419
  %4442 = vmatprep.subr.mxu0 0.0
  %4443 = vmatpush1.msra.mxu0 %v4420
  %4444 = vmatprep.subr.mxu0 0.0
  %4445 = vmatpush1.msra.mxu0 %v4421
  %4446 = vmatprep.subr.mxu0 0.0
  %4447 = vmatpush1.msra.mxu0 %v4422
  %4448 = vmatprep.subr.mxu0 0.0
  %4449 = vmatpush1.msra.mxu0 %v4423
  %4450 = vmatprep.subr.mxu0 0.0
  %4451 = vmatpush1.msra.mxu0 %v4424
  %4452 = vmatprep.subr.mxu0 0.0
  %4453 = vmatpush1.msra.mxu0 %v4425
  %4454 = vmatprep.subr.mxu0 0.0
  %4455 = vmatpush1.msra.mxu0 %v4426
  %4456 = vmatprep.subr.mxu0 0.0
  %4457 = vmatpush1.msra.mxu0 %v4427
  %4458 = vmatprep.subr.mxu0 0.0
  %4459 = vmatpush1.msra.mxu0 %v4428
  %4460 = vmatprep.subr.mxu0 0.0
  %4461 = vmatpush1.msra.mxu0 %v4429
  %4462 = vmatprep.subr.mxu0 0.0
  %4463 = vmatpush1.msra.mxu0 0.0
  %4464 = vmatprep.subr.mxu0 0.0
  %4465 = vmatpush1.msra.mxu0 0.0
  %4466 = vmatprep.subr.mxu0 0.0
  %4467 = vmatpush1.msra.mxu0 0.0
  %4468 = vmatprep.subr.mxu0 0.0
  %4469 = vmatpush1.msra.mxu0 0.0
  %4470 = vmatprep.subr.mxu0 0.0
  %4471 = vmatpush1.msra.mxu0 0.0
  %4472 = vmatprep.subr.mxu0 0.0
  %4473 = vmatpush1.msra.mxu0 0.0
  %4474 = vmatprep.subr.mxu0 0.0
  %4475 = vmatpush1.msra.mxu0 0.0
  %4476 = vmatprep.subr.mxu0 0.0
  %4477 = vmatpush1.msra.mxu0 0.0
  %4478 = vmatprep.subr.mxu0 0.0
  %4479 = vmatpush1.msra.mxu0 0.0
  %4480 = vmatprep.subr.mxu0 0.0
  %4481 = vmatpush1.msra.mxu0 0.0
  %4482 = vmatprep.subr.mxu0 0.0
  %4483 = vmatpush1.msra.mxu0 0.0
  %4484 = vmatprep.subr.mxu0 0.0
  %4485 = vmatpush1.msra.mxu0 0.0
  %4486 = vmatprep.subr.mxu0 0.0
  %4487 = vmatpush1.msra.mxu0 0.0
  %4488 = vmatprep.subr.mxu0 0.0
  %4489 = vmatpush1.msra.mxu0 0.0
  %4490 = vmatprep.subr.mxu0 0.0
  %4491 = vmatpush1.msra.mxu0 0.0
  %4492 = vmatprep.subr.mxu0 0.0
  %4493 = vmatpush1.msra.mxu0 0.0
  %4494 = vmatprep.mubr.f32.mxu0 0.0
  %4495 = vmatmul.mubr.f32.gmra.mrb[0].mxu0 %v3709
  %v4496 = vpop.f32.mrb[0].mxu0
  %v4497 = vadd.f32 0.0, %v4496
  %v4498 = vpop.f32.mrb[0].mxu0
  %4499 = vdwg.mxu0
  %v4500 = vadd.f32 %v4412, %v4497
  %v4501 = vld [vmem:[%s9] sm:$0x1]
  %v4503 = vlaneseq
  %v4504 = vshrl.u32 %v4503, 7
  %v4505 = vsub.s32 0, %v4504
  %v4506 = vrot.slane %v4501, %v4505
  %v4508 = vadd.f32 %v4500, %v4506
  %v4509 = vxor.u32 %v4508, 2147483648
  %v4510 = vmul.f32 %v4509, 1.442695
  %v4511 = vpow.pop %v4510
  %v4512 = vadd.f32 %v4511, 1.0
  %v4513 = vrcp.pop %v4512
  %v4514 = vmul.f32 1.0, %v4513
  %v4515 = vmul.f32 %v4508, %v4514
  %v4516 = vld [vmem:[%s10] sm:$0xff]
  %v4517 = vld [vmem:[%s10 + $0x8] sm:$0xff]
  %v4518 = vld [vmem:[%s10 + $0x10] sm:$0xff]
  %v4519 = vld [vmem:[%s10 + $0x18] sm:$0xff]
  %v4520 = vld [vmem:[%s10 + $0x20] sm:$0xff]
  %v4521 = vld [vmem:[%s10 + $0x28] sm:$0xff]
  %v4522 = vld [vmem:[%s10 + $0x30] sm:$0xff]
  %v4523 = vld [vmem:[%s10 + $0x38] sm:$0xff]
  %v4524 = vld [vmem:[%s10 + $0x40] sm:$0xff]
  %v4525 = vld [vmem:[%s10 + $0x48] sm:$0xff]
  %v4526 = vld [vmem:[%s10 + $0x50] sm:$0xff]
  %v4527 = vld [vmem:[%s10 + $0x58] sm:$0xff]
  %v4528 = vld [vmem:[%s10 + $0x60] sm:$0xff]
  %v4529 = vld [vmem:[%s10 + $0x68] sm:$0xff]
  %v4530 = vld [vmem:[%s10 + $0x70] sm:$0xff]
  %v4531 = vld [vmem:[%s10 + $0x78] sm:$0xff]
  %v4532 = vld [vmem:[%s10 + $0x80] sm:$0xff]
  %v4533 = vld [vmem:[%s10 + $0x88] sm:$0xff]
  %v4534 = vld [vmem:[%s10 + $0x90] sm:$0xff]
  %v4535 = vld [vmem:[%s10 + $0x98] sm:$0xff]
  %v4536 = vld [vmem:[%s10 + $0xa0] sm:$0xff]
  %v4537 = vld [vmem:[%s10 + $0xa8] sm:$0xff]
  %v4538 = vld [vmem:[%s10 + $0xb0] sm:$0xff]
  %v4539 = vld [vmem:[%s10 + $0xb8] sm:$0xff]
  %v4540 = vld [vmem:[%s10 + $0xc0] sm:$0xff]
  %v4541 = vld [vmem:[%s10 + $0xc8] sm:$0xff]
  %v4542 = vld [vmem:[%s10 + $0xd0] sm:$0xff]
  %v4543 = vld [vmem:[%s10 + $0xd8] sm:$0xff]
  %v4544 = vld [vmem:[%s10 + $0xe0] sm:$0xff]
  %v4545 = vld [vmem:[%s10 + $0xe8] sm:$0xff]
  %v4546 = vld [vmem:[%s10 + $0xf0] sm:$0xff]
  %v4547 = vld [vmem:[%s10 + $0xf8] sm:$0xff]
  %v4548 = vld [vmem:[%s10 + $0x100] sm:$0xff]
  %v4549 = vld [vmem:[%s10 + $0x108] sm:$0xff]
  %v4550 = vld [vmem:[%s10 + $0x110] sm:$0xff]
  %v4551 = vld [vmem:[%s10 + $0x118] sm:$0xff]
  %v4552 = vld [vmem:[%s10 + $0x120] sm:$0xff]
  %v4553 = vld [vmem:[%s10 + $0x128] sm:$0xff]
  %v4554 = vld [vmem:[%s10 + $0x130] sm:$0xff]
  %v4555 = vld [vmem:[%s10 + $0x138] sm:$0xff]
  %v4556 = vld [vmem:[%s10 + $0x140] sm:$0xff]
  %v4557 = vld [vmem:[%s10 + $0x148] sm:$0xff]
  %v4558 = vld [vmem:[%s10 + $0x150] sm:$0xff]
  %v4559 = vld [vmem:[%s10 + $0x158] sm:$0xff]
  %v4560 = vld [vmem:[%s10 + $0x160] sm:$0xff]
  %v4561 = vld [vmem:[%s10 + $0x168] sm:$0xff]
  %v4562 = vld [vmem:[%s10 + $0x170] sm:$0xff]
  %v4563 = vld [vmem:[%s10 + $0x178] sm:$0xff]
  %v4564 = vld [vmem:[%s10 + $0x180] sm:$0xff]
  %v4565 = vld [vmem:[%s10 + $0x188] sm:$0xff]
  %v4566 = vld [vmem:[%s10 + $0x190] sm:$0xff]
  %v4567 = vld [vmem:[%s10 + $0x198] sm:$0xff]
  %v4568 = vld [vmem:[%s10 + $0x1a0] sm:$0xff]
  %v4569 = vld [vmem:[%s10 + $0x1a8] sm:$0xff]
  %v4570 = vld [vmem:[%s10 + $0x1b0] sm:$0xff]
  %v4571 = vld [vmem:[%s10 + $0x1b8] sm:$0xff]
  %v4572 = vld [vmem:[%s10 + $0x1c0] sm:$0xff]
  %v4573 = vld [vmem:[%s10 + $0x1c8] sm:$0xff]
  %v4574 = vld [vmem:[%s10 + $0x1d0] sm:$0xff]
  %v4575 = vld [vmem:[%s10 + $0x1d8] sm:$0xff]
  %v4576 = vld [vmem:[%s10 + $0x1e0] sm:$0xff]
  %v4577 = vld [vmem:[%s10 + $0x1e8] sm:$0xff]
  %v4578 = vld [vmem:[%s10 + $0x1f0] sm:$0xff]
  %v4579 = vld [vmem:[%s10 + $0x1f8] sm:$0xff]
  %v4580 = vld [vmem:[%s11] sm:$0xf]
  %v4582 = vlaneseq
  %v4583 = vshrl.u32 %v4582, 7
  %v4584 = vsub.s32 0, %v4583
  %v4585 = vrot.slane %v4580, %v4584
  %v4586 = vlaneseq
  %v4587 = vshrl.u32 %v4586, 7
  %v4588 = vsub.s32 1, %v4587
  %v4589 = vrot.slane %v4580, %v4588
  %v4590 = vlaneseq
  %v4591 = vshrl.u32 %v4590, 7
  %v4592 = vsub.s32 2, %v4591
  %v4593 = vrot.slane %v4580, %v4592
  %v4594 = vlaneseq
  %v4595 = vshrl.u32 %v4594, 7
  %v4596 = vsub.s32 3, %v4595
  %v4597 = vrot.slane %v4580, %v4596
  %4602 = vmatprep.subr.mxu0 %v4517
  %4603 = vmatpush1.msra.mxu0 %v4516
  %4604 = vmatprep.subr.mxu0 %v4521
  %4605 = vmatpush1.msra.mxu0 %v4520
  %4606 = vmatprep.subr.mxu0 %v4525
  %4607 = vmatpush1.msra.mxu0 %v4524
  %4608 = vmatprep.subr.mxu0 %v4529
  %4609 = vmatpush1.msra.mxu0 %v4528
  %4610 = vmatprep.subr.mxu0 %v4533
  %4611 = vmatpush1.msra.mxu0 %v4532
  %4612 = vmatprep.subr.mxu0 %v4537
  %4613 = vmatpush1.msra.mxu0 %v4536
  %4614 = vmatprep.subr.mxu0 %v4541
  %4615 = vmatpush1.msra.mxu0 %v4540
  %4616 = vmatprep.subr.mxu0 %v4545
  %4617 = vmatpush1.msra.mxu0 %v4544
  %4618 = vmatprep.subr.mxu0 %v4549
  %4619 = vmatpush1.msra.mxu0 %v4548
  %4620 = vmatprep.subr.mxu0 %v4553
  %4621 = vmatpush1.msra.mxu0 %v4552
  %4622 = vmatprep.subr.mxu0 %v4557
  %4623 = vmatpush1.msra.mxu0 %v4556
  %4624 = vmatprep.subr.mxu0 %v4561
  %4625 = vmatpush1.msra.mxu0 %v4560
  %4626 = vmatprep.subr.mxu0 %v4565
  %4627 = vmatpush1.msra.mxu0 %v4564
  %4628 = vmatprep.subr.mxu0 %v4569
  %4629 = vmatpush1.msra.mxu0 %v4568
  %4630 = vmatprep.subr.mxu0 %v4573
  %4631 = vmatpush1.msra.mxu0 %v4572
  %4632 = vmatprep.subr.mxu0 %v4577
  %4633 = vmatpush1.msra.mxu0 %v4576
  %4634 = vmatprep.subr.mxu0 0.0
  %4635 = vmatpush1.msra.mxu0 0.0
  %4636 = vmatprep.subr.mxu0 0.0
  %4637 = vmatpush1.msra.mxu0 0.0
  %4638 = vmatprep.subr.mxu0 0.0
  %4639 = vmatpush1.msra.mxu0 0.0
  %4640 = vmatprep.subr.mxu0 0.0
  %4641 = vmatpush1.msra.mxu0 0.0
  %4642 = vmatprep.subr.mxu0 0.0
  %4643 = vmatpush1.msra.mxu0 0.0
  %4644 = vmatprep.subr.mxu0 0.0
  %4645 = vmatpush1.msra.mxu0 0.0
  %4646 = vmatprep.subr.mxu0 0.0
  %4647 = vmatpush1.msra.mxu0 0.0
  %4648 = vmatprep.subr.mxu0 0.0
  %4649 = vmatpush1.msra.mxu0 0.0
  %4650 = vmatprep.subr.mxu0 0.0
  %4651 = vmatpush1.msra.mxu0 0.0
  %4652 = vmatprep.subr.mxu0 0.0
  %4653 = vmatpush1.msra.mxu0 0.0
  %4654 = vmatprep.subr.mxu0 0.0
  %4655 = vmatpush1.msra.mxu0 0.0
  %4656 = vmatprep.subr.mxu0 0.0
  %4657 = vmatpush1.msra.mxu0 0.0
  %4658 = vmatprep.subr.mxu0 0.0
  %4659 = vmatpush1.msra.mxu0 0.0
  %4660 = vmatprep.subr.mxu0 0.0
  %4661 = vmatpush1.msra.mxu0 0.0
  %4662 = vmatprep.subr.mxu0 0.0
  %4663 = vmatpush1.msra.mxu0 0.0
  %4664 = vmatprep.subr.mxu0 0.0
  %4665 = vmatpush1.msra.mxu0 0.0
  %4666 = vmatprep.mubr.f32.mxu0 0.0
  %4667 = vmatmul.mubr.f32.gmra.mrb[0].mxu0 %v4515
  %v4668 = vpop.f32.mrb[0].mxu0
  %v4669 = vadd.f32 %v4585, %v4668
  %v4670 = vpop.f32.mrb[0].mxu0
  %v4671 = vadd.f32 %v4589, %v4670
  %4672 = vdwg.mxu0
  %4673 = vmatprep.subr.mxu0 %v4519
  %4674 = vmatpush1.msra.mxu0 %v4518
  %4675 = vmatprep.subr.mxu0 %v4523
  %4676 = vmatpush1.msra.mxu0 %v4522
  %4677 = vmatprep.subr.mxu0 %v4527
  %4678 = vmatpush1.msra.mxu0 %v4526
  %4679 = vmatprep.subr.mxu0 %v4531
  %4680 = vmatpush1.msra.mxu0 %v4530
  %4681 = vmatprep.subr.mxu0 %v4535
  %4682 = vmatpush1.msra.mxu0 %v4534
  %4683 = vmatprep.subr.mxu0 %v4539
  %4684 = vmatpush1.msra.mxu0 %v4538
  %4685 = vmatprep.subr.mxu0 %v4543
  %4686 = vmatpush1.msra.mxu0 %v4542
  %4687 = vmatprep.subr.mxu0 %v4547
  %4688 = vmatpush1.msra.mxu0 %v4546
  %4689 = vmatprep.subr.mxu0 %v4551
  %4690 = vmatpush1.msra.mxu0 %v4550
  %4691 = vmatprep.subr.mxu0 %v4555
  %4692 = vmatpush1.msra.mxu0 %v4554
  %4693 = vmatprep.subr.mxu0 %v4559
  %4694 = vmatpush1.msra.mxu0 %v4558
  %4695 = vmatprep.subr.mxu0 %v4563
  %4696 = vmatpush1.msra.mxu0 %v4562
  %4697 = vmatprep.subr.mxu0 %v4567
  %4698 = vmatpush1.msra.mxu0 %v4566
  %4699 = vmatprep.subr.mxu0 %v4571
  %4700 = vmatpush1.msra.mxu0 %v4570
  %4701 = vmatprep.subr.mxu0 %v4575
  %4702 = vmatpush1.msra.mxu0 %v4574
  %4703 = vmatprep.subr.mxu0 %v4579
  %4704 = vmatpush1.msra.mxu0 %v4578
  %4705 = vmatprep.subr.mxu0 0.0
  %4706 = vmatpush1.msra.mxu0 0.0
  %4707 = vmatprep.subr.mxu0 0.0
  %4708 = vmatpush1.msra.mxu0 0.0
  %4709 = vmatprep.subr.mxu0 0.0
  %4710 = vmatpush1.msra.mxu0 0.0
  %4711 = vmatprep.subr.mxu0 0.0
  %4712 = vmatpush1.msra.mxu0 0.0
  %4713 = vmatprep.subr.mxu0 0.0
  %4714 = vmatpush1.msra.mxu0 0.0
  %4715 = vmatprep.subr.mxu0 0.0
  %4716 = vmatpush1.msra.mxu0 0.0
  %4717 = vmatprep.subr.mxu0 0.0
  %4718 = vmatpush1.msra.mxu0 0.0
  %4719 = vmatprep.subr.mxu0 0.0
  %4720 = vmatpush1.msra.mxu0 0.0
  %4721 = vmatprep.subr.mxu0 0.0
  %4722 = vmatpush1.msra.mxu0 0.0
  %4723 = vmatprep.subr.mxu0 0.0
  %4724 = vmatpush1.msra.mxu0 0.0
  %4725 = vmatprep.subr.mxu0 0.0
  %4726 = vmatpush1.msra.mxu0 0.0
  %4727 = vmatprep.subr.mxu0 0.0
  %4728 = vmatpush1.msra.mxu0 0.0
  %4729 = vmatprep.subr.mxu0 0.0
  %4730 = vmatpush1.msra.mxu0 0.0
  %4731 = vmatprep.subr.mxu0 0.0
  %4732 = vmatpush1.msra.mxu0 0.0
  %4733 = vmatprep.subr.mxu0 0.0
  %4734 = vmatpush1.msra.mxu0 0.0
  %4735 = vmatprep.subr.mxu0 0.0
  %4736 = vmatpush1.msra.mxu0 0.0
  %4737 = vmatprep.mubr.f32.mxu0 0.0
  %4738 = vmatmul.mubr.f32.gmra.mrb[0].mxu0 %v4515
  %v4739 = vpop.f32.mrb[0].mxu0
  %v4740 = vadd.f32 %v4593, %v4739
  %v4741 = vpop.f32.mrb[0].mxu0
  %v4742 = vadd.f32 %v4597, %v4741
  %4743 = vdwg.mxu0
  %v4744 = vxor.u32 %v4669, 2147483648
  %v4745 = vxor.u32 %v4671, 2147483648
  %v4746 = vxor.u32 %v4740, 2147483648
  %v4747 = vxor.u32 %v4742, 2147483648
  %v4748 = vmul.f32 %v4744, 1.442695
  %v4749 = vpow.pop %v4748
  %v4750 = vmul.f32 %v4745, 1.442695
  %v4751 = vpow.pop %v4750
  %v4752 = vmul.f32 %v4746, 1.442695
  %v4753 = vpow.pop %v4752
  %v4754 = vmul.f32 %v4747, 1.442695
  %v4755 = vpow.pop %v4754
  %v4756 = vadd.f32 %v4749, 1.0
  %v4757 = vadd.f32 %v4751, 1.0
  %v4758 = vadd.f32 %v4753, 1.0
  %v4759 = vadd.f32 %v4755, 1.0
  %v4760 = vrcp.pop %v4756
  %v4761 = vmul.f32 1.0, %v4760
  %v4762 = vrcp.pop %v4757
  %v4763 = vmul.f32 1.0, %v4762
  %v4764 = vrcp.pop %v4758
  %v4765 = vmul.f32 1.0, %v4764
  %v4766 = vrcp.pop %v4759
  %v4767 = vmul.f32 1.0, %v4766
  %v4768 = vmul.f32 %v4669, %v4761
  %v4769 = vmul.f32 %v4671, %v4763
  %v4770 = vmul.f32 %v4740, %v4765
  %v4771 = vmul.f32 %v4742, %v4767
  %v4772 = vld [vmem:[%s12] sm:$0xff]
  %v4773 = vld [vmem:[%s12 + $0x8] sm:$0xff]
  %v4774 = vld [vmem:[%s12 + $0x10] sm:$0xff]
  %v4775 = vld [vmem:[%s12 + $0x18] sm:$0xff]
  %v4776 = vld [vmem:[%s12 + $0x20] sm:$0xff]
  %v4777 = vld [vmem:[%s12 + $0x28] sm:$0xff]
  %v4778 = vld [vmem:[%s12 + $0x30] sm:$0xff]
  %v4779 = vld [vmem:[%s12 + $0x38] sm:$0xff]
  %v4780 = vld [vmem:[%s12 + $0x40] sm:$0xff]
  %v4781 = vld [vmem:[%s12 + $0x48] sm:$0xff]
  %v4782 = vld [vmem:[%s12 + $0x50] sm:$0xff]
  %v4783 = vld [vmem:[%s12 + $0x58] sm:$0xff]
  %v4784 = vld [vmem:[%s12 + $0x60] sm:$0xff]
  %v4785 = vld [vmem:[%s12 + $0x68] sm:$0xff]
  %v4786 = vld [vmem:[%s12 + $0x70] sm:$0xff]
  %v4787 = vld [vmem:[%s12 + $0x78] sm:$0xff]
  %v4788 = vld [vmem:[%s12 + $0x80] sm:$0xff]
  %v4789 = vld [vmem:[%s12 + $0x88] sm:$0xff]
  %v4790 = vld [vmem:[%s12 + $0x90] sm:$0xff]
  %v4791 = vld [vmem:[%s12 + $0x98] sm:$0xff]
  %v4792 = vld [vmem:[%s12 + $0xa0] sm:$0xff]
  %v4793 = vld [vmem:[%s12 + $0xa8] sm:$0xff]
  %v4794 = vld [vmem:[%s12 + $0xb0] sm:$0xff]
  %v4795 = vld [vmem:[%s12 + $0xb8] sm:$0xff]
  %v4796 = vld [vmem:[%s12 + $0xc0] sm:$0xff]
  %v4797 = vld [vmem:[%s12 + $0xc8] sm:$0xff]
  %v4798 = vld [vmem:[%s12 + $0xd0] sm:$0xff]
  %v4799 = vld [vmem:[%s12 + $0xd8] sm:$0xff]
  %v4800 = vld [vmem:[%s12 + $0xe0] sm:$0xff]
  %v4801 = vld [vmem:[%s12 + $0xe8] sm:$0xff]
  %v4802 = vld [vmem:[%s12 + $0xf0] sm:$0xff]
  %v4803 = vld [vmem:[%s12 + $0xf8] sm:$0xff]
  %v4804 = vld [vmem:[%s12 + $0x100] sm:$0xff]
  %v4805 = vld [vmem:[%s12 + $0x108] sm:$0xff]
  %v4806 = vld [vmem:[%s12 + $0x110] sm:$0xff]
  %v4807 = vld [vmem:[%s12 + $0x118] sm:$0xff]
  %v4808 = vld [vmem:[%s12 + $0x120] sm:$0xff]
  %v4809 = vld [vmem:[%s12 + $0x128] sm:$0xff]
  %v4810 = vld [vmem:[%s12 + $0x130] sm:$0xff]
  %v4811 = vld [vmem:[%s12 + $0x138] sm:$0xff]
  %v4812 = vld [vmem:[%s12 + $0x140] sm:$0xff]
  %v4813 = vld [vmem:[%s12 + $0x148] sm:$0xff]
  %v4814 = vld [vmem:[%s12 + $0x150] sm:$0xff]
  %v4815 = vld [vmem:[%s12 + $0x158] sm:$0xff]
  %v4816 = vld [vmem:[%s12 + $0x160] sm:$0xff]
  %v4817 = vld [vmem:[%s12 + $0x168] sm:$0xff]
  %v4818 = vld [vmem:[%s12 + $0x170] sm:$0xff]
  %v4819 = vld [vmem:[%s12 + $0x178] sm:$0xff]
  %v4820 = vld [vmem:[%s12 + $0x180] sm:$0xff]
  %v4821 = vld [vmem:[%s12 + $0x188] sm:$0xff]
  %v4822 = vld [vmem:[%s12 + $0x190] sm:$0xff]
  %v4823 = vld [vmem:[%s12 + $0x198] sm:$0xff]
  %v4824 = vld [vmem:[%s12 + $0x1a0] sm:$0xff]
  %v4825 = vld [vmem:[%s12 + $0x1a8] sm:$0xff]
  %v4826 = vld [vmem:[%s12 + $0x1b0] sm:$0xff]
  %v4827 = vld [vmem:[%s12 + $0x1b8] sm:$0xff]
  %v4828 = vld [vmem:[%s12 + $0x1c0] sm:$0xff]
  %v4829 = vld [vmem:[%s12 + $0x1c8] sm:$0xff]
  %v4830 = vld [vmem:[%s12 + $0x1d0] sm:$0xff]
  %v4831 = vld [vmem:[%s12 + $0x1d8] sm:$0xff]
  %v4832 = vld [vmem:[%s12 + $0x1e0] sm:$0xff]
  %v4833 = vld [vmem:[%s12 + $0x1e8] sm:$0xff]
  %v4834 = vld [vmem:[%s12 + $0x1f0] sm:$0xff]
  %v4835 = vld [vmem:[%s12 + $0x1f8] sm:$0xff]
  %v4836 = vld [vmem:[%s13] sm:$0x1]
  %v4838 = vlaneseq
  %v4839 = vshrl.u32 %v4838, 7
  %v4840 = vsub.s32 0, %v4839
  %v4841 = vrot.slane %v4836, %v4840
  %4843 = vmatprep.subr.mxu0 0.0
  %4844 = vmatpush1.msra.mxu0 %v4772
  %4845 = vmatprep.subr.mxu0 0.0
  %4846 = vmatpush1.msra.mxu0 %v4773
  %4847 = vmatprep.subr.mxu0 0.0
  %4848 = vmatpush1.msra.mxu0 %v4774
  %4849 = vmatprep.subr.mxu0 0.0
  %4850 = vmatpush1.msra.mxu0 %v4775
  %4851 = vmatprep.subr.mxu0 0.0
  %4852 = vmatpush1.msra.mxu0 %v4776
  %4853 = vmatprep.subr.mxu0 0.0
  %4854 = vmatpush1.msra.mxu0 %v4777
  %4855 = vmatprep.subr.mxu0 0.0
  %4856 = vmatpush1.msra.mxu0 %v4778
  %4857 = vmatprep.subr.mxu0 0.0
  %4858 = vmatpush1.msra.mxu0 %v4779
  %4859 = vmatprep.subr.mxu0 0.0
  %4860 = vmatpush1.msra.mxu0 %v4780
  %4861 = vmatprep.subr.mxu0 0.0
  %4862 = vmatpush1.msra.mxu0 %v4781
  %4863 = vmatprep.subr.mxu0 0.0
  %4864 = vmatpush1.msra.mxu0 %v4782
  %4865 = vmatprep.subr.mxu0 0.0
  %4866 = vmatpush1.msra.mxu0 %v4783
  %4867 = vmatprep.subr.mxu0 0.0
  %4868 = vmatpush1.msra.mxu0 %v4784
  %4869 = vmatprep.subr.mxu0 0.0
  %4870 = vmatpush1.msra.mxu0 %v4785
  %4871 = vmatprep.subr.mxu0 0.0
  %4872 = vmatpush1.msra.mxu0 %v4786
  %4873 = vmatprep.subr.mxu0 0.0
  %4874 = vmatpush1.msra.mxu0 %v4787
  %4875 = vmatprep.subr.mxu0 0.0
  %4876 = vmatpush1.msra.mxu0 %v4788
  %4877 = vmatprep.subr.mxu0 0.0
  %4878 = vmatpush1.msra.mxu0 %v4789
  %4879 = vmatprep.subr.mxu0 0.0
  %4880 = vmatpush1.msra.mxu0 %v4790
  %4881 = vmatprep.subr.mxu0 0.0
  %4882 = vmatpush1.msra.mxu0 %v4791
  %4883 = vmatprep.subr.mxu0 0.0
  %4884 = vmatpush1.msra.mxu0 %v4792
  %4885 = vmatprep.subr.mxu0 0.0
  %4886 = vmatpush1.msra.mxu0 %v4793
  %4887 = vmatprep.subr.mxu0 0.0
  %4888 = vmatpush1.msra.mxu0 %v4794
  %4889 = vmatprep.subr.mxu0 0.0
  %4890 = vmatpush1.msra.mxu0 %v4795
  %4891 = vmatprep.subr.mxu0 0.0
  %4892 = vmatpush1.msra.mxu0 %v4796
  %4893 = vmatprep.subr.mxu0 0.0
  %4894 = vmatpush1.msra.mxu0 %v4797
  %4895 = vmatprep.subr.mxu0 0.0
  %4896 = vmatpush1.msra.mxu0 %v4798
  %4897 = vmatprep.subr.mxu0 0.0
  %4898 = vmatpush1.msra.mxu0 %v4799
  %4899 = vmatprep.subr.mxu0 0.0
  %4900 = vmatpush1.msra.mxu0 %v4800
  %4901 = vmatprep.subr.mxu0 0.0
  %4902 = vmatpush1.msra.mxu0 %v4801
  %4903 = vmatprep.subr.mxu0 0.0
  %4904 = vmatpush1.msra.mxu0 %v4802
  %4905 = vmatprep.subr.mxu0 0.0
  %4906 = vmatpush1.msra.mxu0 %v4803
  %4907 = vmatprep.mubr.f32.mxu0 %v4769
  %4908 = vmatmul.mubr.f32.gmra.mrb[0].mxu0 %v4768
  %v4909 = vpop.f32.mrb[0].mxu0
  %v4910 = vadd.f32 %v4841, %v4909
  %v4911 = vpop.f32.mrb[0].mxu0
  %4912 = vdwg.mxu0
  %4913 = vmatprep.subr.mxu0 0.0
  %4914 = vmatpush1.msra.mxu0 %v4804
  %4915 = vmatprep.subr.mxu0 0.0
  %4916 = vmatpush1.msra.mxu0 %v4805
  %4917 = vmatprep.subr.mxu0 0.0
  %4918 = vmatpush1.msra.mxu0 %v4806
  %4919 = vmatprep.subr.mxu0 0.0
  %4920 = vmatpush1.msra.mxu0 %v4807
  %4921 = vmatprep.subr.mxu0 0.0
  %4922 = vmatpush1.msra.mxu0 %v4808
  %4923 = vmatprep.subr.mxu0 0.0
  %4924 = vmatpush1.msra.mxu0 %v4809
  %4925 = vmatprep.subr.mxu0 0.0
  %4926 = vmatpush1.msra.mxu0 %v4810
  %4927 = vmatprep.subr.mxu0 0.0
  %4928 = vmatpush1.msra.mxu0 %v4811
  %4929 = vmatprep.subr.mxu0 0.0
  %4930 = vmatpush1.msra.mxu0 %v4812
  %4931 = vmatprep.subr.mxu0 0.0
  %4932 = vmatpush1.msra.mxu0 %v4813
  %4933 = vmatprep.subr.mxu0 0.0
  %4934 = vmatpush1.msra.mxu0 %v4814
  %4935 = vmatprep.subr.mxu0 0.0
  %4936 = vmatpush1.msra.mxu0 %v4815
  %4937 = vmatprep.subr.mxu0 0.0
  %4938 = vmatpush1.msra.mxu0 %v4816
  %4939 = vmatprep.subr.mxu0 0.0
  %4940 = vmatpush1.msra.mxu0 %v4817
  %4941 = vmatprep.subr.mxu0 0.0
  %4942 = vmatpush1.msra.mxu0 %v4818
  %4943 = vmatprep.subr.mxu0 0.0
  %4944 = vmatpush1.msra.mxu0 %v4819
  %4945 = vmatprep.subr.mxu0 0.0
  %4946 = vmatpush1.msra.mxu0 %v4820
  %4947 = vmatprep.subr.mxu0 0.0
  %4948 = vmatpush1.msra.mxu0 %v4821
  %4949 = vmatprep.subr.mxu0 0.0
  %4950 = vmatpush1.msra.mxu0 %v4822
  %4951 = vmatprep.subr.mxu0 0.0
  %4952 = vmatpush1.msra.mxu0 %v4823
  %4953 = vmatprep.subr.mxu0 0.0
  %4954 = vmatpush1.msra.mxu0 %v4824
  %4955 = vmatprep.subr.mxu0 0.0
  %4956 = vmatpush1.msra.mxu0 %v4825
  %4957 = vmatprep.subr.mxu0 0.0
  %4958 = vmatpush1.msra.mxu0 %v4826
  %4959 = vmatprep.subr.mxu0 0.0
  %4960 = vmatpush1.msra.mxu0 %v4827
  %4961 = vmatprep.subr.mxu0 0.0
  %4962 = vmatpush1.msra.mxu0 %v4828
  %4963 = vmatprep.subr.mxu0 0.0
  %4964 = vmatpush1.msra.mxu0 %v4829
  %4965 = vmatprep.subr.mxu0 0.0
  %4966 = vmatpush1.msra.mxu0 %v4830
  %4967 = vmatprep.subr.mxu0 0.0
  %4968 = vmatpush1.msra.mxu0 %v4831
  %4969 = vmatprep.subr.mxu0 0.0
  %4970 = vmatpush1.msra.mxu0 %v4832
  %4971 = vmatprep.subr.mxu0 0.0
  %4972 = vmatpush1.msra.mxu0 %v4833
  %4973 = vmatprep.subr.mxu0 0.0
  %4974 = vmatpush1.msra.mxu0 %v4834
  %4975 = vmatprep.subr.mxu0 0.0
  %4976 = vmatpush1.msra.mxu0 %v4835
  %4977 = vmatprep.mubr.f32.mxu0 %v4771
  %4978 = vmatmul.mubr.f32.gmra.mrb[0].mxu0 %v4770
  %v4979 = vpop.f32.mrb[0].mxu0
  %v4980 = vadd.f32 %v4910, %v4979
  %v4981 = vpop.f32.mrb[0].mxu0
  %4982 = vdwg.mxu0
  %4983 = vst [vmem:[%s14] sm:$0xff] %v4980
  // Predicated region
  $region58: #{dqn_forward.1} parent=0 // pred_check
    _
  $region59: #{dqn_forward.1} parent=0 // pred_check_branch
    %4985 = sbr.rel (0) target = $region61
  $region60: #{dqn_forward.1} parent=0 // pred_region
    _
  $region61: #{dqn_forward.1} parent=0 // pred_fallthru
    _
  // Predicated region
  $region62: #{dqn_forward.1} parent=0 // pred_check
    _
  $region63: #{dqn_forward.1} parent=0 // pred_check_branch
    %4987 = sbr.rel (0) target = $region65
  $region64: #{dqn_forward.1} parent=0 // pred_region
    _
  $region65: #{dqn_forward.1} parent=0 // pred_fallthru
    _

</llo_original>
